<compile_context>
chip_gen: v7x
topology: tpu7x:2x2x1
jax: 0.10.0
libtpu: 0.0.40
codegen_flags: <defaults>
</compile_context>

<pallas_src>
import math
import functools

import jax
import jax.numpy as jnp
from jax import lax
from jax.experimental import pallas as pl
from jax.experimental.pallas import tpu as pltpu


# ----------------------------------------------------------------------------
# Kernel 1: fused projection matmul, out = W @ X  (bias folded via ones-row).
#   X: (Kdim, HW) bf16,  W: (Cout, Kdim) bf16,  out: (Cout, HW) f32
# One MXU matmul per sample; lane-dense HW last dim.
# ----------------------------------------------------------------------------
def _proj_kernel(x_ref, w_ref, o_ref):
    o_ref[...] = jnp.dot(w_ref[...], x_ref[...],
                         preferred_element_type=jnp.float32)


def proj_pallas(x_cols, w):
    """x_cols: (N, Kdim, HW) bf16, w: (Cout, Kdim) bf16 -> (N, Cout, HW) f32."""
    N, Kdim, HW = x_cols.shape
    Cout = w.shape[0]
    return pl.pallas_call(
        _proj_kernel,
        out_shape=jax.ShapeDtypeStruct((N, Cout, HW), jnp.float32),
        grid=(N,),
        in_specs=[
            pl.BlockSpec((None, Kdim, HW), lambda n: (n, 0, 0)),
            pl.BlockSpec((Cout, Kdim), lambda n: (0, 0)),
        ],
        out_specs=pl.BlockSpec((None, Cout, HW), lambda n: (n, 0, 0)),
        compiler_params=pltpu.CompilerParams(dimension_semantics=("parallel",)),
    )(x_cols, w)


# ----------------------------------------------------------------------------
# Kernel 2: fused attention (all channels batched) + residual-add + LayerNorm.
#   qkv: (3E, H, W) f32   qt: (E, W, H) f32 (Q^T, pre-transposed in wrapper)
#   r:   (E, H, W)  f32 residual   g/b: (E, H, W) affine   out: (E, H, W)
#   score = softmax_{-1}(Q K^T / s) @ V @ softmax_{-2}(Q^T K / s), per channel.
# ----------------------------------------------------------------------------
def _attn_ln_kernel(qkv_ref, qt_ref, r_ref, g_ref, b_ref, o_ref, *,
                    E, scaler, eps):
    q = qkv_ref[0:E]                 # (E, H, W)
    k = qkv_ref[E:2 * E]             # (E, H, W)
    v = qkv_ref[2 * E:3 * E]         # (E, H, W)
    qt = qt_ref[...]                 # (E, W, H)
    inv_s = 1.0 / scaler

    # softmax over last dim of Q @ K^T
    s1 = jnp.einsum('ciw,cjw->cij', q, k,
                    preferred_element_type=jnp.float32) * inv_s      # (E, H, H)
    s1 = s1 - jnp.max(s1, axis=-1, keepdims=True)
    e1 = jnp.exp(s1)
    p1 = e1 * pl.reciprocal(jnp.sum(e1, axis=-1, keepdims=True), approx=True)

    # softmax over dim -2 of Q^T @ K
    s2 = jnp.einsum('cah,chb->cab', qt, k,
                    preferred_element_type=jnp.float32) * inv_s      # (E, W, W)
    s2 = s2 - jnp.max(s2, axis=-2, keepdims=True)
    e2 = jnp.exp(s2)
    p2 = e2 * pl.reciprocal(jnp.sum(e2, axis=-2, keepdims=True), approx=True)

    t = jnp.einsum('cij,cjw->ciw', p1, v, preferred_element_type=jnp.float32)
    att = jnp.einsum('ciw,cwb->cib', t, p2, preferred_element_type=jnp.float32)

    # residual add + LayerNorm over the whole (E, H, W) slab (f32 statistics)
    x = att + r_ref[...]
    mean = jnp.mean(x, keepdims=True)
    c = x - mean
    var = jnp.mean(c * c, keepdims=True)
    xn = c * lax.rsqrt(var + eps)
    o_ref[...] = xn * g_ref[...] + b_ref[...]


def attn_ln_pallas(qkv, qt, r, gamma, beta, scaler, eps=1e-5):
    N, threeE, H, W = qkv.shape
    E = threeE // 3
    kernel = functools.partial(_attn_ln_kernel, E=E, scaler=scaler, eps=eps)
    return pl.pallas_call(
        kernel,
        out_shape=jax.ShapeDtypeStruct((N, E, H, W), jnp.float32),
        grid=(N,),
        in_specs=[
            pl.BlockSpec((None, 3 * E, H, W), lambda n: (n, 0, 0, 0)),
            pl.BlockSpec((None, E, W, H), lambda n: (n, 0, 0, 0)),
            pl.BlockSpec((None, E, H, W), lambda n: (n, 0, 0, 0)),
            pl.BlockSpec((E, H, W), lambda n: (0, 0, 0)),
            pl.BlockSpec((E, H, W), lambda n: (0, 0, 0)),
        ],
        out_specs=pl.BlockSpec((None, E, H, W), lambda n: (n, 0, 0, 0)),
        compiler_params=pltpu.CompilerParams(dimension_semantics=("parallel",)),
    )(qkv, qt, r, gamma, beta)


# ----------------------------------------------------------------------------
# Kernel 3: fused 3x3 conv (single matmul) + ReLU + residual-add + LayerNorm,
# fully in the lane-dense flattened (E, HW) layout.
# ----------------------------------------------------------------------------
def _ffn_ln_kernel(xc_ref, res_ref, w_ref, g_ref, b_ref, o_ref, *, eps):
    z3 = jnp.dot(w_ref[...], xc_ref[...], preferred_element_type=jnp.float32)
    z3 = jnp.maximum(z3, 0.0)
    x = z3 + res_ref[...]
    mean = jnp.mean(x, keepdims=True)
    c = x - mean
    var = jnp.mean(c * c, keepdims=True)
    xn = c * lax.rsqrt(var + eps)
    o_ref[...] = xn * g_ref[...] + b_ref[...]


def ffn_ln_pallas(xc, res, w, gamma, beta, eps=1e-5):
    N, Kdim, HW = xc.shape
    E = w.shape[0]
    kernel = functools.partial(_ffn_ln_kernel, eps=eps)
    return pl.pallas_call(
        kernel,
        out_shape=jax.ShapeDtypeStruct((N, E, HW), jnp.float32),
        grid=(N,),
        in_specs=[
            pl.BlockSpec((None, Kdim, HW), lambda n: (n, 0, 0)),
            pl.BlockSpec((None, E, HW), lambda n: (n, 0, 0)),
            pl.BlockSpec((E, Kdim), lambda n: (0, 0)),
            pl.BlockSpec((E, HW), lambda n: (0, 0)),
            pl.BlockSpec((E, HW), lambda n: (0, 0)),
        ],
        out_specs=pl.BlockSpec((None, E, HW), lambda n: (n, 0, 0)),
        compiler_params=pltpu.CompilerParams(dimension_semantics=("parallel",)),
    )(xc, res, w, gamma, beta)


# ----------------------------------------------------------------------------
# Wrapper glue (cheap XLA ops: im2col, ones-row/bias-column augmentation).
# ----------------------------------------------------------------------------
def _im2col3(x):
    """(N, C, H, W) -> (N, 9*C, H*W); tap-major (dy*3+dx), channel-minor rows."""
    N, C, H, W = x.shape
    xp = jnp.pad(x, ((0, 0), (0, 0), (1, 1), (1, 1)))
    cols = [xp[:, :, dy:dy + H, dx:dx + W] for dy in range(3) for dx in range(3)]
    return jnp.concatenate(cols, axis=1).reshape(N, 9 * C, H * W)


def _append_ones(xc):
    N, K, HW = xc.shape
    return jnp.concatenate([xc, jnp.ones((N, 1, HW), xc.dtype)], axis=1)


def _w3_flat(w):
    """(Cout, Cin, 3, 3) -> (Cout, 9*Cin), matching _im2col3 row ordering."""
    Cout, Cin = w.shape[:2]
    return jnp.transpose(w, (0, 2, 3, 1)).reshape(Cout, 9 * Cin)


def _aug_bias(wf, b):
    return jnp.concatenate([wf, b[:, None]], axis=1)


# ----------------------------------------------------------------------------
# decoder.forward
# ----------------------------------------------------------------------------
def decoder_forward(params, x, y):
    N, dim, H, W = x.shape
    E = params["att_wq"][0].shape[0]
    HW = H * W
    scaler = math.sqrt(E)
    cdt = jnp.bfloat16   # MXU-native dtype for conv matmuls (accum stays f32)

    # ---- stage 1: self-attention projections (Q,K,V,res in ONE matmul) ----
    xc = _append_ones(_im2col3(x)).astype(cdt)                 # (N, 9d+1, HW)

    wq, bq = params["att_wq"]
    wq9 = jnp.zeros((E, 9 * dim), jnp.float32)
    wq9 = wq9.at[:, 4 * dim:5 * dim].set(wq.reshape(E, dim))   # 1x1 = center tap
    W1 = jnp.concatenate([
        _aug_bias(wq9, bq),
        _aug_bias(_w3_flat(params["att_wk"][0]), params["att_wk"][1]),
        _aug_bias(_w3_flat(params["att_wv"][0]), params["att_wv"][1]),
        _aug_bias(_w3_flat(params["res"][0]), params["res"][1]),
    ], axis=0).astype(cdt)                                     # (4E, 9d+1)

    qkvr = proj_pallas(xc, W1).reshape(N, 4 * E, H, W)
    qkv1 = qkvr[:, :3 * E]
    res1 = qkvr[:, 3 * E:]
    qt1 = jnp.swapaxes(qkvr[:, :E], -1, -2)                    # Q^T (wrapper-side)

    g1, b1 = params["ln1"]
    z = attn_ln_pallas(qkv1, qt1, res1, g1, b1, scaler)        # (N, E, H, W)

    # ---- stage 2: enc-dec attention (block-diagonal fused projection) ----
    z_aug = _append_ones(z.reshape(N, E, HW)).astype(cdt)      # (N, E+1, HW)
    yc = _append_ones(_im2col3(y)).astype(cdt)                 # (N, 9E+1, HW)
    x2 = jnp.concatenate([z_aug, yc], axis=1)                  # (N, 10E+2, HW)

    wq2 = _aug_bias(params["ed_wq"][0].reshape(E, E), params["ed_wq"][1])
    wk2 = _aug_bias(_w3_flat(params["ed_wk"][0]), params["ed_wk"][1])
    wv2 = _aug_bias(_w3_flat(params["ed_wv"][0]), params["ed_wv"][1])
    dz, dyc = E + 1, 9 * E + 1
    W2 = jnp.zeros((3 * E, dz + dyc), jnp.float32)
    W2 = W2.at[:E, :dz].set(wq2)          # Q2 from z
    W2 = W2.at[E:2 * E, dz:].set(wk2)     # K2 from y
    W2 = W2.at[2 * E:, dz:].set(wv2)      # V2 from y
    W2 = W2.astype(cdt)

    qkv2 = proj_pallas(x2, W2).reshape(N, 3 * E, H, W)
    qt2 = jnp.swapaxes(qkv2[:, :E], -1, -2)

    g2, b2 = params["ln2"]
    z2 = attn_ln_pallas(qkv2, qt2, z, g2, b2, scaler)          # (N, E, H, W)

    # ---- stage 3: conv+ReLU "linear" + residual + norm3 (lane-dense HW) ----
    z2c = _append_ones(_im2col3(z2)).astype(cdt)               # (N, 9E+1, HW)
    wlin = _aug_bias(_w3_flat(params["lin"][0]), params["lin"][1]).astype(cdt)
    g3, b3 = params["ln3"]
    out = ffn_ln_pallas(z2c, z2.reshape(N, E, HW), wlin,
                        g3.reshape(E, HW), b3.reshape(E, HW))
    return out.reshape(N, E, H, W)


# ----------------------------------------------------------------------------
# Pure-JAX reference (f32, HIGHEST precision) for correctness check.
# ----------------------------------------------------------------------------
def _conv_ref(x, wb, k, relu=False):
    w, b = wb
    pad = (k - 1) // 2
    out = lax.conv_general_dilated(
        x, w, window_strides=(1, 1), padding=[(pad, pad), (pad, pad)],
        dimension_numbers=("NCHW", "OIHW", "NCHW"),
        precision=lax.Precision.HIGHEST)
    out = out + b[None, :, None, None]
    return jnp.maximum(out, 0.0) if relu else out


def _attn_ref(Q, K, V, scaler):
    s1 = jnp.einsum("nciw,ncjw->ncij", Q, K, precision=lax.Precision.HIGHEST) / scaler
    p1 = jax.nn.softmax(s1, axis=-1)
    s2 = jnp.einsum("ncha,nchb->ncab", Q, K, precision=lax.Precision.HIGHEST) / scaler
    p2 = jax.nn.softmax(s2, axis=-2)
    t = jnp.einsum("ncij,ncjw->nciw", p1, V, precision=lax.Precision.HIGHEST)
    return jnp.einsum("nciw,ncwv->nciv", t, p2, precision=lax.Precision.HIGHEST)


def _ln_ref(x, gb, eps=1e-5):
    g, b = gb
    mean = jnp.mean(x, axis=(1, 2, 3), keepdims=True)
    var = jnp.mean((x - mean) ** 2, axis=(1, 2, 3), keepdims=True)
    return (x - mean) / jnp.sqrt(var + eps) * g[None] + b[None]


def decoder_ref(params, x, y):
    enc_dim = params["att_wq"][0].shape[0]
    scaler = math.sqrt(enc_dim)
    Q = _conv_ref(x, params["att_wq"], 1)
    Kx = _conv_ref(x, params["att_wk"], 3)
    Vx = _conv_ref(x, params["att_wv"], 3)
    z = _attn_ref(Q, Kx, Vx, scaler)
    z = _ln_ref(z + _conv_ref(x, params["res"], 3), params["ln1"])
    Q2 = _conv_ref(z, params["ed_wq"], 1)
    K2 = _conv_ref(y, params["ed_wk"], 3)
    V2 = _conv_ref(y, params["ed_wv"], 3)
    z2 = _attn_ref(Q2, K2, V2, scaler)
    z2 = _ln_ref(z2 + z, params["ln2"])
    z3 = _conv_ref(z2, params["lin"], 3, relu=True)
    return _ln_ref(z3 + z2, params["ln3"])


# ----------------------------------------------------------------------------
# Deterministic parameter init (shapes follow the module's __init__)
# ----------------------------------------------------------------------------
def init_params(key, dim, enc_dim, H, W):
    def conv_init(k, cout, cin, ksz):
        wkey, bkey = jax.random.split(k)
        bound = 1.0 / math.sqrt(cin * ksz * ksz)
        w = jax.random.uniform(wkey, (cout, cin, ksz, ksz), jnp.float32, -bound, bound)
        b = jax.random.uniform(bkey, (cout,), jnp.float32, -bound, bound)
        return (w, b)

    keys = jax.random.split(key, 11)
    p = {
        "att_wq": conv_init(keys[0], enc_dim, dim, 1),
        "att_wk": conv_init(keys[1], enc_dim, dim, 3),
        "att_wv": conv_init(keys[2], enc_dim, dim, 3),
        "res":    conv_init(keys[3], enc_dim, dim, 3),
        "ed_wq":  conv_init(keys[4], enc_dim, enc_dim, 1),
        "ed_wk":  conv_init(keys[5], enc_dim, enc_dim, 3),
        "ed_wv":  conv_init(keys[6], enc_dim, enc_dim, 3),
        "lin":    conv_init(keys[7], enc_dim, enc_dim, 3),
    }
    ln_shape = (enc_dim, H, W)
    for i, name in enumerate(["ln1", "ln2", "ln3"]):
        gk, bk = jax.random.split(keys[8 + i])
        p[name] = (1.0 + 0.1 * jax.random.normal(gk, ln_shape, jnp.float32),
                   0.1 * jax.random.normal(bk, ln_shape, jnp.float32))
    return p


if __name__ == "__main__":
    N, dim, enc_dim, H, W = 2, 4, 8, 16, 16
    key = jax.random.PRNGKey(0)
    kx, ky, kp = jax.random.split(key, 3)
    x = jax.random.normal(kx, (N, dim, H, W), jnp.float32)
    y = jax.random.normal(ky, (N, enc_dim, H, W), jnp.float32)
    params = init_params(kp, dim, enc_dim, H, W)

    out = jax.jit(decoder_forward)(params, x, y)
    out = jax.block_until_ready(out)

    ref = decoder_ref(params, x, y)
    assert out.shape == (N, enc_dim, H, W), out.shape
    # Tolerance accounts for bf16 projection matmuls + approx reciprocal
    # (reference is f32 HIGHEST precision).
    max_err = float(jnp.max(jnp.abs(out - ref)))
    if not bool(jnp.allclose(out, ref, atol=5e-2, rtol=5e-2)):
        raise AssertionError(
            f"Pallas decoder output does not match JAX reference "
            f"(max abs err {max_err:.3e})")
    print("KERNEL_OK")
</pallas_src>

<mosaic_0001>
module attributes {stable_mosaic.version = 11 : i64} {
  func.func @_proj_kernel(%arg0: i32, %arg1: memref<1x37x256xbf16, #tpu.memory_space<vmem>>, %arg2: memref<32x37xbf16, #tpu.memory_space<vmem>>, %arg3: memref<1x32x256xf32, #tpu.memory_space<vmem>>) attributes {dimension_semantics = [#tpu.dimension_semantics<parallel>], iteration_bounds = array<i64: 2>, scalar_prefetch = 0 : i64, scratch_operands = 0 : i64, tpu.core_type = #tpu.core_type<tc>, window_params = [{transform_indices = @transform_0, window_bounds = array<i64: 1, 37, 256>}, {pipeline_mode = #tpu.pipeline_mode<synchronous>, transform_indices = @transform_1, window_bounds = array<i64: 32, 37>}, {transform_indices = @transform_2, window_bounds = array<i64: 1, 32, 256>}]} {
    %c0 = arith.constant 0 : index
    %c0_0 = arith.constant 0 : index
    %0 = vector.load %arg2[%c0, %c0_0] : memref<32x37xbf16, #tpu.memory_space<vmem>>, vector<32x37xbf16>
    %c0_1 = arith.constant 0 : index
    %c0_2 = arith.constant 0 : index
    %c0_3 = arith.constant 0 : index
    %1 = vector.load %arg1[%c0_1, %c0_2, %c0_3] : memref<1x37x256xbf16, #tpu.memory_space<vmem>>, vector<1x37x256xbf16>
    %2 = vector.shape_cast %1 : vector<1x37x256xbf16> to vector<37x256xbf16>
    %cst = arith.constant dense<0.000000e+00> : vector<32x256xf32>
    %3 = tpu.matmul %0, %2, %cst {dimension_numbers = #tpu.dot_dimension_numbers<[1], [0], [0], [1], [0, 0, 1, 1], [], []>} : vector<32x37xbf16>, vector<37x256xbf16>, vector<32x256xf32> -> vector<32x256xf32>
    %c0_4 = arith.constant 0 : index
    %c0_5 = arith.constant 0 : index
    %c0_6 = arith.constant 0 : index
    %4 = vector.load %arg3[%c0_4, %c0_5, %c0_6] : memref<1x32x256xf32, #tpu.memory_space<vmem>>, vector<1x32x256xf32>
    %5 = vector.shape_cast %4 : vector<1x32x256xf32> to vector<32x256xf32>
    %6 = vector.shape_cast %3 : vector<32x256xf32> to vector<1x32x256xf32>
    tpu.vector_store %arg3[%c0_4, %c0_5, %c0_6], %6 {strides = array<i32>} : memref<1x32x256xf32, #tpu.memory_space<vmem>>, vector<1x32x256xf32>,
    return
  }
  func.func @transform_0(%arg0: i32) -> (i32, i32, i32) {
    %c0_i32 = arith.constant 0 : i32
    %c0_i32_0 = arith.constant 0 : i32
    %c0_i32_1 = arith.constant 0 : i32
    return %arg0, %c0_i32, %c0_i32_0 : i32, i32, i32
  }
  func.func @transform_1(%arg0: i32) -> (i32, i32) {
    %c0_i32 = arith.constant 0 : i32
    %c0_i32_0 = arith.constant 0 : i32
    %c0_i32_1 = arith.constant 0 : i32
    return %c0_i32, %c0_i32_0 : i32, i32
  }
  func.func @transform_2(%arg0: i32) -> (i32, i32, i32) {
    %c0_i32 = arith.constant 0 : i32
    %c0_i32_0 = arith.constant 0 : i32
    %c0_i32_1 = arith.constant 0 : i32
    return %arg0, %c0_i32, %c0_i32_0 : i32, i32, i32
  }
}

module attributes {stable_mosaic.version = 11 : i64} {
  func.func @_attn_ln_kernel(%arg0: i32, %arg1: memref<1x24x16x16xf32, #tpu.memory_space<vmem>>, %arg2: memref<1x8x16x16xf32, #tpu.memory_space<vmem>>, %arg3: memref<1x8x16x16xf32, #tpu.memory_space<vmem>>, %arg4: memref<8x16x16xf32, #tpu.memory_space<vmem>>, %arg5: memref<8x16x16xf32, #tpu.memory_space<vmem>>, %arg6: memref<1x8x16x16xf32, #tpu.memory_space<vmem>>) attributes {dimension_semantics = [#tpu.dimension_semantics<parallel>], iteration_bounds = array<i64: 2>, scalar_prefetch = 0 : i64, scratch_operands = 0 : i64, tpu.core_type = #tpu.core_type<tc>, window_params = [{transform_indices = @transform_0, window_bounds = array<i64: 1, 24, 16, 16>}, {transform_indices = @transform_1, window_bounds = array<i64: 1, 8, 16, 16>}, {transform_indices = @transform_2, window_bounds = array<i64: 1, 8, 16, 16>}, {pipeline_mode = #tpu.pipeline_mode<synchronous>, transform_indices = @transform_3, window_bounds = array<i64: 8, 16, 16>}, {pipeline_mode = #tpu.pipeline_mode<synchronous>, transform_indices = @transform_4, window_bounds = array<i64: 8, 16, 16>}, {transform_indices = @transform_5, window_bounds = array<i64: 1, 8, 16, 16>}]} {
    %c0 = arith.constant 0 : index
    %c0_0 = arith.constant 0 : index
    %c0_1 = arith.constant 0 : index
    %c0_2 = arith.constant 0 : index
    %0 = vector.load %arg1[%c0, %c0_0, %c0_1, %c0_2] : memref<1x24x16x16xf32, #tpu.memory_space<vmem>>, vector<1x8x16x16xf32>
    %1 = vector.shape_cast %0 : vector<1x8x16x16xf32> to vector<8x16x16xf32>
    %c0_3 = arith.constant 0 : index
    %c8 = arith.constant 8 : index
    %c0_4 = arith.constant 0 : index
    %c0_5 = arith.constant 0 : index
    %2 = vector.load %arg1[%c0_3, %c8, %c0_4, %c0_5] : memref<1x24x16x16xf32, #tpu.memory_space<vmem>>, vector<1x8x16x16xf32>
    %3 = vector.shape_cast %2 : vector<1x8x16x16xf32> to vector<8x16x16xf32>
    %c0_6 = arith.constant 0 : index
    %c16 = arith.constant 16 : index
    %c0_7 = arith.constant 0 : index
    %c0_8 = arith.constant 0 : index
    %4 = vector.load %arg1[%c0_6, %c16, %c0_7, %c0_8] : memref<1x24x16x16xf32, #tpu.memory_space<vmem>>, vector<1x8x16x16xf32>
    %5 = vector.shape_cast %4 : vector<1x8x16x16xf32> to vector<8x16x16xf32>
    %c0_9 = arith.constant 0 : index
    %c0_10 = arith.constant 0 : index
    %c0_11 = arith.constant 0 : index
    %c0_12 = arith.constant 0 : index
    %6 = vector.load %arg2[%c0_9, %c0_10, %c0_11, %c0_12] : memref<1x8x16x16xf32, #tpu.memory_space<vmem>>, vector<1x8x16x16xf32>
    %7 = vector.shape_cast %6 : vector<1x8x16x16xf32> to vector<8x16x16xf32>
    "tpu.trace_start"() <{level = 10 : i32, message = "ciw,cjw->cij"}> : () -> ()
    %cst = arith.constant dense<0.000000e+00> : vector<8x16x16xf32>
    %8 = tpu.matmul %1, %3, %cst {dimension_numbers = #tpu.dot_dimension_numbers<[2], [2], [1], [1], [0, 0, 0, 1, 1, 1], [0], [0]>} : vector<8x16x16xf32>, vector<8x16x16xf32>, vector<8x16x16xf32> -> vector<8x16x16xf32>
    "tpu.trace_stop"() : () -> ()
    %cst_13 = arith.constant 0.353553385 : f32
    %9 = vector.broadcast %cst_13 : f32 to vector<8x16x16xf32>
    %10 = arith.mulf %8, %9 : vector<8x16x16xf32>
    %cst_14 = arith.constant dense<0xFF800000> : vector<8x16xf32>
    %11 = vector.multi_reduction <maximumf>, %10, %cst_14 [2] : vector<8x16x16xf32> to vector<8x16xf32>
    %12 = vector.shape_cast %11 : vector<8x16xf32> to vector<8x16x1xf32>
    %13 = vector.broadcast %12 : vector<8x16x1xf32> to vector<8x16x16xf32>
    %14 = arith.subf %10, %13 : vector<8x16x16xf32>
    %15 = math.exp %14 : vector<8x16x16xf32>
    %cst_15 = arith.constant dense<0.000000e+00> : vector<8x16xf32>
    %16 = vector.multi_reduction <add>, %15, %cst_15 [2] : vector<8x16x16xf32> to vector<8x16xf32>
    %17 = vector.shape_cast %16 : vector<8x16xf32> to vector<8x16x1xf32>
    %18 = tpu.reciprocal %17 {approx = true} : vector<8x16x1xf32> -> vector<8x16x1xf32>
    %19 = vector.broadcast %18 : vector<8x16x1xf32> to vector<8x16x16xf32>
    %20 = arith.mulf %15, %19 : vector<8x16x16xf32>
    "tpu.trace_start"() <{level = 10 : i32, message = "cah,chb->cab"}> : () -> ()
    %cst_16 = arith.constant dense<0.000000e+00> : vector<8x16x16xf32>
    %21 = tpu.matmul %7, %3, %cst_16 {dimension_numbers = #tpu.dot_dimension_numbers<[2], [1], [1], [2], [0, 0, 0, 1, 1, 2], [0], [0]>} : vector<8x16x16xf32>, vector<8x16x16xf32>, vector<8x16x16xf32> -> vector<8x16x16xf32>
    "tpu.trace_stop"() : () -> ()
    %cst_17 = arith.constant 0.353553385 : f32
    %22 = vector.broadcast %cst_17 : f32 to vector<8x16x16xf32>
    %23 = arith.mulf %21, %22 : vector<8x16x16xf32>
    %cst_18 = arith.constant dense<0xFF800000> : vector<8x16xf32>
    %24 = vector.multi_reduction <maximumf>, %23, %cst_18 [1] : vector<8x16x16xf32> to vector<8x16xf32>
    %25 = vector.shape_cast %24 : vector<8x16xf32> to vector<8x1x16xf32>
    %26 = vector.broadcast %25 : vector<8x1x16xf32> to vector<8x16x16xf32>
    %27 = arith.subf %23, %26 : vector<8x16x16xf32>
    %28 = math.exp %27 : vector<8x16x16xf32>
    %cst_19 = arith.constant dense<0.000000e+00> : vector<8x16xf32>
    %29 = vector.multi_reduction <add>, %28, %cst_19 [1] : vector<8x16x16xf32> to vector<8x16xf32>
    %30 = vector.shape_cast %29 : vector<8x16xf32> to vector<8x1x16xf32>
    %31 = tpu.reciprocal %30 {approx = true} : vector<8x1x16xf32> -> vector<8x1x16xf32>
    %32 = vector.broadcast %31 : vector<8x1x16xf32> to vector<8x16x16xf32>
    %33 = arith.mulf %28, %32 : vector<8x16x16xf32>
    "tpu.trace_start"() <{level = 10 : i32, message = "cij,cjw->ciw"}> : () -> ()
    %cst_20 = arith.constant dense<0.000000e+00> : vector<8x16x16xf32>
    %34 = tpu.matmul %20, %5, %cst_20 {dimension_numbers = #tpu.dot_dimension_numbers<[2], [1], [1], [2], [0, 0, 0, 1, 1, 2], [0], [0]>} : vector<8x16x16xf32>, vector<8x16x16xf32>, vector<8x16x16xf32> -> vector<8x16x16xf32>
    "tpu.trace_stop"() : () -> ()
    "tpu.trace_start"() <{level = 10 : i32, message = "ciw,cwb->cib"}> : () -> ()
    %cst_21 = arith.constant dense<0.000000e+00> : vector<8x16x16xf32>
    %35 = tpu.matmul %34, %33, %cst_21 {dimension_numbers = #tpu.dot_dimension_numbers<[2], [1], [1], [2], [0, 0, 0, 1, 1, 2], [0], [0]>} : vector<8x16x16xf32>, vector<8x16x16xf32>, vector<8x16x16xf32> -> vector<8x16x16xf32>
    "tpu.trace_stop"() : () -> ()
    %c0_22 = arith.constant 0 : index
    %c0_23 = arith.constant 0 : index
    %c0_24 = arith.constant 0 : index
    %c0_25 = arith.constant 0 : index
    %36 = vector.load %arg3[%c0_22, %c0_23, %c0_24, %c0_25] : memref<1x8x16x16xf32, #tpu.memory_space<vmem>>, vector<1x8x16x16xf32>
    %37 = vector.shape_cast %36 : vector<1x8x16x16xf32> to vector<8x16x16xf32>
    %38 = arith.addf %35, %37 : vector<8x16x16xf32>
    %39 = vector.shape_cast %38 : vector<8x16x16xf32> to vector<1x8x16x16xf32>
    %cst_26 = arith.constant dense<0.000000e+00> : vector<1xf32>
    %40 = vector.multi_reduction <add>, %39, %cst_26 [1, 2, 3] : vector<1x8x16x16xf32> to vector<1xf32>
    %41 = vector.shape_cast %40 : vector<1xf32> to vector<1x1x1x1xf32>
    %42 = vector.extract %41[0, 0, 0, 0] : f32 from vector<1x1x1x1xf32>
    %43 = vector.broadcast %42 : f32 to vector<1x1x1xf32>
    %cst_27 = arith.constant 2.048000e+03 : f32
    %44 = vector.broadcast %cst_27 : f32 to vector<1x1x1xf32>
    %45 = arith.divf %43, %44 : vector<1x1x1xf32>
    %46 = vector.broadcast %45 : vector<1x1x1xf32> to vector<8x16x16xf32>
    %47 = arith.subf %38, %46 : vector<8x16x16xf32>
    %48 = arith.mulf %47, %47 : vector<8x16x16xf32>
    %49 = vector.shape_cast %48 : vector<8x16x16xf32> to vector<1x8x16x16xf32>
    %cst_28 = arith.constant dense<0.000000e+00> : vector<1xf32>
    %50 = vector.multi_reduction <add>, %49, %cst_28 [1, 2, 3] : vector<1x8x16x16xf32> to vector<1xf32>
    %51 = vector.shape_cast %50 : vector<1xf32> to vector<1x1x1x1xf32>
    %52 = vector.extract %51[0, 0, 0, 0] : f32 from vector<1x1x1x1xf32>
    %53 = vector.broadcast %52 : f32 to vector<1x1x1xf32>
    %cst_29 = arith.constant 2.048000e+03 : f32
    %54 = vector.broadcast %cst_29 : f32 to vector<1x1x1xf32>
    %55 = arith.divf %53, %54 : vector<1x1x1xf32>
    %cst_30 = arith.constant 9.99999974E-6 : f32
    %56 = vector.broadcast %cst_30 : f32 to vector<1x1x1xf32>
    %57 = arith.addf %55, %56 : vector<1x1x1xf32>
    %58 = math.rsqrt %57 : vector<1x1x1xf32>
    %59 = vector.broadcast %58 : vector<1x1x1xf32> to vector<8x16x16xf32>
    %60 = arith.mulf %47, %59 : vector<8x16x16xf32>
    %c0_31 = arith.constant 0 : index
    %c0_32 = arith.constant 0 : index
    %c0_33 = arith.constant 0 : index
    %61 = vector.load %arg4[%c0_31, %c0_32, %c0_33] : memref<8x16x16xf32, #tpu.memory_space<vmem>>, vector<8x16x16xf32>
    %62 = arith.mulf %60, %61 : vector<8x16x16xf32>
    %c0_34 = arith.constant 0 : index
    %c0_35 = arith.constant 0 : index
    %c0_36 = arith.constant 0 : index
    %63 = vector.load %arg5[%c0_34, %c0_35, %c0_36] : memref<8x16x16xf32, #tpu.memory_space<vmem>>, vector<8x16x16xf32>
    %64 = arith.addf %62, %63 : vector<8x16x16xf32>
    %c0_37 = arith.constant 0 : index
    %c0_38 = arith.constant 0 : index
    %c0_39 = arith.constant 0 : index
    %c0_40 = arith.constant 0 : index
    %65 = vector.load %arg6[%c0_37, %c0_38, %c0_39, %c0_40] : memref<1x8x16x16xf32, #tpu.memory_space<vmem>>, vector<1x8x16x16xf32>
    %66 = vector.shape_cast %65 : vector<1x8x16x16xf32> to vector<8x16x16xf32>
    %67 = vector.shape_cast %64 : vector<8x16x16xf32> to vector<1x8x16x16xf32>
    tpu.vector_store %arg6[%c0_37, %c0_38, %c0_39, %c0_40], %67 {strides = array<i32>} : memref<1x8x16x16xf32, #tpu.memory_space<vmem>>, vector<1x8x16x16xf32>,
    return
  }
  func.func @transform_0(%arg0: i32) -> (i32, i32, i32, i32) {
    %c0_i32 = arith.constant 0 : i32
    %c0_i32_0 = arith.constant 0 : i32
    %c0_i32_1 = arith.constant 0 : i32
    %c0_i32_2 = arith.constant 0 : i32
    return %arg0, %c0_i32, %c0_i32_0, %c0_i32_1 : i32, i32, i32, i32
  }
  func.func @transform_1(%arg0: i32) -> (i32, i32, i32, i32) {
    %c0_i32 = arith.constant 0 : i32
    %c0_i32_0 = arith.constant 0 : i32
    %c0_i32_1 = arith.constant 0 : i32
    %c0_i32_2 = arith.constant 0 : i32
    return %arg0, %c0_i32, %c0_i32_0, %c0_i32_1 : i32, i32, i32, i32
  }
  func.func @transform_2(%arg0: i32) -> (i32, i32, i32, i32) {
    %c0_i32 = arith.constant 0 : i32
    %c0_i32_0 = arith.constant 0 : i32
    %c0_i32_1 = arith.constant 0 : i32
    %c0_i32_2 = arith.constant 0 : i32
    return %arg0, %c0_i32, %c0_i32_0, %c0_i32_1 : i32, i32, i32, i32
  }
  func.func @transform_3(%arg0: i32) -> (i32, i32, i32) {
    %c0_i32 = arith.constant 0 : i32
    %c0_i32_0 = arith.constant 0 : i32
    %c0_i32_1 = arith.constant 0 : i32
    %c0_i32_2 = arith.constant 0 : i32
    return %c0_i32, %c0_i32_0, %c0_i32_1 : i32, i32, i32
  }
  func.func @transform_4(%arg0: i32) -> (i32, i32, i32) {
    %c0_i32 = arith.constant 0 : i32
    %c0_i32_0 = arith.constant 0 : i32
    %c0_i32_1 = arith.constant 0 : i32
    %c0_i32_2 = arith.constant 0 : i32
    return %c0_i32, %c0_i32_0, %c0_i32_1 : i32, i32, i32
  }
  func.func @transform_5(%arg0: i32) -> (i32, i32, i32, i32) {
    %c0_i32 = arith.constant 0 : i32
    %c0_i32_0 = arith.constant 0 : i32
    %c0_i32_1 = arith.constant 0 : i32
    %c0_i32_2 = arith.constant 0 : i32
    return %arg0, %c0_i32, %c0_i32_0, %c0_i32_1 : i32, i32, i32, i32
  }
}

module attributes {stable_mosaic.version = 11 : i64} {
  func.func @_proj_kernel(%arg0: i32, %arg1: memref<1x82x256xbf16, #tpu.memory_space<vmem>>, %arg2: memref<24x82xbf16, #tpu.memory_space<vmem>>, %arg3: memref<1x24x256xf32, #tpu.memory_space<vmem>>) attributes {dimension_semantics = [#tpu.dimension_semantics<parallel>], iteration_bounds = array<i64: 2>, scalar_prefetch = 0 : i64, scratch_operands = 0 : i64, tpu.core_type = #tpu.core_type<tc>, window_params = [{transform_indices = @transform_0, window_bounds = array<i64: 1, 82, 256>}, {pipeline_mode = #tpu.pipeline_mode<synchronous>, transform_indices = @transform_1, window_bounds = array<i64: 24, 82>}, {transform_indices = @transform_2, window_bounds = array<i64: 1, 24, 256>}]} {
    %c0 = arith.constant 0 : index
    %c0_0 = arith.constant 0 : index
    %0 = vector.load %arg2[%c0, %c0_0] : memref<24x82xbf16, #tpu.memory_space<vmem>>, vector<24x82xbf16>
    %c0_1 = arith.constant 0 : index
    %c0_2 = arith.constant 0 : index
    %c0_3 = arith.constant 0 : index
    %1 = vector.load %arg1[%c0_1, %c0_2, %c0_3] : memref<1x82x256xbf16, #tpu.memory_space<vmem>>, vector<1x82x256xbf16>
    %2 = vector.shape_cast %1 : vector<1x82x256xbf16> to vector<82x256xbf16>
    %cst = arith.constant dense<0.000000e+00> : vector<24x256xf32>
    %3 = tpu.matmul %0, %2, %cst {dimension_numbers = #tpu.dot_dimension_numbers<[1], [0], [0], [1], [0, 0, 1, 1], [], []>} : vector<24x82xbf16>, vector<82x256xbf16>, vector<24x256xf32> -> vector<24x256xf32>
    %c0_4 = arith.constant 0 : index
    %c0_5 = arith.constant 0 : index
    %c0_6 = arith.constant 0 : index
    %4 = vector.load %arg3[%c0_4, %c0_5, %c0_6] : memref<1x24x256xf32, #tpu.memory_space<vmem>>, vector<1x24x256xf32>
    %5 = vector.shape_cast %4 : vector<1x24x256xf32> to vector<24x256xf32>
    %6 = vector.shape_cast %3 : vector<24x256xf32> to vector<1x24x256xf32>
    tpu.vector_store %arg3[%c0_4, %c0_5, %c0_6], %6 {strides = array<i32>} : memref<1x24x256xf32, #tpu.memory_space<vmem>>, vector<1x24x256xf32>,
    return
  }
  func.func @transform_0(%arg0: i32) -> (i32, i32, i32) {
    %c0_i32 = arith.constant 0 : i32
    %c0_i32_0 = arith.constant 0 : i32
    %c0_i32_1 = arith.constant 0 : i32
    return %arg0, %c0_i32, %c0_i32_0 : i32, i32, i32
  }
  func.func @transform_1(%arg0: i32) -> (i32, i32) {
    %c0_i32 = arith.constant 0 : i32
    %c0_i32_0 = arith.constant 0 : i32
    %c0_i32_1 = arith.constant 0 : i32
    return %c0_i32, %c0_i32_0 : i32, i32
  }
  func.func @transform_2(%arg0: i32) -> (i32, i32, i32) {
    %c0_i32 = arith.constant 0 : i32
    %c0_i32_0 = arith.constant 0 : i32
    %c0_i32_1 = arith.constant 0 : i32
    return %arg0, %c0_i32, %c0_i32_0 : i32, i32, i32
  }
}

module attributes {stable_mosaic.version = 11 : i64} {
  func.func @_ffn_ln_kernel(%arg0: i32, %arg1: memref<1x73x256xbf16, #tpu.memory_space<vmem>>, %arg2: memref<1x8x256xf32, #tpu.memory_space<vmem>>, %arg3: memref<8x73xbf16, #tpu.memory_space<vmem>>, %arg4: memref<8x256xf32, #tpu.memory_space<vmem>>, %arg5: memref<8x256xf32, #tpu.memory_space<vmem>>, %arg6: memref<1x8x256xf32, #tpu.memory_space<vmem>>) attributes {dimension_semantics = [#tpu.dimension_semantics<parallel>], iteration_bounds = array<i64: 2>, scalar_prefetch = 0 : i64, scratch_operands = 0 : i64, tpu.core_type = #tpu.core_type<tc>, window_params = [{transform_indices = @transform_0, window_bounds = array<i64: 1, 73, 256>}, {transform_indices = @transform_1, window_bounds = array<i64: 1, 8, 256>}, {pipeline_mode = #tpu.pipeline_mode<synchronous>, transform_indices = @transform_2, window_bounds = array<i64: 8, 73>}, {pipeline_mode = #tpu.pipeline_mode<synchronous>, transform_indices = @transform_3, window_bounds = array<i64: 8, 256>}, {pipeline_mode = #tpu.pipeline_mode<synchronous>, transform_indices = @transform_4, window_bounds = array<i64: 8, 256>}, {transform_indices = @transform_5, window_bounds = array<i64: 1, 8, 256>}]} {
    %c0 = arith.constant 0 : index
    %c0_0 = arith.constant 0 : index
    %0 = vector.load %arg3[%c0, %c0_0] : memref<8x73xbf16, #tpu.memory_space<vmem>>, vector<8x73xbf16>
    %c0_1 = arith.constant 0 : index
    %c0_2 = arith.constant 0 : index
    %c0_3 = arith.constant 0 : index
    %1 = vector.load %arg1[%c0_1, %c0_2, %c0_3] : memref<1x73x256xbf16, #tpu.memory_space<vmem>>, vector<1x73x256xbf16>
    %2 = vector.shape_cast %1 : vector<1x73x256xbf16> to vector<73x256xbf16>
    %cst = arith.constant dense<0.000000e+00> : vector<8x256xf32>
    %3 = tpu.matmul %0, %2, %cst {dimension_numbers = #tpu.dot_dimension_numbers<[1], [0], [0], [1], [0, 0, 1, 1], [], []>} : vector<8x73xbf16>, vector<73x256xbf16>, vector<8x256xf32> -> vector<8x256xf32>
    %cst_4 = arith.constant 0.000000e+00 : f32
    %4 = vector.broadcast %cst_4 : f32 to vector<8x256xf32>
    %5 = arith.maximumf %3, %4 : vector<8x256xf32>
    %c0_5 = arith.constant 0 : index
    %c0_6 = arith.constant 0 : index
    %c0_7 = arith.constant 0 : index
    %6 = vector.load %arg2[%c0_5, %c0_6, %c0_7] : memref<1x8x256xf32, #tpu.memory_space<vmem>>, vector<1x8x256xf32>
    %7 = vector.shape_cast %6 : vector<1x8x256xf32> to vector<8x256xf32>
    %8 = arith.addf %5, %7 : vector<8x256xf32>
    %9 = vector.shape_cast %8 : vector<8x256xf32> to vector<1x8x256xf32>
    %cst_8 = arith.constant dense<0.000000e+00> : vector<1xf32>
    %10 = vector.multi_reduction <add>, %9, %cst_8 [1, 2] : vector<1x8x256xf32> to vector<1xf32>
    %11 = vector.shape_cast %10 : vector<1xf32> to vector<1x1x1xf32>
    %12 = vector.extract %11[0, 0, 0] : f32 from vector<1x1x1xf32>
    %13 = vector.broadcast %12 : f32 to vector<1x1xf32>
    %cst_9 = arith.constant 2.048000e+03 : f32
    %14 = vector.broadcast %cst_9 : f32 to vector<1x1xf32>
    %15 = arith.divf %13, %14 : vector<1x1xf32>
    %16 = vector.broadcast %15 : vector<1x1xf32> to vector<8x256xf32>
    %17 = arith.subf %8, %16 : vector<8x256xf32>
    %18 = arith.mulf %17, %17 : vector<8x256xf32>
    %19 = vector.shape_cast %18 : vector<8x256xf32> to vector<1x8x256xf32>
    %cst_10 = arith.constant dense<0.000000e+00> : vector<1xf32>
    %20 = vector.multi_reduction <add>, %19, %cst_10 [1, 2] : vector<1x8x256xf32> to vector<1xf32>
    %21 = vector.shape_cast %20 : vector<1xf32> to vector<1x1x1xf32>
    %22 = vector.extract %21[0, 0, 0] : f32 from vector<1x1x1xf32>
    %23 = vector.broadcast %22 : f32 to vector<1x1xf32>
    %cst_11 = arith.constant 2.048000e+03 : f32
    %24 = vector.broadcast %cst_11 : f32 to vector<1x1xf32>
    %25 = arith.divf %23, %24 : vector<1x1xf32>
    %cst_12 = arith.constant 9.99999974E-6 : f32
    %26 = vector.broadcast %cst_12 : f32 to vector<1x1xf32>
    %27 = arith.addf %25, %26 : vector<1x1xf32>
    %28 = math.rsqrt %27 : vector<1x1xf32>
    %29 = vector.broadcast %28 : vector<1x1xf32> to vector<8x256xf32>
    %30 = arith.mulf %17, %29 : vector<8x256xf32>
    %c0_13 = arith.constant 0 : index
    %c0_14 = arith.constant 0 : index
    %31 = vector.load %arg4[%c0_13, %c0_14] : memref<8x256xf32, #tpu.memory_space<vmem>>, vector<8x256xf32>
    %32 = arith.mulf %30, %31 : vector<8x256xf32>
    %c0_15 = arith.constant 0 : index
    %c0_16 = arith.constant 0 : index
    %33 = vector.load %arg5[%c0_15, %c0_16] : memref<8x256xf32, #tpu.memory_space<vmem>>, vector<8x256xf32>
    %34 = arith.addf %32, %33 : vector<8x256xf32>
    %c0_17 = arith.constant 0 : index
    %c0_18 = arith.constant 0 : index
    %c0_19 = arith.constant 0 : index
    %35 = vector.load %arg6[%c0_17, %c0_18, %c0_19] : memref<1x8x256xf32, #tpu.memory_space<vmem>>, vector<1x8x256xf32>
    %36 = vector.shape_cast %35 : vector<1x8x256xf32> to vector<8x256xf32>
    %37 = vector.shape_cast %34 : vector<8x256xf32> to vector<1x8x256xf32>
    tpu.vector_store %arg6[%c0_17, %c0_18, %c0_19], %37 {strides = array<i32>} : memref<1x8x256xf32, #tpu.memory_space<vmem>>, vector<1x8x256xf32>,
    return
  }
  func.func @transform_0(%arg0: i32) -> (i32, i32, i32) {
    %c0_i32 = arith.constant 0 : i32
    %c0_i32_0 = arith.constant 0 : i32
    %c0_i32_1 = arith.constant 0 : i32
    return %arg0, %c0_i32, %c0_i32_0 : i32, i32, i32
  }
  func.func @transform_1(%arg0: i32) -> (i32, i32, i32) {
    %c0_i32 = arith.constant 0 : i32
    %c0_i32_0 = arith.constant 0 : i32
    %c0_i32_1 = arith.constant 0 : i32
    return %arg0, %c0_i32, %c0_i32_0 : i32, i32, i32
  }
  func.func @transform_2(%arg0: i32) -> (i32, i32) {
    %c0_i32 = arith.constant 0 : i32
    %c0_i32_0 = arith.constant 0 : i32
    %c0_i32_1 = arith.constant 0 : i32
    return %c0_i32, %c0_i32_0 : i32, i32
  }
  func.func @transform_3(%arg0: i32) -> (i32, i32) {
    %c0_i32 = arith.constant 0 : i32
    %c0_i32_0 = arith.constant 0 : i32
    %c0_i32_1 = arith.constant 0 : i32
    return %c0_i32, %c0_i32_0 : i32, i32
  }
  func.func @transform_4(%arg0: i32) -> (i32, i32) {
    %c0_i32 = arith.constant 0 : i32
    %c0_i32_0 = arith.constant 0 : i32
    %c0_i32_1 = arith.constant 0 : i32
    return %c0_i32, %c0_i32_0 : i32, i32
  }
  func.func @transform_5(%arg0: i32) -> (i32, i32, i32) {
    %c0_i32 = arith.constant 0 : i32
    %c0_i32_0 = arith.constant 0 : i32
    %c0_i32_1 = arith.constant 0 : i32
    return %arg0, %c0_i32, %c0_i32_0 : i32, i32, i32
  }
}

</mosaic_0001>

<llo_original>
// kernel: decoder_forward.5
$region0: #{decoder_forward.5}
  #allocation0 [shape = 'u32[]', space=smem, size = 0x4, offset = 0x4, fixed_abs, tag = 'smem constant byte address 0x4 - core index']
  #allocation1 [shape = 'u32[144,128]{1,0:T(1,128)}', space=vmem, size = 0x12000, scoped, tag = 'internal scratch']
  %s0 = inlined_call_operand.vmem [shape: bf16[2,37,256], index: 0, kind: input, shape index: {}]
  %s1 = inlined_call_operand.vmem [shape: bf16[32,37], index: 1, kind: input, shape index: {}]
  %s2 = inlined_call_operand.vmem [shape: f32[2,32,256], index: 2, kind: output, shape index: {}]
  %s3 = sld [smem:[#allocation0]]
  $region41: #{decoder_forward.5} parent=0
    _
  %s5 = ssub.s32 1, %s3
  %s6 = scalar_select 0, %s5, %s3
  loop: start=0, step=1, limit=4
  $region2: #{decoder_forward.5} parent=0 // loop_pre_header
    _
  $region3: #{decoder_forward.5} parent=0 // loop_header
    %s8 = sphi 0, %s12
    %p9 = scmp.ge.s32.totalorder %s8, 4
    %s18 = sphi 0, %s20
    %s21 = sphi 0, %s18
    %s22 = sphi 0, %s21
    %s38 = sphi 0, %s22
    %s42 = sphi 0, %s42
    %s44 = sphi 0, %s42
    %s45 = sphi 0, %s44
    %s59 = sphi 0, %s45
    %s65 = sphi 0, %s67
    %s68 = sphi 0, %s65
    %s69 = sphi 0, %s68
    %s85 = sphi 0, %s69
  $region4: #{decoder_forward.5} parent=0 // loop_header_branch
    %11 = sbr.rel (%p9) target = $region8
  $region5: #{decoder_forward.5} parent=0 // loop_body
    %s13 = ssub.s32 %s8, 1
    %s14 = ssub.s32 %s8, 2
    %s15 = sadd.s32 %s8, 1
    %s16 = ssub.s32 %s8, %s15
    %p17 = scmp.eq.s32.totalorder %s16, 0
    %s19 = sadd.s32 %s18, 1
    %s20 = scalar_select %p17, %s18, %s19
    %p23 = pneg %p17
    %p24 = scmp.eq.s32.totalorder %s8, 1
    %p25 = por %p23, %p24
    %p26 = scmp.ne.s32.totalorder %s18, %s21
    %p27 = scmp.eq.s32.totalorder %s8, 0
    %p28 = por %p26, %p27
    %p29 = scmp.ne.s32.totalorder %s18, %s21
    %p30 = scmp.eq.s32.totalorder %s13, 1
    %p31 = por %p29, %p30
    %p32 = scmp.ne.s32.totalorder %s21, %s22
    %p33 = scmp.eq.s32.totalorder %s13, 0
    %p34 = por %p32, %p33
    %p35 = scmp.ne.s32.totalorder %s21, %s22
    %p36 = scmp.eq.s32.totalorder %s14, 1
    %p37 = por %p35, %p36
    %p39 = scmp.ne.s32.totalorder %s22, %s38
    %p40 = scmp.eq.s32.totalorder %s14, 0
    %p41 = por %p39, %p40
    %s43 = sadd.s32 %s42, 1
    %p46 = scmp.eq.s32.totalorder %s8, 1
    %p47 = scmp.ne.s32.totalorder %s42, %s44
    %p48 = scmp.eq.s32.totalorder %s8, 0
    %p49 = por %p47, %p48
    %p50 = scmp.ne.s32.totalorder %s42, %s44
    %p51 = scmp.eq.s32.totalorder %s13, 1
    %p52 = por %p50, %p51
    %p53 = scmp.ne.s32.totalorder %s44, %s45
    %p54 = scmp.eq.s32.totalorder %s13, 0
    %p55 = por %p53, %p54
    %p56 = scmp.ne.s32.totalorder %s44, %s45
    %p57 = scmp.eq.s32.totalorder %s14, 1
    %p58 = por %p56, %p57
    %p60 = scmp.ne.s32.totalorder %s45, %s59
    %p61 = scmp.eq.s32.totalorder %s14, 0
    %p62 = por %p60, %p61
    %s63 = ssub.s32 %s8, %s15
    %p64 = scmp.eq.s32.totalorder %s63, 0
    %s66 = sadd.s32 %s65, 1
    %s67 = scalar_select %p64, %s65, %s66
    %p70 = pneg %p64
    %p71 = scmp.eq.s32.totalorder %s8, 1
    %p72 = por %p70, %p71
    %p73 = scmp.ne.s32.totalorder %s65, %s68
    %p74 = scmp.eq.s32.totalorder %s8, 0
    %p75 = por %p73, %p74
    %p76 = scmp.ne.s32.totalorder %s65, %s68
    %p77 = scmp.eq.s32.totalorder %s13, 1
    %p78 = por %p76, %p77
    %p79 = scmp.ne.s32.totalorder %s68, %s69
    %p80 = scmp.eq.s32.totalorder %s13, 0
    %p81 = por %p79, %p80
    %p82 = scmp.ne.s32.totalorder %s68, %s69
    %p83 = scmp.eq.s32.totalorder %s14, 1
    %p84 = por %p82, %p83
    %p86 = scmp.ne.s32.totalorder %s69, %s85
    %p87 = scmp.eq.s32.totalorder %s14, 0
    %p88 = por %p86, %p87
    %p89 = scmp.le.s32.totalorder 1, %s8
    %p90 = scmp.lt.s32.totalorder %s8, 3
    %p91 = pnand %p89, %p90
    %p92 = pneg %p91
    // Predicated region
    $region9: #{decoder_forward.5} parent=5 // pred_check
      _
    $region10: #{decoder_forward.5} parent=5 // pred_check_branch
      %94 = sbr.rel (%p91) target = $region12
    $region11: #{decoder_forward.5} parent=5 // pred_region
      %s95 = ssub.s32 %s8, 1
      // Predicated region
      $region13: #{decoder_forward.5} parent=11 // pred_check
        %p96 = pneg %p55
      $region14: #{decoder_forward.5} parent=11 // pred_check_branch
        %98 = sbr.rel (%p96) target = $region16
      $region15: #{decoder_forward.5} parent=11 // pred_region
        _
      $region16: #{decoder_forward.5} parent=11 // pred_fallthru
        _
    $region12: #{decoder_forward.5} parent=5 // pred_fallthru
      _
    %p99 = scmp.lt.s32.totalorder %s8, 2
    // Predicated region
    $region17: #{decoder_forward.5} parent=5 // pred_check
      %p100 = pneg %p99
    $region18: #{decoder_forward.5} parent=5 // pred_check_branch
      %102 = sbr.rel (%p100) target = $region20
    $region19: #{decoder_forward.5} parent=5 // pred_region
      // Predicated region
      $region21: #{decoder_forward.5} parent=19 // pred_check
        %p103 = pneg %p28
      $region22: #{decoder_forward.5} parent=19 // pred_check_branch
        %105 = sbr.rel (%p103) target = $region24
      $region23: #{decoder_forward.5} parent=19 // pred_region
        %p106 = scmp.lt.s32.totalorder %s8, 1
        %s107 = scalar_select %p106, %s8, 1
        %s108 = smul.addr %s107, 10
        %s109 = smul.addr %s108, 4
        %s110 = scalar_lea.vmem %s0, %s109
      $region24: #{decoder_forward.5} parent=19 // pred_fallthru
        _
    $region20: #{decoder_forward.5} parent=5 // pred_fallthru
      _
    %p111 = scmp.le.s32.totalorder 1, %s8
    %p112 = scmp.lt.s32.totalorder %s8, 3
    %p113 = pnand %p111, %p112
    %p114 = pneg %p113
    // Predicated region
    $region25: #{decoder_forward.5} parent=5 // pred_check
      _
    $region26: #{decoder_forward.5} parent=5 // pred_check_branch
      %116 = sbr.rel (%p113) target = $region28
    $region27: #{decoder_forward.5} parent=5 // pred_region
      %s117 = ssub.s32 %s8, 1
      %p118 = scmp.lt.s32.totalorder %s13, 1
      %s119 = scalar_select %p118, %s13, 1
      %s120 = smul.addr %s119, 10
      %s121 = smul.addr %s120, 4
      %s122 = scalar_lea.vmem %s0, %s121
      %p123 = pneg %p34
      %p124 = pneg %p31
      %p125 = pneg %p55
      %p126 = pneg %p52
      %p127 = pneg %p81
      %p128 = pneg %p78
      %p129 = scmp.lt.s32.totalorder %s13, 1
      %s130 = scalar_select %p129, %s13, 1
      %s131 = smul.addr %s130, 8
      %s132 = smul.addr %s131, 8
      %s133 = scalar_lea.vmem %s2, %s132
      %p134 = scmp.lt.s32.totalorder %s13, 1
      %s135 = scalar_select %p134, %s13, 1
      %s136 = smul.addr %s135, 10
      %s137 = smul.addr %s136, 4
      %s138 = scalar_lea.vmem %s0, %s137
      %p139 = scmp.lt.s32.totalorder %s13, 1
      %s140 = scalar_select %p139, %s13, 1
      %s141 = smul.addr %s140, 8
      %s142 = smul.addr %s141, 8
      %s143 = scalar_lea.vmem %s2, %s142
      %v145 = vld [vmem:[%s1] sm:$0xf]
      %v146 = vld [vmem:[%s1 + $0x4] sm:$0xf]
      %v147 = vld [vmem:[%s1 + $0x8] sm:$0xf]
      %v148 = vld [vmem:[%s1 + $0xc] sm:$0xf]
      %v149 = vld [vmem:[%s138] sm:$0xff]
      %v150 = vld [vmem:[%s138 + $0x8] sm:$0xff]
      %v151 = vld [vmem:[%s138 + $0x10] sm:$0xff]
      %v152 = vld [vmem:[%s138 + $0x18] sm:$0xff]
      %v153 = vld [vmem:[%s138 + $0x20] sm:$0x77]
      %v158 = vunpack.c.l.b16 %v145
      %v159 = vunpack.c.l.b16 %v146
      %v160 = vunpack.c.l.b16 %v147
      %v161 = vunpack.c.l.b16 %v148
      %v162 = vpack.c.b16 %v159, %v158
      %v163 = vpack.c.b16 %v161, %v160
      %v169 = vunpack.c.l.b16 %v149
      %v170 = vunpack.c.h.b16 %v149
      %v171 = vunpack.c.l.b16 %v150
      %v172 = vunpack.c.h.b16 %v150
      %v173 = vunpack.c.l.b16 %v151
      %v174 = vunpack.c.h.b16 %v151
      %v175 = vunpack.c.l.b16 %v152
      %v176 = vunpack.c.h.b16 %v152
      %v177 = vunpack.c.l.b16 %v153
      %v178 = vunpack.c.h.b16 %v153
      %v179 = vpack.c.b16 %v171, %v169
      %v180 = vpack.c.b16 %v172, %v170
      %v181 = vpack.c.b16 %v175, %v173
      %v182 = vpack.c.b16 %v176, %v174
      %v183 = vpack.c.b16 %v177, %v177
      %v184 = vpack.c.b16 %v178, %v178
      %vm189 = vcmask 302080
      %v191 = vsel %vm189, %v162, 0
      %v194 = vsel %vm189, %v163, 0
      %vm196 = vcmask 1041408
      %vm197 = vcmask 1042432
      %v198 = vsel %vm196, 4294967295, 65535
      %v199 = vsel %vm197, %v198, 0
      %v201 = vand.u32 %v183, %v199
      %v204 = vand.u32 %v184, %v199
      %206 = vmatprep.subr.bf16.mxu0 %v180
      %207 = vmatpush1.bf16.msra.mxu0 %v179
      %208 = vmatprep.subr.bf16.mxu0 %v182
      %209 = vmatpush1.bf16.msra.mxu0 %v181
      %210 = vmatprep.subr.bf16.mxu0 %v204
      %211 = vmatpush1.bf16.msra.mxu0 %v201
      %212 = vmatprep.subr.bf16.mxu0 0
      %213 = vmatpush1.bf16.msra.mxu0 0
      %214 = vmatprep.subr.bf16.mxu0 0
      %215 = vmatpush1.bf16.msra.mxu0 0
      %216 = vmatprep.subr.bf16.mxu0 0
      %217 = vmatpush1.bf16.msra.mxu0 0
      %218 = vmatprep.subr.bf16.mxu0 0
      %219 = vmatpush1.bf16.msra.mxu0 0
      %220 = vmatprep.subr.bf16.mxu0 0
      %221 = vmatpush1.bf16.msra.mxu0 0
      %222 = vmatprep.subr.bf16.mxu0 0
      %223 = vmatpush1.bf16.msra.mxu0 0
      %224 = vmatprep.subr.bf16.mxu0 0
      %225 = vmatpush1.bf16.msra.mxu0 0
      %226 = vmatprep.subr.bf16.mxu0 0
      %227 = vmatpush1.bf16.msra.mxu0 0
      %228 = vmatprep.subr.bf16.mxu0 0
      %229 = vmatpush1.bf16.msra.mxu0 0
      %230 = vmatprep.subr.bf16.mxu0 0
      %231 = vmatpush1.bf16.msra.mxu0 0
      %232 = vmatprep.subr.bf16.mxu0 0
      %233 = vmatpush1.bf16.msra.mxu0 0
      %234 = vmatprep.subr.bf16.mxu0 0
      %235 = vmatpush1.bf16.msra.mxu0 0
      %236 = vmatprep.subr.bf16.mxu0 0
      %237 = vmatpush1.bf16.msra.mxu0 0
      %238 = vmatprep.mubr.bf16.mxu0 0
      %239 = vmatmul.mubr.bf16.gmra.mrb[0].mxu0 %v191
      %v240 = vpop.f32.mrb[0].mxu0
      %v241 = vadd.f32 0.0, %v240
      %v242 = vpop.f32.mrb[0].mxu0
      %v243 = vadd.f32 0.0, %v242
      %v244 = vpop.f32.mrb[0].mxu0
      %v245 = vadd.f32 0.0, %v244
      %v246 = vpop.f32.mrb[0].mxu0
      %v247 = vadd.f32 0.0, %v246
      %248 = vmatprep.mubr.bf16.mxu0 0
      %249 = vmatmul.mubr.bf16.gmra.mrb[0].mxu0 %v194
      %v250 = vpop.f32.mrb[0].mxu0
      %v251 = vadd.f32 0.0, %v250
      %v252 = vpop.f32.mrb[0].mxu0
      %v253 = vadd.f32 0.0, %v252
      %v254 = vpop.f32.mrb[0].mxu0
      %v255 = vadd.f32 0.0, %v254
      %v256 = vpop.f32.mrb[0].mxu0
      %v257 = vadd.f32 0.0, %v256
      %258 = vdwg.mxu0
      %259 = vst [vmem:[%s143] sm:$0xff] %v241
      %260 = vst [vmem:[%s143 + $0x8] sm:$0xff] %v243
      %261 = vst [vmem:[%s143 + $0x10] sm:$0xff] %v245
      %262 = vst [vmem:[%s143 + $0x18] sm:$0xff] %v247
      %263 = vst [vmem:[%s143 + $0x20] sm:$0xff] %v251
      %264 = vst [vmem:[%s143 + $0x28] sm:$0xff] %v253
      %265 = vst [vmem:[%s143 + $0x30] sm:$0xff] %v255
      %266 = vst [vmem:[%s143 + $0x38] sm:$0xff] %v257
      %p267 = scmp.lt.s32.totalorder %s13, 1
      %s268 = scalar_select %p267, %s13, 1
      %s269 = smul.addr %s268, 8
      %s270 = smul.addr %s269, 8
      %s271 = scalar_lea.vmem %s2, %s270
      // Predicated region
      $region29: #{decoder_forward.5} parent=27 // pred_check
        %p272 = pneg %p78
      $region30: #{decoder_forward.5} parent=27 // pred_check_branch
        %274 = sbr.rel (%p272) target = $region32
      $region31: #{decoder_forward.5} parent=27 // pred_region
        _
      $region32: #{decoder_forward.5} parent=27 // pred_fallthru
        _
    $region28: #{decoder_forward.5} parent=5 // pred_fallthru
      _
    %p275 = scmp.le.s32.totalorder 2, %s8
    // Predicated region
    $region33: #{decoder_forward.5} parent=5 // pred_check
      %p276 = pneg %p275
    $region34: #{decoder_forward.5} parent=5 // pred_check_branch
      %278 = sbr.rel (%p276) target = $region36
    $region35: #{decoder_forward.5} parent=5 // pred_region
      %s279 = ssub.s32 %s8, 2
      // Predicated region
      $region37: #{decoder_forward.5} parent=35 // pred_check
        %p280 = pneg %p84
      $region38: #{decoder_forward.5} parent=35 // pred_check_branch
        %282 = sbr.rel (%p280) target = $region40
      $region39: #{decoder_forward.5} parent=35 // pred_region
        %p283 = scmp.lt.s32.totalorder %s14, 1
        %s284 = scalar_select %p283, %s14, 1
        %s285 = smul.addr %s284, 8
        %s286 = smul.addr %s285, 8
        %s287 = scalar_lea.vmem %s2, %s286
      $region40: #{decoder_forward.5} parent=35 // pred_fallthru
        _
    $region36: #{decoder_forward.5} parent=5 // pred_fallthru
      _
  $region6: #{decoder_forward.5} parent=0 // loop_footer
    %s12 = sadd.s32 1, %s8
  $region7: #{decoder_forward.5} parent=0 // loop_footer_branch
    %7 = sbr.rel target = $region3
  $region8: #{decoder_forward.5} parent=0 // loop_exit
    _

// kernel: decoder_forward.7
$region0: #{decoder_forward.7}
  #allocation0 [shape = 'u32[]', space=smem, size = 0x4, offset = 0x4, fixed_abs, tag = 'smem constant byte address 0x4 - core index']
  #allocation1 [shape = 'u32[144,128]{1,0:T(1,128)}', space=vmem, size = 0x12000, scoped, tag = 'internal scratch']
  %s0 = inlined_call_operand.vmem [shape: bf16[2,82,256], index: 0, kind: input, shape index: {}]
  %s1 = inlined_call_operand.vmem [shape: bf16[24,82], index: 1, kind: input, shape index: {}]
  %s2 = inlined_call_operand.vmem [shape: f32[2,24,256], index: 2, kind: output, shape index: {}]
  %s3 = sld [smem:[#allocation0]]
  $region41: #{decoder_forward.7} parent=0
    _
  %s5 = ssub.s32 1, %s3
  %s6 = scalar_select 0, %s5, %s3
  loop: start=0, step=1, limit=4
  $region2: #{decoder_forward.7} parent=0 // loop_pre_header
    _
  $region3: #{decoder_forward.7} parent=0 // loop_header
    %s8 = sphi 0, %s12
    %p9 = scmp.ge.s32.totalorder %s8, 4
    %s18 = sphi 0, %s20
    %s21 = sphi 0, %s18
    %s22 = sphi 0, %s21
    %s38 = sphi 0, %s22
    %s42 = sphi 0, %s42
    %s44 = sphi 0, %s42
    %s45 = sphi 0, %s44
    %s59 = sphi 0, %s45
    %s65 = sphi 0, %s67
    %s68 = sphi 0, %s65
    %s69 = sphi 0, %s68
    %s85 = sphi 0, %s69
  $region4: #{decoder_forward.7} parent=0 // loop_header_branch
    %11 = sbr.rel (%p9) target = $region8
  $region5: #{decoder_forward.7} parent=0 // loop_body
    %s13 = ssub.s32 %s8, 1
    %s14 = ssub.s32 %s8, 2
    %s15 = sadd.s32 %s8, 1
    %s16 = ssub.s32 %s8, %s15
    %p17 = scmp.eq.s32.totalorder %s16, 0
    %s19 = sadd.s32 %s18, 1
    %s20 = scalar_select %p17, %s18, %s19
    %p23 = pneg %p17
    %p24 = scmp.eq.s32.totalorder %s8, 1
    %p25 = por %p23, %p24
    %p26 = scmp.ne.s32.totalorder %s18, %s21
    %p27 = scmp.eq.s32.totalorder %s8, 0
    %p28 = por %p26, %p27
    %p29 = scmp.ne.s32.totalorder %s18, %s21
    %p30 = scmp.eq.s32.totalorder %s13, 1
    %p31 = por %p29, %p30
    %p32 = scmp.ne.s32.totalorder %s21, %s22
    %p33 = scmp.eq.s32.totalorder %s13, 0
    %p34 = por %p32, %p33
    %p35 = scmp.ne.s32.totalorder %s21, %s22
    %p36 = scmp.eq.s32.totalorder %s14, 1
    %p37 = por %p35, %p36
    %p39 = scmp.ne.s32.totalorder %s22, %s38
    %p40 = scmp.eq.s32.totalorder %s14, 0
    %p41 = por %p39, %p40
    %s43 = sadd.s32 %s42, 1
    %p46 = scmp.eq.s32.totalorder %s8, 1
    %p47 = scmp.ne.s32.totalorder %s42, %s44
    %p48 = scmp.eq.s32.totalorder %s8, 0
    %p49 = por %p47, %p48
    %p50 = scmp.ne.s32.totalorder %s42, %s44
    %p51 = scmp.eq.s32.totalorder %s13, 1
    %p52 = por %p50, %p51
    %p53 = scmp.ne.s32.totalorder %s44, %s45
    %p54 = scmp.eq.s32.totalorder %s13, 0
    %p55 = por %p53, %p54
    %p56 = scmp.ne.s32.totalorder %s44, %s45
    %p57 = scmp.eq.s32.totalorder %s14, 1
    %p58 = por %p56, %p57
    %p60 = scmp.ne.s32.totalorder %s45, %s59
    %p61 = scmp.eq.s32.totalorder %s14, 0
    %p62 = por %p60, %p61
    %s63 = ssub.s32 %s8, %s15
    %p64 = scmp.eq.s32.totalorder %s63, 0
    %s66 = sadd.s32 %s65, 1
    %s67 = scalar_select %p64, %s65, %s66
    %p70 = pneg %p64
    %p71 = scmp.eq.s32.totalorder %s8, 1
    %p72 = por %p70, %p71
    %p73 = scmp.ne.s32.totalorder %s65, %s68
    %p74 = scmp.eq.s32.totalorder %s8, 0
    %p75 = por %p73, %p74
    %p76 = scmp.ne.s32.totalorder %s65, %s68
    %p77 = scmp.eq.s32.totalorder %s13, 1
    %p78 = por %p76, %p77
    %p79 = scmp.ne.s32.totalorder %s68, %s69
    %p80 = scmp.eq.s32.totalorder %s13, 0
    %p81 = por %p79, %p80
    %p82 = scmp.ne.s32.totalorder %s68, %s69
    %p83 = scmp.eq.s32.totalorder %s14, 1
    %p84 = por %p82, %p83
    %p86 = scmp.ne.s32.totalorder %s69, %s85
    %p87 = scmp.eq.s32.totalorder %s14, 0
    %p88 = por %p86, %p87
    %p89 = scmp.le.s32.totalorder 1, %s8
    %p90 = scmp.lt.s32.totalorder %s8, 3
    %p91 = pnand %p89, %p90
    %p92 = pneg %p91
    // Predicated region
    $region9: #{decoder_forward.7} parent=5 // pred_check
      _
    $region10: #{decoder_forward.7} parent=5 // pred_check_branch
      %94 = sbr.rel (%p91) target = $region12
    $region11: #{decoder_forward.7} parent=5 // pred_region
      %s95 = ssub.s32 %s8, 1
      // Predicated region
      $region13: #{decoder_forward.7} parent=11 // pred_check
        %p96 = pneg %p55
      $region14: #{decoder_forward.7} parent=11 // pred_check_branch
        %98 = sbr.rel (%p96) target = $region16
      $region15: #{decoder_forward.7} parent=11 // pred_region
        _
      $region16: #{decoder_forward.7} parent=11 // pred_fallthru
        _
    $region12: #{decoder_forward.7} parent=5 // pred_fallthru
      _
    %p99 = scmp.lt.s32.totalorder %s8, 2
    // Predicated region
    $region17: #{decoder_forward.7} parent=5 // pred_check
      %p100 = pneg %p99
    $region18: #{decoder_forward.7} parent=5 // pred_check_branch
      %102 = sbr.rel (%p100) target = $region20
    $region19: #{decoder_forward.7} parent=5 // pred_region
      // Predicated region
      $region21: #{decoder_forward.7} parent=19 // pred_check
        %p103 = pneg %p28
      $region22: #{decoder_forward.7} parent=19 // pred_check_branch
        %105 = sbr.rel (%p103) target = $region24
      $region23: #{decoder_forward.7} parent=19 // pred_region
        %p106 = scmp.lt.s32.totalorder %s8, 1
        %s107 = scalar_select %p106, %s8, 1
        %s108 = smul.addr %s107, 22
        %s109 = smul.addr %s108, 4
        %s110 = scalar_lea.vmem %s0, %s109
      $region24: #{decoder_forward.7} parent=19 // pred_fallthru
        _
    $region20: #{decoder_forward.7} parent=5 // pred_fallthru
      _
    %p111 = scmp.le.s32.totalorder 1, %s8
    %p112 = scmp.lt.s32.totalorder %s8, 3
    %p113 = pnand %p111, %p112
    %p114 = pneg %p113
    // Predicated region
    $region25: #{decoder_forward.7} parent=5 // pred_check
      _
    $region26: #{decoder_forward.7} parent=5 // pred_check_branch
      %116 = sbr.rel (%p113) target = $region28
    $region27: #{decoder_forward.7} parent=5 // pred_region
      %s117 = ssub.s32 %s8, 1
      %p118 = scmp.lt.s32.totalorder %s13, 1
      %s119 = scalar_select %p118, %s13, 1
      %s120 = smul.addr %s119, 22
      %s121 = smul.addr %s120, 4
      %s122 = scalar_lea.vmem %s0, %s121
      %p123 = pneg %p34
      %p124 = pneg %p31
      %p125 = pneg %p55
      %p126 = pneg %p52
      %p127 = pneg %p81
      %p128 = pneg %p78
      %p129 = scmp.lt.s32.totalorder %s13, 1
      %s130 = scalar_select %p129, %s13, 1
      %s131 = smul.addr %s130, 6
      %s132 = smul.addr %s131, 8
      %s133 = scalar_lea.vmem %s2, %s132
      %p134 = scmp.lt.s32.totalorder %s13, 1
      %s135 = scalar_select %p134, %s13, 1
      %s136 = smul.addr %s135, 22
      %s137 = smul.addr %s136, 4
      %s138 = scalar_lea.vmem %s0, %s137
      %p139 = scmp.lt.s32.totalorder %s13, 1
      %s140 = scalar_select %p139, %s13, 1
      %s141 = smul.addr %s140, 6
      %s142 = smul.addr %s141, 8
      %s143 = scalar_lea.vmem %s2, %s142
      %v145 = vld [vmem:[%s1] sm:$0xf]
      %v146 = vld [vmem:[%s1 + $0x4] sm:$0xf]
      %v147 = vld [vmem:[%s1 + $0x8] sm:$0xf]
      %v148 = vld [vmem:[%s138] sm:$0xff]
      %v149 = vld [vmem:[%s138 + $0x8] sm:$0xff]
      %v150 = vld [vmem:[%s138 + $0x10] sm:$0xff]
      %v151 = vld [vmem:[%s138 + $0x18] sm:$0xff]
      %v152 = vld [vmem:[%s138 + $0x20] sm:$0xff]
      %v153 = vld [vmem:[%s138 + $0x28] sm:$0xff]
      %v154 = vld [vmem:[%s138 + $0x30] sm:$0xff]
      %v155 = vld [vmem:[%s138 + $0x38] sm:$0xff]
      %v156 = vld [vmem:[%s138 + $0x40] sm:$0xff]
      %v157 = vld [vmem:[%s138 + $0x48] sm:$0xff]
      %v158 = vld [vmem:[%s138 + $0x50] sm:$0x11]
      %v162 = vunpack.c.l.b16 %v145
      %v163 = vunpack.c.l.b16 %v146
      %v164 = vunpack.c.l.b16 %v147
      %v165 = vpack.c.b16 %v163, %v162
      %v166 = vpack.c.b16 %v164, %v164
      %v178 = vunpack.c.l.b16 %v148
      %v179 = vunpack.c.h.b16 %v148
      %v180 = vunpack.c.l.b16 %v149
      %v181 = vunpack.c.h.b16 %v149
      %v182 = vunpack.c.l.b16 %v150
      %v183 = vunpack.c.h.b16 %v150
      %v184 = vunpack.c.l.b16 %v151
      %v185 = vunpack.c.h.b16 %v151
      %v186 = vunpack.c.l.b16 %v152
      %v187 = vunpack.c.h.b16 %v152
      %v188 = vunpack.c.l.b16 %v153
      %v189 = vunpack.c.h.b16 %v153
      %v190 = vunpack.c.l.b16 %v154
      %v191 = vunpack.c.h.b16 %v154
      %v192 = vunpack.c.l.b16 %v155
      %v193 = vunpack.c.h.b16 %v155
      %v194 = vunpack.c.l.b16 %v156
      %v195 = vunpack.c.h.b16 %v156
      %v196 = vunpack.c.l.b16 %v157
      %v197 = vunpack.c.h.b16 %v157
      %v198 = vunpack.c.l.b16 %v158
      %v199 = vunpack.c.h.b16 %v158
      %v200 = vpack.c.b16 %v180, %v178
      %v201 = vpack.c.b16 %v181, %v179
      %v202 = vpack.c.b16 %v184, %v182
      %v203 = vpack.c.b16 %v185, %v183
      %v204 = vpack.c.b16 %v188, %v186
      %v205 = vpack.c.b16 %v189, %v187
      %v206 = vpack.c.b16 %v192, %v190
      %v207 = vpack.c.b16 %v193, %v191
      %v208 = vpack.c.b16 %v196, %v194
      %v209 = vpack.c.b16 %v197, %v195
      %v210 = vpack.c.b16 %v198, %v198
      %v211 = vpack.c.b16 %v199, %v199
      %vm222 = vcmask 670720
      %v224 = vsel %vm222, %v165, 0
      %v227 = vsel %vm222, %v166, 0
      %vm229 = vcmask 1040384
      %v231 = vsel %vm229, %v210, 0
      %v234 = vsel %vm229, %v211, 0
      %236 = vmatprep.subr.bf16.mxu0 %v201
      %237 = vmatpush1.bf16.msra.mxu0 %v200
      %238 = vmatprep.subr.bf16.mxu0 %v203
      %239 = vmatpush1.bf16.msra.mxu0 %v202
      %240 = vmatprep.subr.bf16.mxu0 %v205
      %241 = vmatpush1.bf16.msra.mxu0 %v204
      %242 = vmatprep.subr.bf16.mxu0 %v207
      %243 = vmatpush1.bf16.msra.mxu0 %v206
      %244 = vmatprep.subr.bf16.mxu0 %v209
      %245 = vmatpush1.bf16.msra.mxu0 %v208
      %246 = vmatprep.subr.bf16.mxu0 %v234
      %247 = vmatpush1.bf16.msra.mxu0 %v231
      %248 = vmatprep.subr.bf16.mxu0 0
      %249 = vmatpush1.bf16.msra.mxu0 0
      %250 = vmatprep.subr.bf16.mxu0 0
      %251 = vmatpush1.bf16.msra.mxu0 0
      %252 = vmatprep.subr.bf16.mxu0 0
      %253 = vmatpush1.bf16.msra.mxu0 0
      %254 = vmatprep.subr.bf16.mxu0 0
      %255 = vmatpush1.bf16.msra.mxu0 0
      %256 = vmatprep.subr.bf16.mxu0 0
      %257 = vmatpush1.bf16.msra.mxu0 0
      %258 = vmatprep.subr.bf16.mxu0 0
      %259 = vmatpush1.bf16.msra.mxu0 0
      %260 = vmatprep.subr.bf16.mxu0 0
      %261 = vmatpush1.bf16.msra.mxu0 0
      %262 = vmatprep.subr.bf16.mxu0 0
      %263 = vmatpush1.bf16.msra.mxu0 0
      %264 = vmatprep.subr.bf16.mxu0 0
      %265 = vmatpush1.bf16.msra.mxu0 0
      %266 = vmatprep.subr.bf16.mxu0 0
      %267 = vmatpush1.bf16.msra.mxu0 0
      %268 = vmatprep.mubr.bf16.mxu0 0
      %269 = vmatmul.mubr.bf16.gmra.mrb[0].mxu0 %v224
      %v270 = vpop.f32.mrb[0].mxu0
      %v271 = vadd.f32 0.0, %v270
      %v272 = vpop.f32.mrb[0].mxu0
      %v273 = vadd.f32 0.0, %v272
      %v274 = vpop.f32.mrb[0].mxu0
      %v275 = vadd.f32 0.0, %v274
      %v276 = vpop.f32.mrb[0].mxu0
      %v277 = vadd.f32 0.0, %v276
      %278 = vmatprep.mubr.bf16.mxu0 0
      %279 = vmatmul.mubr.bf16.gmra.mrb[0].mxu0 %v227
      %v280 = vpop.f32.mrb[0].mxu0
      %v281 = vadd.f32 0.0, %v280
      %v282 = vpop.f32.mrb[0].mxu0
      %v283 = vadd.f32 0.0, %v282
      %v284 = vpop.f32.mrb[0].mxu0
      %v285 = vpop.f32.mrb[0].mxu0
      %286 = vdwg.mxu0
      %287 = vst [vmem:[%s143] sm:$0xff] %v271
      %288 = vst [vmem:[%s143 + $0x8] sm:$0xff] %v273
      %289 = vst [vmem:[%s143 + $0x10] sm:$0xff] %v275
      %290 = vst [vmem:[%s143 + $0x18] sm:$0xff] %v277
      %291 = vst [vmem:[%s143 + $0x20] sm:$0xff] %v281
      %292 = vst [vmem:[%s143 + $0x28] sm:$0xff] %v283
      %p293 = scmp.lt.s32.totalorder %s13, 1
      %s294 = scalar_select %p293, %s13, 1
      %s295 = smul.addr %s294, 6
      %s296 = smul.addr %s295, 8
      %s297 = scalar_lea.vmem %s2, %s296
      // Predicated region
      $region29: #{decoder_forward.7} parent=27 // pred_check
        %p298 = pneg %p78
      $region30: #{decoder_forward.7} parent=27 // pred_check_branch
        %300 = sbr.rel (%p298) target = $region32
      $region31: #{decoder_forward.7} parent=27 // pred_region
        _
      $region32: #{decoder_forward.7} parent=27 // pred_fallthru
        _
    $region28: #{decoder_forward.7} parent=5 // pred_fallthru
      _
    %p301 = scmp.le.s32.totalorder 2, %s8
    // Predicated region
    $region33: #{decoder_forward.7} parent=5 // pred_check
      %p302 = pneg %p301
    $region34: #{decoder_forward.7} parent=5 // pred_check_branch
      %304 = sbr.rel (%p302) target = $region36
    $region35: #{decoder_forward.7} parent=5 // pred_region
      %s305 = ssub.s32 %s8, 2
      // Predicated region
      $region37: #{decoder_forward.7} parent=35 // pred_check
        %p306 = pneg %p84
      $region38: #{decoder_forward.7} parent=35 // pred_check_branch
        %308 = sbr.rel (%p306) target = $region40
      $region39: #{decoder_forward.7} parent=35 // pred_region
        %p309 = scmp.lt.s32.totalorder %s14, 1
        %s310 = scalar_select %p309, %s14, 1
        %s311 = smul.addr %s310, 6
        %s312 = smul.addr %s311, 8
        %s313 = scalar_lea.vmem %s2, %s312
      $region40: #{decoder_forward.7} parent=35 // pred_fallthru
        _
    $region36: #{decoder_forward.7} parent=5 // pred_fallthru
      _
  $region6: #{decoder_forward.7} parent=0 // loop_footer
    %s12 = sadd.s32 1, %s8
  $region7: #{decoder_forward.7} parent=0 // loop_footer_branch
    %7 = sbr.rel target = $region3
  $region8: #{decoder_forward.7} parent=0 // loop_exit
    _

// kernel: decoder_forward.6
$region0: #{decoder_forward.6}
  #allocation0 [shape = 'u32[]', space=smem, size = 0x4, offset = 0x4, fixed_abs, tag = 'smem constant byte address 0x4 - core index']
  #allocation1 [shape = 'u32[144,128]{1,0:T(1,128)}', space=vmem, size = 0x12000, scoped, tag = 'internal scratch']
  %s0 = inlined_call_operand.vmem [shape: f32[2,24,16,16], index: 0, kind: input, shape index: {}]
  %s1 = inlined_call_operand.vmem [shape: f32[2,8,16,16], index: 1, kind: input, shape index: {}]
  %s2 = inlined_call_operand.vmem [shape: f32[2,8,16,16], index: 2, kind: input, shape index: {}]
  %s3 = inlined_call_operand.vmem [shape: f32[8,16,16], index: 3, kind: input, shape index: {}]
  %s4 = inlined_call_operand.vmem [shape: f32[8,16,16], index: 4, kind: input, shape index: {}]
  %s5 = inlined_call_operand.vmem [shape: f32[2,8,16,16], index: 5, kind: output, shape index: {}]
  %s6 = sld [smem:[#allocation0]]
  $region53: #{decoder_forward.6} parent=0
    _
  %s8 = ssub.s32 1, %s6
  %s9 = scalar_select 0, %s8, %s6
  loop: start=0, step=1, limit=4
  $region2: #{decoder_forward.6} parent=0 // loop_pre_header
    _
  $region3: #{decoder_forward.6} parent=0 // loop_header
    %s11 = sphi 0, %s15
    %p12 = scmp.ge.s32.totalorder %s11, 4
    %s21 = sphi 0, %s23
    %s24 = sphi 0, %s21
    %s25 = sphi 0, %s24
    %s41 = sphi 0, %s25
    %s47 = sphi 0, %s49
    %s50 = sphi 0, %s47
    %s51 = sphi 0, %s50
    %s67 = sphi 0, %s51
    %s73 = sphi 0, %s75
    %s76 = sphi 0, %s73
    %s77 = sphi 0, %s76
    %s93 = sphi 0, %s77
    %s97 = sphi 0, %s97
    %s99 = sphi 0, %s97
    %s100 = sphi 0, %s99
    %s114 = sphi 0, %s100
    %s118 = sphi 0, %s118
    %s120 = sphi 0, %s118
    %s121 = sphi 0, %s120
    %s135 = sphi 0, %s121
    %s141 = sphi 0, %s143
    %s144 = sphi 0, %s141
    %s145 = sphi 0, %s144
    %s161 = sphi 0, %s145
  $region4: #{decoder_forward.6} parent=0 // loop_header_branch
    %14 = sbr.rel (%p12) target = $region8
  $region5: #{decoder_forward.6} parent=0 // loop_body
    %s16 = ssub.s32 %s11, 1
    %s17 = ssub.s32 %s11, 2
    %s18 = sadd.s32 %s11, 1
    %s19 = ssub.s32 %s11, %s18
    %p20 = scmp.eq.s32.totalorder %s19, 0
    %s22 = sadd.s32 %s21, 1
    %s23 = scalar_select %p20, %s21, %s22
    %p26 = pneg %p20
    %p27 = scmp.eq.s32.totalorder %s11, 1
    %p28 = por %p26, %p27
    %p29 = scmp.ne.s32.totalorder %s21, %s24
    %p30 = scmp.eq.s32.totalorder %s11, 0
    %p31 = por %p29, %p30
    %p32 = scmp.ne.s32.totalorder %s21, %s24
    %p33 = scmp.eq.s32.totalorder %s16, 1
    %p34 = por %p32, %p33
    %p35 = scmp.ne.s32.totalorder %s24, %s25
    %p36 = scmp.eq.s32.totalorder %s16, 0
    %p37 = por %p35, %p36
    %p38 = scmp.ne.s32.totalorder %s24, %s25
    %p39 = scmp.eq.s32.totalorder %s17, 1
    %p40 = por %p38, %p39
    %p42 = scmp.ne.s32.totalorder %s25, %s41
    %p43 = scmp.eq.s32.totalorder %s17, 0
    %p44 = por %p42, %p43
    %s45 = ssub.s32 %s11, %s18
    %p46 = scmp.eq.s32.totalorder %s45, 0
    %s48 = sadd.s32 %s47, 1
    %s49 = scalar_select %p46, %s47, %s48
    %p52 = pneg %p46
    %p53 = scmp.eq.s32.totalorder %s11, 1
    %p54 = por %p52, %p53
    %p55 = scmp.ne.s32.totalorder %s47, %s50
    %p56 = scmp.eq.s32.totalorder %s11, 0
    %p57 = por %p55, %p56
    %p58 = scmp.ne.s32.totalorder %s47, %s50
    %p59 = scmp.eq.s32.totalorder %s16, 1
    %p60 = por %p58, %p59
    %p61 = scmp.ne.s32.totalorder %s50, %s51
    %p62 = scmp.eq.s32.totalorder %s16, 0
    %p63 = por %p61, %p62
    %p64 = scmp.ne.s32.totalorder %s50, %s51
    %p65 = scmp.eq.s32.totalorder %s17, 1
    %p66 = por %p64, %p65
    %p68 = scmp.ne.s32.totalorder %s51, %s67
    %p69 = scmp.eq.s32.totalorder %s17, 0
    %p70 = por %p68, %p69
    %s71 = ssub.s32 %s11, %s18
    %p72 = scmp.eq.s32.totalorder %s71, 0
    %s74 = sadd.s32 %s73, 1
    %s75 = scalar_select %p72, %s73, %s74
    %p78 = pneg %p72
    %p79 = scmp.eq.s32.totalorder %s11, 1
    %p80 = por %p78, %p79
    %p81 = scmp.ne.s32.totalorder %s73, %s76
    %p82 = scmp.eq.s32.totalorder %s11, 0
    %p83 = por %p81, %p82
    %p84 = scmp.ne.s32.totalorder %s73, %s76
    %p85 = scmp.eq.s32.totalorder %s16, 1
    %p86 = por %p84, %p85
    %p87 = scmp.ne.s32.totalorder %s76, %s77
    %p88 = scmp.eq.s32.totalorder %s16, 0
    %p89 = por %p87, %p88
    %p90 = scmp.ne.s32.totalorder %s76, %s77
    %p91 = scmp.eq.s32.totalorder %s17, 1
    %p92 = por %p90, %p91
    %p94 = scmp.ne.s32.totalorder %s77, %s93
    %p95 = scmp.eq.s32.totalorder %s17, 0
    %p96 = por %p94, %p95
    %s98 = sadd.s32 %s97, 1
    %p101 = scmp.eq.s32.totalorder %s11, 1
    %p102 = scmp.ne.s32.totalorder %s97, %s99
    %p103 = scmp.eq.s32.totalorder %s11, 0
    %p104 = por %p102, %p103
    %p105 = scmp.ne.s32.totalorder %s97, %s99
    %p106 = scmp.eq.s32.totalorder %s16, 1
    %p107 = por %p105, %p106
    %p108 = scmp.ne.s32.totalorder %s99, %s100
    %p109 = scmp.eq.s32.totalorder %s16, 0
    %p110 = por %p108, %p109
    %p111 = scmp.ne.s32.totalorder %s99, %s100
    %p112 = scmp.eq.s32.totalorder %s17, 1
    %p113 = por %p111, %p112
    %p115 = scmp.ne.s32.totalorder %s100, %s114
    %p116 = scmp.eq.s32.totalorder %s17, 0
    %p117 = por %p115, %p116
    %s119 = sadd.s32 %s118, 1
    %p122 = scmp.eq.s32.totalorder %s11, 1
    %p123 = scmp.ne.s32.totalorder %s118, %s120
    %p124 = scmp.eq.s32.totalorder %s11, 0
    %p125 = por %p123, %p124
    %p126 = scmp.ne.s32.totalorder %s118, %s120
    %p127 = scmp.eq.s32.totalorder %s16, 1
    %p128 = por %p126, %p127
    %p129 = scmp.ne.s32.totalorder %s120, %s121
    %p130 = scmp.eq.s32.totalorder %s16, 0
    %p131 = por %p129, %p130
    %p132 = scmp.ne.s32.totalorder %s120, %s121
    %p133 = scmp.eq.s32.totalorder %s17, 1
    %p134 = por %p132, %p133
    %p136 = scmp.ne.s32.totalorder %s121, %s135
    %p137 = scmp.eq.s32.totalorder %s17, 0
    %p138 = por %p136, %p137
    %s139 = ssub.s32 %s11, %s18
    %p140 = scmp.eq.s32.totalorder %s139, 0
    %s142 = sadd.s32 %s141, 1
    %s143 = scalar_select %p140, %s141, %s142
    %p146 = pneg %p140
    %p147 = scmp.eq.s32.totalorder %s11, 1
    %p148 = por %p146, %p147
    %p149 = scmp.ne.s32.totalorder %s141, %s144
    %p150 = scmp.eq.s32.totalorder %s11, 0
    %p151 = por %p149, %p150
    %p152 = scmp.ne.s32.totalorder %s141, %s144
    %p153 = scmp.eq.s32.totalorder %s16, 1
    %p154 = por %p152, %p153
    %p155 = scmp.ne.s32.totalorder %s144, %s145
    %p156 = scmp.eq.s32.totalorder %s16, 0
    %p157 = por %p155, %p156
    %p158 = scmp.ne.s32.totalorder %s144, %s145
    %p159 = scmp.eq.s32.totalorder %s17, 1
    %p160 = por %p158, %p159
    %p162 = scmp.ne.s32.totalorder %s145, %s161
    %p163 = scmp.eq.s32.totalorder %s17, 0
    %p164 = por %p162, %p163
    %p165 = scmp.le.s32.totalorder 1, %s11
    %p166 = scmp.lt.s32.totalorder %s11, 3
    %p167 = pnand %p165, %p166
    %p168 = pneg %p167
    // Predicated region
    $region9: #{decoder_forward.6} parent=5 // pred_check
      _
    $region10: #{decoder_forward.6} parent=5 // pred_check_branch
      %170 = sbr.rel (%p167) target = $region12
    $region11: #{decoder_forward.6} parent=5 // pred_region
      %s171 = ssub.s32 %s11, 1
      // Predicated region
      $region13: #{decoder_forward.6} parent=11 // pred_check
        %p172 = pneg %p110
      $region14: #{decoder_forward.6} parent=11 // pred_check_branch
        %174 = sbr.rel (%p172) target = $region16
      $region15: #{decoder_forward.6} parent=11 // pred_region
        _
      $region16: #{decoder_forward.6} parent=11 // pred_fallthru
        _
      // Predicated region
      $region17: #{decoder_forward.6} parent=11 // pred_check
        %p175 = pneg %p131
      $region18: #{decoder_forward.6} parent=11 // pred_check_branch
        %177 = sbr.rel (%p175) target = $region20
      $region19: #{decoder_forward.6} parent=11 // pred_region
        _
      $region20: #{decoder_forward.6} parent=11 // pred_fallthru
        _
    $region12: #{decoder_forward.6} parent=5 // pred_fallthru
      _
    %p178 = scmp.lt.s32.totalorder %s11, 2
    // Predicated region
    $region21: #{decoder_forward.6} parent=5 // pred_check
      %p179 = pneg %p178
    $region22: #{decoder_forward.6} parent=5 // pred_check_branch
      %181 = sbr.rel (%p179) target = $region24
    $region23: #{decoder_forward.6} parent=5 // pred_region
      // Predicated region
      $region25: #{decoder_forward.6} parent=23 // pred_check
        %p182 = pneg %p31
      $region26: #{decoder_forward.6} parent=23 // pred_check_branch
        %184 = sbr.rel (%p182) target = $region28
      $region27: #{decoder_forward.6} parent=23 // pred_region
        %p185 = scmp.lt.s32.totalorder %s11, 1
        %s186 = scalar_select %p185, %s11, 1
        %s187 = smul.addr %s186, 48
        %s188 = smul.addr %s187, 8
        %s189 = scalar_lea.vmem %s0, %s188
      $region28: #{decoder_forward.6} parent=23 // pred_fallthru
        _
      // Predicated region
      $region29: #{decoder_forward.6} parent=23 // pred_check
        %p190 = pneg %p57
      $region30: #{decoder_forward.6} parent=23 // pred_check_branch
        %192 = sbr.rel (%p190) target = $region32
      $region31: #{decoder_forward.6} parent=23 // pred_region
        %p193 = scmp.lt.s32.totalorder %s11, 1
        %s194 = scalar_select %p193, %s11, 1
        %s195 = smul.addr %s194, 16
        %s196 = smul.addr %s195, 8
        %s197 = scalar_lea.vmem %s1, %s196
      $region32: #{decoder_forward.6} parent=23 // pred_fallthru
        _
      // Predicated region
      $region33: #{decoder_forward.6} parent=23 // pred_check
        %p198 = pneg %p83
      $region34: #{decoder_forward.6} parent=23 // pred_check_branch
        %200 = sbr.rel (%p198) target = $region36
      $region35: #{decoder_forward.6} parent=23 // pred_region
        %p201 = scmp.lt.s32.totalorder %s11, 1
        %s202 = scalar_select %p201, %s11, 1
        %s203 = smul.addr %s202, 16
        %s204 = smul.addr %s203, 8
        %s205 = scalar_lea.vmem %s2, %s204
      $region36: #{decoder_forward.6} parent=23 // pred_fallthru
        _
    $region24: #{decoder_forward.6} parent=5 // pred_fallthru
      _
    %p206 = scmp.le.s32.totalorder 1, %s11
    %p207 = scmp.lt.s32.totalorder %s11, 3
    %p208 = pnand %p206, %p207
    %p209 = pneg %p208
    // Predicated region
    $region37: #{decoder_forward.6} parent=5 // pred_check
      _
    $region38: #{decoder_forward.6} parent=5 // pred_check_branch
      %211 = sbr.rel (%p208) target = $region40
    $region39: #{decoder_forward.6} parent=5 // pred_region
      %s212 = ssub.s32 %s11, 1
      %p213 = scmp.lt.s32.totalorder %s16, 1
      %s214 = scalar_select %p213, %s16, 1
      %s215 = smul.addr %s214, 48
      %s216 = smul.addr %s215, 8
      %s217 = scalar_lea.vmem %s0, %s216
      %p218 = pneg %p37
      %p219 = pneg %p34
      %p220 = scmp.lt.s32.totalorder %s16, 1
      %s221 = scalar_select %p220, %s16, 1
      %s222 = smul.addr %s221, 16
      %s223 = smul.addr %s222, 8
      %s224 = scalar_lea.vmem %s1, %s223
      %p225 = pneg %p63
      %p226 = pneg %p60
      %p227 = scmp.lt.s32.totalorder %s16, 1
      %s228 = scalar_select %p227, %s16, 1
      %s229 = smul.addr %s228, 16
      %s230 = smul.addr %s229, 8
      %s231 = scalar_lea.vmem %s2, %s230
      %p232 = pneg %p89
      %p233 = pneg %p86
      %p234 = pneg %p110
      %p235 = pneg %p107
      %p236 = pneg %p131
      %p237 = pneg %p128
      %p238 = pneg %p157
      %p239 = pneg %p154
      %p240 = scmp.lt.s32.totalorder %s16, 1
      %s241 = scalar_select %p240, %s16, 1
      %s242 = smul.addr %s241, 16
      %s243 = smul.addr %s242, 8
      %s244 = scalar_lea.vmem %s5, %s243
      %p245 = scmp.lt.s32.totalorder %s16, 1
      %s246 = scalar_select %p245, %s16, 1
      %s247 = smul.addr %s246, 48
      %s248 = smul.addr %s247, 8
      %s249 = scalar_lea.vmem %s0, %s248
      %p250 = scmp.lt.s32.totalorder %s16, 1
      %s251 = scalar_select %p250, %s16, 1
      %s252 = smul.addr %s251, 16
      %s253 = smul.addr %s252, 8
      %s254 = scalar_lea.vmem %s1, %s253
      %p255 = scmp.lt.s32.totalorder %s16, 1
      %s256 = scalar_select %p255, %s16, 1
      %s257 = smul.addr %s256, 16
      %s258 = smul.addr %s257, 8
      %s259 = scalar_lea.vmem %s2, %s258
      %p260 = scmp.lt.s32.totalorder %s16, 1
      %s261 = scalar_select %p260, %s16, 1
      %s262 = smul.addr %s261, 16
      %s263 = smul.addr %s262, 8
      %s264 = scalar_lea.vmem %s5, %s263
      %v265 = vld [vmem:[%s249] sm:$0xff]
      %v266 = vld [vmem:[%s249 + $0x8] sm:$0xff]
      %v267 = vld [vmem:[%s249 + $0x10] sm:$0xff]
      %v268 = vld [vmem:[%s249 + $0x18] sm:$0xff]
      %v269 = vld [vmem:[%s249 + $0x20] sm:$0xff]
      %v270 = vld [vmem:[%s249 + $0x28] sm:$0xff]
      %v271 = vld [vmem:[%s249 + $0x30] sm:$0xff]
      %v272 = vld [vmem:[%s249 + $0x38] sm:$0xff]
      %v273 = vld [vmem:[%s249 + $0x40] sm:$0xff]
      %v274 = vld [vmem:[%s249 + $0x48] sm:$0xff]
      %v275 = vld [vmem:[%s249 + $0x50] sm:$0xff]
      %v276 = vld [vmem:[%s249 + $0x58] sm:$0xff]
      %v277 = vld [vmem:[%s249 + $0x60] sm:$0xff]
      %v278 = vld [vmem:[%s249 + $0x68] sm:$0xff]
      %v279 = vld [vmem:[%s249 + $0x70] sm:$0xff]
      %v280 = vld [vmem:[%s249 + $0x78] sm:$0xff]
      %s281 = scalar_lea.vmem %s249, 128
      %v282 = vld [vmem:[%s281] sm:$0xff]
      %v283 = vld [vmem:[%s281 + $0x8] sm:$0xff]
      %v284 = vld [vmem:[%s281 + $0x10] sm:$0xff]
      %v285 = vld [vmem:[%s281 + $0x18] sm:$0xff]
      %v286 = vld [vmem:[%s281 + $0x20] sm:$0xff]
      %v287 = vld [vmem:[%s281 + $0x28] sm:$0xff]
      %v288 = vld [vmem:[%s281 + $0x30] sm:$0xff]
      %v289 = vld [vmem:[%s281 + $0x38] sm:$0xff]
      %v290 = vld [vmem:[%s281 + $0x40] sm:$0xff]
      %v291 = vld [vmem:[%s281 + $0x48] sm:$0xff]
      %v292 = vld [vmem:[%s281 + $0x50] sm:$0xff]
      %v293 = vld [vmem:[%s281 + $0x58] sm:$0xff]
      %v294 = vld [vmem:[%s281 + $0x60] sm:$0xff]
      %v295 = vld [vmem:[%s281 + $0x68] sm:$0xff]
      %v296 = vld [vmem:[%s281 + $0x70] sm:$0xff]
      %v297 = vld [vmem:[%s281 + $0x78] sm:$0xff]
      %s298 = scalar_lea.vmem %s249, 256
      %v299 = vld [vmem:[%s298] sm:$0xff]
      %v300 = vld [vmem:[%s298 + $0x8] sm:$0xff]
      %v301 = vld [vmem:[%s298 + $0x10] sm:$0xff]
      %v302 = vld [vmem:[%s298 + $0x18] sm:$0xff]
      %v303 = vld [vmem:[%s298 + $0x20] sm:$0xff]
      %v304 = vld [vmem:[%s298 + $0x28] sm:$0xff]
      %v305 = vld [vmem:[%s298 + $0x30] sm:$0xff]
      %v306 = vld [vmem:[%s298 + $0x38] sm:$0xff]
      %v307 = vld [vmem:[%s298 + $0x40] sm:$0xff]
      %v308 = vld [vmem:[%s298 + $0x48] sm:$0xff]
      %v309 = vld [vmem:[%s298 + $0x50] sm:$0xff]
      %v310 = vld [vmem:[%s298 + $0x58] sm:$0xff]
      %v311 = vld [vmem:[%s298 + $0x60] sm:$0xff]
      %v312 = vld [vmem:[%s298 + $0x68] sm:$0xff]
      %v313 = vld [vmem:[%s298 + $0x70] sm:$0xff]
      %v314 = vld [vmem:[%s298 + $0x78] sm:$0xff]
      %v315 = vld [vmem:[%s254] sm:$0xff]
      %v316 = vld [vmem:[%s254 + $0x8] sm:$0xff]
      %v317 = vld [vmem:[%s254 + $0x10] sm:$0xff]
      %v318 = vld [vmem:[%s254 + $0x18] sm:$0xff]
      %v319 = vld [vmem:[%s254 + $0x20] sm:$0xff]
      %v320 = vld [vmem:[%s254 + $0x28] sm:$0xff]
      %v321 = vld [vmem:[%s254 + $0x30] sm:$0xff]
      %v322 = vld [vmem:[%s254 + $0x38] sm:$0xff]
      %v323 = vld [vmem:[%s254 + $0x40] sm:$0xff]
      %v324 = vld [vmem:[%s254 + $0x48] sm:$0xff]
      %v325 = vld [vmem:[%s254 + $0x50] sm:$0xff]
      %v326 = vld [vmem:[%s254 + $0x58] sm:$0xff]
      %v327 = vld [vmem:[%s254 + $0x60] sm:$0xff]
      %v328 = vld [vmem:[%s254 + $0x68] sm:$0xff]
      %v329 = vld [vmem:[%s254 + $0x70] sm:$0xff]
      %v330 = vld [vmem:[%s254 + $0x78] sm:$0xff]
      %vm331 = vcmask 130048
      %v333 = vsel %vm331, %v265, 0
      %v336 = vsel %vm331, %v266, 0
      %v339 = vsel %vm331, %v282, 0
      %v342 = vsel %vm331, %v283, 0
      %344 = vmatprep.subr.mxu0 0.0
      %345 = vmatpush1.xpose.msra.mxu0 %v339
      %346 = vmatprep.subr.mxu0 0.0
      %347 = vmatpush1.xpose.msra.mxu0 %v342
      %348 = vmatprep.subr.mxu0 0.0
      %349 = vmatpush1.xpose.msra.mxu0 0.0
      %350 = vmatprep.subr.mxu0 0.0
      %351 = vmatpush1.xpose.msra.mxu0 0.0
      %352 = vmatprep.subr.mxu0 0.0
      %353 = vmatpush1.xpose.msra.mxu0 0.0
      %354 = vmatprep.subr.mxu0 0.0
      %355 = vmatpush1.xpose.msra.mxu0 0.0
      %356 = vmatprep.subr.mxu0 0.0
      %357 = vmatpush1.xpose.msra.mxu0 0.0
      %358 = vmatprep.subr.mxu0 0.0
      %359 = vmatpush1.xpose.msra.mxu0 0.0
      %360 = vmatprep.subr.mxu0 0.0
      %361 = vmatpush1.xpose.msra.mxu0 0.0
      %362 = vmatprep.subr.mxu0 0.0
      %363 = vmatpush1.xpose.msra.mxu0 0.0
      %364 = vmatprep.subr.mxu0 0.0
      %365 = vmatpush1.xpose.msra.mxu0 0.0
      %366 = vmatprep.subr.mxu0 0.0
      %367 = vmatpush1.xpose.msra.mxu0 0.0
      %368 = vmatprep.subr.mxu0 0.0
      %369 = vmatpush1.xpose.msra.mxu0 0.0
      %370 = vmatprep.subr.mxu0 0.0
      %371 = vmatpush1.xpose.msra.mxu0 0.0
      %372 = vmatprep.subr.mxu0 0.0
      %373 = vmatpush1.xpose.msra.mxu0 0.0
      %374 = vmatprep.subr.mxu0 0.0
      %375 = vmatpush1.xpose.msra.mxu0 0.0
      %376 = vmatprep.subr.mxu0 0.0
      %377 = vmatpush1.xpose.msra.mxu0 0.0
      %378 = vmatprep.subr.mxu0 0.0
      %379 = vmatpush1.xpose.msra.mxu0 0.0
      %380 = vmatprep.subr.mxu0 0.0
      %381 = vmatpush1.xpose.msra.mxu0 0.0
      %382 = vmatprep.subr.mxu0 0.0
      %383 = vmatpush1.xpose.msra.mxu0 0.0
      %384 = vmatprep.subr.mxu0 0.0
      %385 = vmatpush1.xpose.msra.mxu0 0.0
      %386 = vmatprep.subr.mxu0 0.0
      %387 = vmatpush1.xpose.msra.mxu0 0.0
      %388 = vmatprep.subr.mxu0 0.0
      %389 = vmatpush1.xpose.msra.mxu0 0.0
      %390 = vmatprep.subr.mxu0 0.0
      %391 = vmatpush1.xpose.msra.mxu0 0.0
      %392 = vmatprep.subr.mxu0 0.0
      %393 = vmatpush1.xpose.msra.mxu0 0.0
      %394 = vmatprep.subr.mxu0 0.0
      %395 = vmatpush1.xpose.msra.mxu0 0.0
      %396 = vmatprep.subr.mxu0 0.0
      %397 = vmatpush1.xpose.msra.mxu0 0.0
      %398 = vmatprep.subr.mxu0 0.0
      %399 = vmatpush1.xpose.msra.mxu0 0.0
      %400 = vmatprep.subr.mxu0 0.0
      %401 = vmatpush1.xpose.msra.mxu0 0.0
      %402 = vmatprep.subr.mxu0 0.0
      %403 = vmatpush1.xpose.msra.mxu0 0.0
      %404 = vmatprep.subr.mxu0 0.0
      %405 = vmatpush1.xpose.msra.mxu0 0.0
      %406 = vmatprep.subr.mxu0 0.0
      %407 = vmatpush1.xpose.msra.mxu0 0.0
      %408 = vmatprep.mubr.f32.mxu0 0.0
      %409 = vmatmul.mubr.f32.gmra.mrb[0].mxu0 %v333
      %v410 = vpop.f32.mrb[0].mxu0
      %v411 = vadd.f32 0.0, %v410
      %v412 = vpop.f32.mrb[0].mxu0
      %413 = vmatprep.mubr.f32.mxu0 0.0
      %414 = vmatmul.mubr.f32.gmra.mrb[0].mxu0 %v336
      %v415 = vpop.f32.mrb[0].mxu0
      %v416 = vadd.f32 0.0, %v415
      %v417 = vpop.f32.mrb[0].mxu0
      %418 = vdwg.mxu0
      %v420 = vsel %vm331, %v267, 0
      %v423 = vsel %vm331, %v268, 0
      %v426 = vsel %vm331, %v284, 0
      %v429 = vsel %vm331, %v285, 0
      %431 = vmatprep.subr.mxu0 0.0
      %432 = vmatpush1.xpose.msra.mxu0 %v426
      %433 = vmatprep.subr.mxu0 0.0
      %434 = vmatpush1.xpose.msra.mxu0 %v429
      %435 = vmatprep.subr.mxu0 0.0
      %436 = vmatpush1.xpose.msra.mxu0 0.0
      %437 = vmatprep.subr.mxu0 0.0
      %438 = vmatpush1.xpose.msra.mxu0 0.0
      %439 = vmatprep.subr.mxu0 0.0
      %440 = vmatpush1.xpose.msra.mxu0 0.0
      %441 = vmatprep.subr.mxu0 0.0
      %442 = vmatpush1.xpose.msra.mxu0 0.0
      %443 = vmatprep.subr.mxu0 0.0
      %444 = vmatpush1.xpose.msra.mxu0 0.0
      %445 = vmatprep.subr.mxu0 0.0
      %446 = vmatpush1.xpose.msra.mxu0 0.0
      %447 = vmatprep.subr.mxu0 0.0
      %448 = vmatpush1.xpose.msra.mxu0 0.0
      %449 = vmatprep.subr.mxu0 0.0
      %450 = vmatpush1.xpose.msra.mxu0 0.0
      %451 = vmatprep.subr.mxu0 0.0
      %452 = vmatpush1.xpose.msra.mxu0 0.0
      %453 = vmatprep.subr.mxu0 0.0
      %454 = vmatpush1.xpose.msra.mxu0 0.0
      %455 = vmatprep.subr.mxu0 0.0
      %456 = vmatpush1.xpose.msra.mxu0 0.0
      %457 = vmatprep.subr.mxu0 0.0
      %458 = vmatpush1.xpose.msra.mxu0 0.0
      %459 = vmatprep.subr.mxu0 0.0
      %460 = vmatpush1.xpose.msra.mxu0 0.0
      %461 = vmatprep.subr.mxu0 0.0
      %462 = vmatpush1.xpose.msra.mxu0 0.0
      %463 = vmatprep.subr.mxu0 0.0
      %464 = vmatpush1.xpose.msra.mxu0 0.0
      %465 = vmatprep.subr.mxu0 0.0
      %466 = vmatpush1.xpose.msra.mxu0 0.0
      %467 = vmatprep.subr.mxu0 0.0
      %468 = vmatpush1.xpose.msra.mxu0 0.0
      %469 = vmatprep.subr.mxu0 0.0
      %470 = vmatpush1.xpose.msra.mxu0 0.0
      %471 = vmatprep.subr.mxu0 0.0
      %472 = vmatpush1.xpose.msra.mxu0 0.0
      %473 = vmatprep.subr.mxu0 0.0
      %474 = vmatpush1.xpose.msra.mxu0 0.0
      %475 = vmatprep.subr.mxu0 0.0
      %476 = vmatpush1.xpose.msra.mxu0 0.0
      %477 = vmatprep.subr.mxu0 0.0
      %478 = vmatpush1.xpose.msra.mxu0 0.0
      %479 = vmatprep.subr.mxu0 0.0
      %480 = vmatpush1.xpose.msra.mxu0 0.0
      %481 = vmatprep.subr.mxu0 0.0
      %482 = vmatpush1.xpose.msra.mxu0 0.0
      %483 = vmatprep.subr.mxu0 0.0
      %484 = vmatpush1.xpose.msra.mxu0 0.0
      %485 = vmatprep.subr.mxu0 0.0
      %486 = vmatpush1.xpose.msra.mxu0 0.0
      %487 = vmatprep.subr.mxu0 0.0
      %488 = vmatpush1.xpose.msra.mxu0 0.0
      %489 = vmatprep.subr.mxu0 0.0
      %490 = vmatpush1.xpose.msra.mxu0 0.0
      %491 = vmatprep.subr.mxu0 0.0
      %492 = vmatpush1.xpose.msra.mxu0 0.0
      %493 = vmatprep.subr.mxu0 0.0
      %494 = vmatpush1.xpose.msra.mxu0 0.0
      %495 = vmatprep.mubr.f32.mxu0 0.0
      %496 = vmatmul.mubr.f32.gmra.mrb[0].mxu0 %v420
      %v497 = vpop.f32.mrb[0].mxu0
      %v498 = vadd.f32 0.0, %v497
      %v499 = vpop.f32.mrb[0].mxu0
      %500 = vmatprep.mubr.f32.mxu0 0.0
      %501 = vmatmul.mubr.f32.gmra.mrb[0].mxu0 %v423
      %v502 = vpop.f32.mrb[0].mxu0
      %v503 = vadd.f32 0.0, %v502
      %v504 = vpop.f32.mrb[0].mxu0
      %505 = vdwg.mxu0
      %v507 = vsel %vm331, %v269, 0
      %v510 = vsel %vm331, %v270, 0
      %v513 = vsel %vm331, %v286, 0
      %v516 = vsel %vm331, %v287, 0
      %518 = vmatprep.subr.mxu0 0.0
      %519 = vmatpush1.xpose.msra.mxu0 %v513
      %520 = vmatprep.subr.mxu0 0.0
      %521 = vmatpush1.xpose.msra.mxu0 %v516
      %522 = vmatprep.subr.mxu0 0.0
      %523 = vmatpush1.xpose.msra.mxu0 0.0
      %524 = vmatprep.subr.mxu0 0.0
      %525 = vmatpush1.xpose.msra.mxu0 0.0
      %526 = vmatprep.subr.mxu0 0.0
      %527 = vmatpush1.xpose.msra.mxu0 0.0
      %528 = vmatprep.subr.mxu0 0.0
      %529 = vmatpush1.xpose.msra.mxu0 0.0
      %530 = vmatprep.subr.mxu0 0.0
      %531 = vmatpush1.xpose.msra.mxu0 0.0
      %532 = vmatprep.subr.mxu0 0.0
      %533 = vmatpush1.xpose.msra.mxu0 0.0
      %534 = vmatprep.subr.mxu0 0.0
      %535 = vmatpush1.xpose.msra.mxu0 0.0
      %536 = vmatprep.subr.mxu0 0.0
      %537 = vmatpush1.xpose.msra.mxu0 0.0
      %538 = vmatprep.subr.mxu0 0.0
      %539 = vmatpush1.xpose.msra.mxu0 0.0
      %540 = vmatprep.subr.mxu0 0.0
      %541 = vmatpush1.xpose.msra.mxu0 0.0
      %542 = vmatprep.subr.mxu0 0.0
      %543 = vmatpush1.xpose.msra.mxu0 0.0
      %544 = vmatprep.subr.mxu0 0.0
      %545 = vmatpush1.xpose.msra.mxu0 0.0
      %546 = vmatprep.subr.mxu0 0.0
      %547 = vmatpush1.xpose.msra.mxu0 0.0
      %548 = vmatprep.subr.mxu0 0.0
      %549 = vmatpush1.xpose.msra.mxu0 0.0
      %550 = vmatprep.subr.mxu0 0.0
      %551 = vmatpush1.xpose.msra.mxu0 0.0
      %552 = vmatprep.subr.mxu0 0.0
      %553 = vmatpush1.xpose.msra.mxu0 0.0
      %554 = vmatprep.subr.mxu0 0.0
      %555 = vmatpush1.xpose.msra.mxu0 0.0
      %556 = vmatprep.subr.mxu0 0.0
      %557 = vmatpush1.xpose.msra.mxu0 0.0
      %558 = vmatprep.subr.mxu0 0.0
      %559 = vmatpush1.xpose.msra.mxu0 0.0
      %560 = vmatprep.subr.mxu0 0.0
      %561 = vmatpush1.xpose.msra.mxu0 0.0
      %562 = vmatprep.subr.mxu0 0.0
      %563 = vmatpush1.xpose.msra.mxu0 0.0
      %564 = vmatprep.subr.mxu0 0.0
      %565 = vmatpush1.xpose.msra.mxu0 0.0
      %566 = vmatprep.subr.mxu0 0.0
      %567 = vmatpush1.xpose.msra.mxu0 0.0
      %568 = vmatprep.subr.mxu0 0.0
      %569 = vmatpush1.xpose.msra.mxu0 0.0
      %570 = vmatprep.subr.mxu0 0.0
      %571 = vmatpush1.xpose.msra.mxu0 0.0
      %572 = vmatprep.subr.mxu0 0.0
      %573 = vmatpush1.xpose.msra.mxu0 0.0
      %574 = vmatprep.subr.mxu0 0.0
      %575 = vmatpush1.xpose.msra.mxu0 0.0
      %576 = vmatprep.subr.mxu0 0.0
      %577 = vmatpush1.xpose.msra.mxu0 0.0
      %578 = vmatprep.subr.mxu0 0.0
      %579 = vmatpush1.xpose.msra.mxu0 0.0
      %580 = vmatprep.subr.mxu0 0.0
      %581 = vmatpush1.xpose.msra.mxu0 0.0
      %582 = vmatprep.mubr.f32.mxu0 0.0
      %583 = vmatmul.mubr.f32.gmra.mrb[0].mxu0 %v507
      %v584 = vpop.f32.mrb[0].mxu0
      %v585 = vadd.f32 0.0, %v584
      %v586 = vpop.f32.mrb[0].mxu0
      %587 = vmatprep.mubr.f32.mxu0 0.0
      %588 = vmatmul.mubr.f32.gmra.mrb[0].mxu0 %v510
      %v589 = vpop.f32.mrb[0].mxu0
      %v590 = vadd.f32 0.0, %v589
      %v591 = vpop.f32.mrb[0].mxu0
      %592 = vdwg.mxu0
      %v594 = vsel %vm331, %v271, 0
      %v597 = vsel %vm331, %v272, 0
      %v600 = vsel %vm331, %v288, 0
      %v603 = vsel %vm331, %v289, 0
      %605 = vmatprep.subr.mxu0 0.0
      %606 = vmatpush1.xpose.msra.mxu0 %v600
      %607 = vmatprep.subr.mxu0 0.0
      %608 = vmatpush1.xpose.msra.mxu0 %v603
      %609 = vmatprep.subr.mxu0 0.0
      %610 = vmatpush1.xpose.msra.mxu0 0.0
      %611 = vmatprep.subr.mxu0 0.0
      %612 = vmatpush1.xpose.msra.mxu0 0.0
      %613 = vmatprep.subr.mxu0 0.0
      %614 = vmatpush1.xpose.msra.mxu0 0.0
      %615 = vmatprep.subr.mxu0 0.0
      %616 = vmatpush1.xpose.msra.mxu0 0.0
      %617 = vmatprep.subr.mxu0 0.0
      %618 = vmatpush1.xpose.msra.mxu0 0.0
      %619 = vmatprep.subr.mxu0 0.0
      %620 = vmatpush1.xpose.msra.mxu0 0.0
      %621 = vmatprep.subr.mxu0 0.0
      %622 = vmatpush1.xpose.msra.mxu0 0.0
      %623 = vmatprep.subr.mxu0 0.0
      %624 = vmatpush1.xpose.msra.mxu0 0.0
      %625 = vmatprep.subr.mxu0 0.0
      %626 = vmatpush1.xpose.msra.mxu0 0.0
      %627 = vmatprep.subr.mxu0 0.0
      %628 = vmatpush1.xpose.msra.mxu0 0.0
      %629 = vmatprep.subr.mxu0 0.0
      %630 = vmatpush1.xpose.msra.mxu0 0.0
      %631 = vmatprep.subr.mxu0 0.0
      %632 = vmatpush1.xpose.msra.mxu0 0.0
      %633 = vmatprep.subr.mxu0 0.0
      %634 = vmatpush1.xpose.msra.mxu0 0.0
      %635 = vmatprep.subr.mxu0 0.0
      %636 = vmatpush1.xpose.msra.mxu0 0.0
      %637 = vmatprep.subr.mxu0 0.0
      %638 = vmatpush1.xpose.msra.mxu0 0.0
      %639 = vmatprep.subr.mxu0 0.0
      %640 = vmatpush1.xpose.msra.mxu0 0.0
      %641 = vmatprep.subr.mxu0 0.0
      %642 = vmatpush1.xpose.msra.mxu0 0.0
      %643 = vmatprep.subr.mxu0 0.0
      %644 = vmatpush1.xpose.msra.mxu0 0.0
      %645 = vmatprep.subr.mxu0 0.0
      %646 = vmatpush1.xpose.msra.mxu0 0.0
      %647 = vmatprep.subr.mxu0 0.0
      %648 = vmatpush1.xpose.msra.mxu0 0.0
      %649 = vmatprep.subr.mxu0 0.0
      %650 = vmatpush1.xpose.msra.mxu0 0.0
      %651 = vmatprep.subr.mxu0 0.0
      %652 = vmatpush1.xpose.msra.mxu0 0.0
      %653 = vmatprep.subr.mxu0 0.0
      %654 = vmatpush1.xpose.msra.mxu0 0.0
      %655 = vmatprep.subr.mxu0 0.0
      %656 = vmatpush1.xpose.msra.mxu0 0.0
      %657 = vmatprep.subr.mxu0 0.0
      %658 = vmatpush1.xpose.msra.mxu0 0.0
      %659 = vmatprep.subr.mxu0 0.0
      %660 = vmatpush1.xpose.msra.mxu0 0.0
      %661 = vmatprep.subr.mxu0 0.0
      %662 = vmatpush1.xpose.msra.mxu0 0.0
      %663 = vmatprep.subr.mxu0 0.0
      %664 = vmatpush1.xpose.msra.mxu0 0.0
      %665 = vmatprep.subr.mxu0 0.0
      %666 = vmatpush1.xpose.msra.mxu0 0.0
      %667 = vmatprep.subr.mxu0 0.0
      %668 = vmatpush1.xpose.msra.mxu0 0.0
      %669 = vmatprep.mubr.f32.mxu0 0.0
      %670 = vmatmul.mubr.f32.gmra.mrb[0].mxu0 %v594
      %v671 = vpop.f32.mrb[0].mxu0
      %v672 = vadd.f32 0.0, %v671
      %v673 = vpop.f32.mrb[0].mxu0
      %674 = vmatprep.mubr.f32.mxu0 0.0
      %675 = vmatmul.mubr.f32.gmra.mrb[0].mxu0 %v597
      %v676 = vpop.f32.mrb[0].mxu0
      %v677 = vadd.f32 0.0, %v676
      %v678 = vpop.f32.mrb[0].mxu0
      %679 = vdwg.mxu0
      %v681 = vsel %vm331, %v273, 0
      %v684 = vsel %vm331, %v274, 0
      %v687 = vsel %vm331, %v290, 0
      %v690 = vsel %vm331, %v291, 0
      %692 = vmatprep.subr.mxu0 0.0
      %693 = vmatpush1.xpose.msra.mxu0 %v687
      %694 = vmatprep.subr.mxu0 0.0
      %695 = vmatpush1.xpose.msra.mxu0 %v690
      %696 = vmatprep.subr.mxu0 0.0
      %697 = vmatpush1.xpose.msra.mxu0 0.0
      %698 = vmatprep.subr.mxu0 0.0
      %699 = vmatpush1.xpose.msra.mxu0 0.0
      %700 = vmatprep.subr.mxu0 0.0
      %701 = vmatpush1.xpose.msra.mxu0 0.0
      %702 = vmatprep.subr.mxu0 0.0
      %703 = vmatpush1.xpose.msra.mxu0 0.0
      %704 = vmatprep.subr.mxu0 0.0
      %705 = vmatpush1.xpose.msra.mxu0 0.0
      %706 = vmatprep.subr.mxu0 0.0
      %707 = vmatpush1.xpose.msra.mxu0 0.0
      %708 = vmatprep.subr.mxu0 0.0
      %709 = vmatpush1.xpose.msra.mxu0 0.0
      %710 = vmatprep.subr.mxu0 0.0
      %711 = vmatpush1.xpose.msra.mxu0 0.0
      %712 = vmatprep.subr.mxu0 0.0
      %713 = vmatpush1.xpose.msra.mxu0 0.0
      %714 = vmatprep.subr.mxu0 0.0
      %715 = vmatpush1.xpose.msra.mxu0 0.0
      %716 = vmatprep.subr.mxu0 0.0
      %717 = vmatpush1.xpose.msra.mxu0 0.0
      %718 = vmatprep.subr.mxu0 0.0
      %719 = vmatpush1.xpose.msra.mxu0 0.0
      %720 = vmatprep.subr.mxu0 0.0
      %721 = vmatpush1.xpose.msra.mxu0 0.0
      %722 = vmatprep.subr.mxu0 0.0
      %723 = vmatpush1.xpose.msra.mxu0 0.0
      %724 = vmatprep.subr.mxu0 0.0
      %725 = vmatpush1.xpose.msra.mxu0 0.0
      %726 = vmatprep.subr.mxu0 0.0
      %727 = vmatpush1.xpose.msra.mxu0 0.0
      %728 = vmatprep.subr.mxu0 0.0
      %729 = vmatpush1.xpose.msra.mxu0 0.0
      %730 = vmatprep.subr.mxu0 0.0
      %731 = vmatpush1.xpose.msra.mxu0 0.0
      %732 = vmatprep.subr.mxu0 0.0
      %733 = vmatpush1.xpose.msra.mxu0 0.0
      %734 = vmatprep.subr.mxu0 0.0
      %735 = vmatpush1.xpose.msra.mxu0 0.0
      %736 = vmatprep.subr.mxu0 0.0
      %737 = vmatpush1.xpose.msra.mxu0 0.0
      %738 = vmatprep.subr.mxu0 0.0
      %739 = vmatpush1.xpose.msra.mxu0 0.0
      %740 = vmatprep.subr.mxu0 0.0
      %741 = vmatpush1.xpose.msra.mxu0 0.0
      %742 = vmatprep.subr.mxu0 0.0
      %743 = vmatpush1.xpose.msra.mxu0 0.0
      %744 = vmatprep.subr.mxu0 0.0
      %745 = vmatpush1.xpose.msra.mxu0 0.0
      %746 = vmatprep.subr.mxu0 0.0
      %747 = vmatpush1.xpose.msra.mxu0 0.0
      %748 = vmatprep.subr.mxu0 0.0
      %749 = vmatpush1.xpose.msra.mxu0 0.0
      %750 = vmatprep.subr.mxu0 0.0
      %751 = vmatpush1.xpose.msra.mxu0 0.0
      %752 = vmatprep.subr.mxu0 0.0
      %753 = vmatpush1.xpose.msra.mxu0 0.0
      %754 = vmatprep.subr.mxu0 0.0
      %755 = vmatpush1.xpose.msra.mxu0 0.0
      %756 = vmatprep.mubr.f32.mxu0 0.0
      %757 = vmatmul.mubr.f32.gmra.mrb[0].mxu0 %v681
      %v758 = vpop.f32.mrb[0].mxu0
      %v759 = vadd.f32 0.0, %v758
      %v760 = vpop.f32.mrb[0].mxu0
      %761 = vmatprep.mubr.f32.mxu0 0.0
      %762 = vmatmul.mubr.f32.gmra.mrb[0].mxu0 %v684
      %v763 = vpop.f32.mrb[0].mxu0
      %v764 = vadd.f32 0.0, %v763
      %v765 = vpop.f32.mrb[0].mxu0
      %766 = vdwg.mxu0
      %v768 = vsel %vm331, %v275, 0
      %v771 = vsel %vm331, %v276, 0
      %v774 = vsel %vm331, %v292, 0
      %v777 = vsel %vm331, %v293, 0
      %779 = vmatprep.subr.mxu0 0.0
      %780 = vmatpush1.xpose.msra.mxu0 %v774
      %781 = vmatprep.subr.mxu0 0.0
      %782 = vmatpush1.xpose.msra.mxu0 %v777
      %783 = vmatprep.subr.mxu0 0.0
      %784 = vmatpush1.xpose.msra.mxu0 0.0
      %785 = vmatprep.subr.mxu0 0.0
      %786 = vmatpush1.xpose.msra.mxu0 0.0
      %787 = vmatprep.subr.mxu0 0.0
      %788 = vmatpush1.xpose.msra.mxu0 0.0
      %789 = vmatprep.subr.mxu0 0.0
      %790 = vmatpush1.xpose.msra.mxu0 0.0
      %791 = vmatprep.subr.mxu0 0.0
      %792 = vmatpush1.xpose.msra.mxu0 0.0
      %793 = vmatprep.subr.mxu0 0.0
      %794 = vmatpush1.xpose.msra.mxu0 0.0
      %795 = vmatprep.subr.mxu0 0.0
      %796 = vmatpush1.xpose.msra.mxu0 0.0
      %797 = vmatprep.subr.mxu0 0.0
      %798 = vmatpush1.xpose.msra.mxu0 0.0
      %799 = vmatprep.subr.mxu0 0.0
      %800 = vmatpush1.xpose.msra.mxu0 0.0
      %801 = vmatprep.subr.mxu0 0.0
      %802 = vmatpush1.xpose.msra.mxu0 0.0
      %803 = vmatprep.subr.mxu0 0.0
      %804 = vmatpush1.xpose.msra.mxu0 0.0
      %805 = vmatprep.subr.mxu0 0.0
      %806 = vmatpush1.xpose.msra.mxu0 0.0
      %807 = vmatprep.subr.mxu0 0.0
      %808 = vmatpush1.xpose.msra.mxu0 0.0
      %809 = vmatprep.subr.mxu0 0.0
      %810 = vmatpush1.xpose.msra.mxu0 0.0
      %811 = vmatprep.subr.mxu0 0.0
      %812 = vmatpush1.xpose.msra.mxu0 0.0
      %813 = vmatprep.subr.mxu0 0.0
      %814 = vmatpush1.xpose.msra.mxu0 0.0
      %815 = vmatprep.subr.mxu0 0.0
      %816 = vmatpush1.xpose.msra.mxu0 0.0
      %817 = vmatprep.subr.mxu0 0.0
      %818 = vmatpush1.xpose.msra.mxu0 0.0
      %819 = vmatprep.subr.mxu0 0.0
      %820 = vmatpush1.xpose.msra.mxu0 0.0
      %821 = vmatprep.subr.mxu0 0.0
      %822 = vmatpush1.xpose.msra.mxu0 0.0
      %823 = vmatprep.subr.mxu0 0.0
      %824 = vmatpush1.xpose.msra.mxu0 0.0
      %825 = vmatprep.subr.mxu0 0.0
      %826 = vmatpush1.xpose.msra.mxu0 0.0
      %827 = vmatprep.subr.mxu0 0.0
      %828 = vmatpush1.xpose.msra.mxu0 0.0
      %829 = vmatprep.subr.mxu0 0.0
      %830 = vmatpush1.xpose.msra.mxu0 0.0
      %831 = vmatprep.subr.mxu0 0.0
      %832 = vmatpush1.xpose.msra.mxu0 0.0
      %833 = vmatprep.subr.mxu0 0.0
      %834 = vmatpush1.xpose.msra.mxu0 0.0
      %835 = vmatprep.subr.mxu0 0.0
      %836 = vmatpush1.xpose.msra.mxu0 0.0
      %837 = vmatprep.subr.mxu0 0.0
      %838 = vmatpush1.xpose.msra.mxu0 0.0
      %839 = vmatprep.subr.mxu0 0.0
      %840 = vmatpush1.xpose.msra.mxu0 0.0
      %841 = vmatprep.subr.mxu0 0.0
      %842 = vmatpush1.xpose.msra.mxu0 0.0
      %843 = vmatprep.mubr.f32.mxu0 0.0
      %844 = vmatmul.mubr.f32.gmra.mrb[0].mxu0 %v768
      %v845 = vpop.f32.mrb[0].mxu0
      %v846 = vadd.f32 0.0, %v845
      %v847 = vpop.f32.mrb[0].mxu0
      %848 = vmatprep.mubr.f32.mxu0 0.0
      %849 = vmatmul.mubr.f32.gmra.mrb[0].mxu0 %v771
      %v850 = vpop.f32.mrb[0].mxu0
      %v851 = vadd.f32 0.0, %v850
      %v852 = vpop.f32.mrb[0].mxu0
      %853 = vdwg.mxu0
      %v855 = vsel %vm331, %v277, 0
      %v858 = vsel %vm331, %v278, 0
      %v861 = vsel %vm331, %v294, 0
      %v864 = vsel %vm331, %v295, 0
      %866 = vmatprep.subr.mxu0 0.0
      %867 = vmatpush1.xpose.msra.mxu0 %v861
      %868 = vmatprep.subr.mxu0 0.0
      %869 = vmatpush1.xpose.msra.mxu0 %v864
      %870 = vmatprep.subr.mxu0 0.0
      %871 = vmatpush1.xpose.msra.mxu0 0.0
      %872 = vmatprep.subr.mxu0 0.0
      %873 = vmatpush1.xpose.msra.mxu0 0.0
      %874 = vmatprep.subr.mxu0 0.0
      %875 = vmatpush1.xpose.msra.mxu0 0.0
      %876 = vmatprep.subr.mxu0 0.0
      %877 = vmatpush1.xpose.msra.mxu0 0.0
      %878 = vmatprep.subr.mxu0 0.0
      %879 = vmatpush1.xpose.msra.mxu0 0.0
      %880 = vmatprep.subr.mxu0 0.0
      %881 = vmatpush1.xpose.msra.mxu0 0.0
      %882 = vmatprep.subr.mxu0 0.0
      %883 = vmatpush1.xpose.msra.mxu0 0.0
      %884 = vmatprep.subr.mxu0 0.0
      %885 = vmatpush1.xpose.msra.mxu0 0.0
      %886 = vmatprep.subr.mxu0 0.0
      %887 = vmatpush1.xpose.msra.mxu0 0.0
      %888 = vmatprep.subr.mxu0 0.0
      %889 = vmatpush1.xpose.msra.mxu0 0.0
      %890 = vmatprep.subr.mxu0 0.0
      %891 = vmatpush1.xpose.msra.mxu0 0.0
      %892 = vmatprep.subr.mxu0 0.0
      %893 = vmatpush1.xpose.msra.mxu0 0.0
      %894 = vmatprep.subr.mxu0 0.0
      %895 = vmatpush1.xpose.msra.mxu0 0.0
      %896 = vmatprep.subr.mxu0 0.0
      %897 = vmatpush1.xpose.msra.mxu0 0.0
      %898 = vmatprep.subr.mxu0 0.0
      %899 = vmatpush1.xpose.msra.mxu0 0.0
      %900 = vmatprep.subr.mxu0 0.0
      %901 = vmatpush1.xpose.msra.mxu0 0.0
      %902 = vmatprep.subr.mxu0 0.0
      %903 = vmatpush1.xpose.msra.mxu0 0.0
      %904 = vmatprep.subr.mxu0 0.0
      %905 = vmatpush1.xpose.msra.mxu0 0.0
      %906 = vmatprep.subr.mxu0 0.0
      %907 = vmatpush1.xpose.msra.mxu0 0.0
      %908 = vmatprep.subr.mxu0 0.0
      %909 = vmatpush1.xpose.msra.mxu0 0.0
      %910 = vmatprep.subr.mxu0 0.0
      %911 = vmatpush1.xpose.msra.mxu0 0.0
      %912 = vmatprep.subr.mxu0 0.0
      %913 = vmatpush1.xpose.msra.mxu0 0.0
      %914 = vmatprep.subr.mxu0 0.0
      %915 = vmatpush1.xpose.msra.mxu0 0.0
      %916 = vmatprep.subr.mxu0 0.0
      %917 = vmatpush1.xpose.msra.mxu0 0.0
      %918 = vmatprep.subr.mxu0 0.0
      %919 = vmatpush1.xpose.msra.mxu0 0.0
      %920 = vmatprep.subr.mxu0 0.0
      %921 = vmatpush1.xpose.msra.mxu0 0.0
      %922 = vmatprep.subr.mxu0 0.0
      %923 = vmatpush1.xpose.msra.mxu0 0.0
      %924 = vmatprep.subr.mxu0 0.0
      %925 = vmatpush1.xpose.msra.mxu0 0.0
      %926 = vmatprep.subr.mxu0 0.0
      %927 = vmatpush1.xpose.msra.mxu0 0.0
      %928 = vmatprep.subr.mxu0 0.0
      %929 = vmatpush1.xpose.msra.mxu0 0.0
      %930 = vmatprep.mubr.f32.mxu0 0.0
      %931 = vmatmul.mubr.f32.gmra.mrb[0].mxu0 %v855
      %v932 = vpop.f32.mrb[0].mxu0
      %v933 = vadd.f32 0.0, %v932
      %v934 = vpop.f32.mrb[0].mxu0
      %935 = vmatprep.mubr.f32.mxu0 0.0
      %936 = vmatmul.mubr.f32.gmra.mrb[0].mxu0 %v858
      %v937 = vpop.f32.mrb[0].mxu0
      %v938 = vadd.f32 0.0, %v937
      %v939 = vpop.f32.mrb[0].mxu0
      %940 = vdwg.mxu0
      %v942 = vsel %vm331, %v279, 0
      %v945 = vsel %vm331, %v280, 0
      %v948 = vsel %vm331, %v296, 0
      %v951 = vsel %vm331, %v297, 0
      %953 = vmatprep.subr.mxu0 0.0
      %954 = vmatpush1.xpose.msra.mxu0 %v948
      %955 = vmatprep.subr.mxu0 0.0
      %956 = vmatpush1.xpose.msra.mxu0 %v951
      %957 = vmatprep.subr.mxu0 0.0
      %958 = vmatpush1.xpose.msra.mxu0 0.0
      %959 = vmatprep.subr.mxu0 0.0
      %960 = vmatpush1.xpose.msra.mxu0 0.0
      %961 = vmatprep.subr.mxu0 0.0
      %962 = vmatpush1.xpose.msra.mxu0 0.0
      %963 = vmatprep.subr.mxu0 0.0
      %964 = vmatpush1.xpose.msra.mxu0 0.0
      %965 = vmatprep.subr.mxu0 0.0
      %966 = vmatpush1.xpose.msra.mxu0 0.0
      %967 = vmatprep.subr.mxu0 0.0
      %968 = vmatpush1.xpose.msra.mxu0 0.0
      %969 = vmatprep.subr.mxu0 0.0
      %970 = vmatpush1.xpose.msra.mxu0 0.0
      %971 = vmatprep.subr.mxu0 0.0
      %972 = vmatpush1.xpose.msra.mxu0 0.0
      %973 = vmatprep.subr.mxu0 0.0
      %974 = vmatpush1.xpose.msra.mxu0 0.0
      %975 = vmatprep.subr.mxu0 0.0
      %976 = vmatpush1.xpose.msra.mxu0 0.0
      %977 = vmatprep.subr.mxu0 0.0
      %978 = vmatpush1.xpose.msra.mxu0 0.0
      %979 = vmatprep.subr.mxu0 0.0
      %980 = vmatpush1.xpose.msra.mxu0 0.0
      %981 = vmatprep.subr.mxu0 0.0
      %982 = vmatpush1.xpose.msra.mxu0 0.0
      %983 = vmatprep.subr.mxu0 0.0
      %984 = vmatpush1.xpose.msra.mxu0 0.0
      %985 = vmatprep.subr.mxu0 0.0
      %986 = vmatpush1.xpose.msra.mxu0 0.0
      %987 = vmatprep.subr.mxu0 0.0
      %988 = vmatpush1.xpose.msra.mxu0 0.0
      %989 = vmatprep.subr.mxu0 0.0
      %990 = vmatpush1.xpose.msra.mxu0 0.0
      %991 = vmatprep.subr.mxu0 0.0
      %992 = vmatpush1.xpose.msra.mxu0 0.0
      %993 = vmatprep.subr.mxu0 0.0
      %994 = vmatpush1.xpose.msra.mxu0 0.0
      %995 = vmatprep.subr.mxu0 0.0
      %996 = vmatpush1.xpose.msra.mxu0 0.0
      %997 = vmatprep.subr.mxu0 0.0
      %998 = vmatpush1.xpose.msra.mxu0 0.0
      %999 = vmatprep.subr.mxu0 0.0
      %1000 = vmatpush1.xpose.msra.mxu0 0.0
      %1001 = vmatprep.subr.mxu0 0.0
      %1002 = vmatpush1.xpose.msra.mxu0 0.0
      %1003 = vmatprep.subr.mxu0 0.0
      %1004 = vmatpush1.xpose.msra.mxu0 0.0
      %1005 = vmatprep.subr.mxu0 0.0
      %1006 = vmatpush1.xpose.msra.mxu0 0.0
      %1007 = vmatprep.subr.mxu0 0.0
      %1008 = vmatpush1.xpose.msra.mxu0 0.0
      %1009 = vmatprep.subr.mxu0 0.0
      %1010 = vmatpush1.xpose.msra.mxu0 0.0
      %1011 = vmatprep.subr.mxu0 0.0
      %1012 = vmatpush1.xpose.msra.mxu0 0.0
      %1013 = vmatprep.subr.mxu0 0.0
      %1014 = vmatpush1.xpose.msra.mxu0 0.0
      %1015 = vmatprep.subr.mxu0 0.0
      %1016 = vmatpush1.xpose.msra.mxu0 0.0
      %1017 = vmatprep.mubr.f32.mxu0 0.0
      %1018 = vmatmul.mubr.f32.gmra.mrb[0].mxu0 %v942
      %v1019 = vpop.f32.mrb[0].mxu0
      %v1020 = vadd.f32 0.0, %v1019
      %v1021 = vpop.f32.mrb[0].mxu0
      %1022 = vmatprep.mubr.f32.mxu0 0.0
      %1023 = vmatmul.mubr.f32.gmra.mrb[0].mxu0 %v945
      %v1024 = vpop.f32.mrb[0].mxu0
      %v1025 = vadd.f32 0.0, %v1024
      %v1026 = vpop.f32.mrb[0].mxu0
      %1027 = vdwg.mxu0
      %v1028 = vmul.f32 %v411, 0.35355338
      %v1029 = vmul.f32 %v416, 0.35355338
      %v1030 = vmul.f32 %v498, 0.35355338
      %v1031 = vmul.f32 %v503, 0.35355338
      %v1032 = vmul.f32 %v585, 0.35355338
      %v1033 = vmul.f32 %v590, 0.35355338
      %v1034 = vmul.f32 %v672, 0.35355338
      %v1035 = vmul.f32 %v677, 0.35355338
      %v1036 = vmul.f32 %v759, 0.35355338
      %v1037 = vmul.f32 %v764, 0.35355338
      %v1038 = vmul.f32 %v846, 0.35355338
      %v1039 = vmul.f32 %v851, 0.35355338
      %v1040 = vmul.f32 %v933, 0.35355338
      %v1041 = vmul.f32 %v938, 0.35355338
      %v1042 = vmul.f32 %v1020, 0.35355338
      %v1043 = vmul.f32 %v1025, 0.35355338
      %v1044 = vsel %vm331, %v1028, -inf
      %1045 = vmax.xlane.f32.xlu0 %v1044
      %v1046 = vpop.xlane.xlu0 %1045
      %v1047 = vsel %vm331, %v1029, -inf
      %1048 = vmax.xlane.f32.xlu0 %v1047
      %v1049 = vpop.xlane.xlu0 %1048
      %v1050 = vsel %vm331, %v1030, -inf
      %1051 = vmax.xlane.f32.xlu0 %v1050
      %v1052 = vpop.xlane.xlu0 %1051
      %v1053 = vsel %vm331, %v1031, -inf
      %1054 = vmax.xlane.f32.xlu0 %v1053
      %v1055 = vpop.xlane.xlu0 %1054
      %v1056 = vsel %vm331, %v1032, -inf
      %1057 = vmax.xlane.f32.xlu0 %v1056
      %v1058 = vpop.xlane.xlu0 %1057
      %v1059 = vsel %vm331, %v1033, -inf
      %1060 = vmax.xlane.f32.xlu0 %v1059
      %v1061 = vpop.xlane.xlu0 %1060
      %v1062 = vsel %vm331, %v1034, -inf
      %1063 = vmax.xlane.f32.xlu0 %v1062
      %v1064 = vpop.xlane.xlu0 %1063
      %v1065 = vsel %vm331, %v1035, -inf
      %1066 = vmax.xlane.f32.xlu0 %v1065
      %v1067 = vpop.xlane.xlu0 %1066
      %v1068 = vsel %vm331, %v1036, -inf
      %1069 = vmax.xlane.f32.xlu0 %v1068
      %v1070 = vpop.xlane.xlu0 %1069
      %v1071 = vsel %vm331, %v1037, -inf
      %1072 = vmax.xlane.f32.xlu0 %v1071
      %v1073 = vpop.xlane.xlu0 %1072
      %v1074 = vsel %vm331, %v1038, -inf
      %1075 = vmax.xlane.f32.xlu0 %v1074
      %v1076 = vpop.xlane.xlu0 %1075
      %v1077 = vsel %vm331, %v1039, -inf
      %1078 = vmax.xlane.f32.xlu0 %v1077
      %v1079 = vpop.xlane.xlu0 %1078
      %v1080 = vsel %vm331, %v1040, -inf
      %1081 = vmax.xlane.f32.xlu0 %v1080
      %v1082 = vpop.xlane.xlu0 %1081
      %v1083 = vsel %vm331, %v1041, -inf
      %1084 = vmax.xlane.f32.xlu0 %v1083
      %v1085 = vpop.xlane.xlu0 %1084
      %v1086 = vsel %vm331, %v1042, -inf
      %1087 = vmax.xlane.f32.xlu0 %v1086
      %v1088 = vpop.xlane.xlu0 %1087
      %v1089 = vsel %vm331, %v1043, -inf
      %1090 = vmax.xlane.f32.xlu0 %v1089
      %v1091 = vpop.xlane.xlu0 %1090
      %v1092 = vsub.f32 %v1028, %v1046
      %v1093 = vsub.f32 %v1029, %v1049
      %v1094 = vsub.f32 %v1030, %v1052
      %v1095 = vsub.f32 %v1031, %v1055
      %v1096 = vsub.f32 %v1032, %v1058
      %v1097 = vsub.f32 %v1033, %v1061
      %v1098 = vsub.f32 %v1034, %v1064
      %v1099 = vsub.f32 %v1035, %v1067
      %v1100 = vsub.f32 %v1036, %v1070
      %v1101 = vsub.f32 %v1037, %v1073
      %v1102 = vsub.f32 %v1038, %v1076
      %v1103 = vsub.f32 %v1039, %v1079
      %v1104 = vsub.f32 %v1040, %v1082
      %v1105 = vsub.f32 %v1041, %v1085
      %v1106 = vsub.f32 %v1042, %v1088
      %v1107 = vsub.f32 %v1043, %v1091
      %v1108 = vmul.f32 %v1092, 1.442695
      %v1109 = vpow.pop %v1108
      %v1110 = vmul.f32 %v1093, 1.442695
      %v1111 = vpow.pop %v1110
      %v1112 = vmul.f32 %v1094, 1.442695
      %v1113 = vpow.pop %v1112
      %v1114 = vmul.f32 %v1095, 1.442695
      %v1115 = vpow.pop %v1114
      %v1116 = vmul.f32 %v1096, 1.442695
      %v1117 = vpow.pop %v1116
      %v1118 = vmul.f32 %v1097, 1.442695
      %v1119 = vpow.pop %v1118
      %v1120 = vmul.f32 %v1098, 1.442695
      %v1121 = vpow.pop %v1120
      %v1122 = vmul.f32 %v1099, 1.442695
      %v1123 = vpow.pop %v1122
      %v1124 = vmul.f32 %v1100, 1.442695
      %v1125 = vpow.pop %v1124
      %v1126 = vmul.f32 %v1101, 1.442695
      %v1127 = vpow.pop %v1126
      %v1128 = vmul.f32 %v1102, 1.442695
      %v1129 = vpow.pop %v1128
      %v1130 = vmul.f32 %v1103, 1.442695
      %v1131 = vpow.pop %v1130
      %v1132 = vmul.f32 %v1104, 1.442695
      %v1133 = vpow.pop %v1132
      %v1134 = vmul.f32 %v1105, 1.442695
      %v1135 = vpow.pop %v1134
      %v1136 = vmul.f32 %v1106, 1.442695
      %v1137 = vpow.pop %v1136
      %v1138 = vmul.f32 %v1107, 1.442695
      %v1139 = vpow.pop %v1138
      %v1140 = vsel %vm331, %v1109, 0.0
      %1141 = vadd.xlane.f32.xlu0 %v1140
      %v1142 = vpop.xlane.xlu0 %1141
      %v1143 = vsel %vm331, %v1111, 0.0
      %1144 = vadd.xlane.f32.xlu0 %v1143
      %v1145 = vpop.xlane.xlu0 %1144
      %v1146 = vsel %vm331, %v1113, 0.0
      %1147 = vadd.xlane.f32.xlu0 %v1146
      %v1148 = vpop.xlane.xlu0 %1147
      %v1149 = vsel %vm331, %v1115, 0.0
      %1150 = vadd.xlane.f32.xlu0 %v1149
      %v1151 = vpop.xlane.xlu0 %1150
      %v1152 = vsel %vm331, %v1117, 0.0
      %1153 = vadd.xlane.f32.xlu0 %v1152
      %v1154 = vpop.xlane.xlu0 %1153
      %v1155 = vsel %vm331, %v1119, 0.0
      %1156 = vadd.xlane.f32.xlu0 %v1155
      %v1157 = vpop.xlane.xlu0 %1156
      %v1158 = vsel %vm331, %v1121, 0.0
      %1159 = vadd.xlane.f32.xlu0 %v1158
      %v1160 = vpop.xlane.xlu0 %1159
      %v1161 = vsel %vm331, %v1123, 0.0
      %1162 = vadd.xlane.f32.xlu0 %v1161
      %v1163 = vpop.xlane.xlu0 %1162
      %v1164 = vsel %vm331, %v1125, 0.0
      %1165 = vadd.xlane.f32.xlu0 %v1164
      %v1166 = vpop.xlane.xlu0 %1165
      %v1167 = vsel %vm331, %v1127, 0.0
      %1168 = vadd.xlane.f32.xlu0 %v1167
      %v1169 = vpop.xlane.xlu0 %1168
      %v1170 = vsel %vm331, %v1129, 0.0
      %1171 = vadd.xlane.f32.xlu0 %v1170
      %v1172 = vpop.xlane.xlu0 %1171
      %v1173 = vsel %vm331, %v1131, 0.0
      %1174 = vadd.xlane.f32.xlu0 %v1173
      %v1175 = vpop.xlane.xlu0 %1174
      %v1176 = vsel %vm331, %v1133, 0.0
      %1177 = vadd.xlane.f32.xlu0 %v1176
      %v1178 = vpop.xlane.xlu0 %1177
      %v1179 = vsel %vm331, %v1135, 0.0
      %1180 = vadd.xlane.f32.xlu0 %v1179
      %v1181 = vpop.xlane.xlu0 %1180
      %v1182 = vsel %vm331, %v1137, 0.0
      %1183 = vadd.xlane.f32.xlu0 %v1182
      %v1184 = vpop.xlane.xlu0 %1183
      %v1185 = vsel %vm331, %v1139, 0.0
      %1186 = vadd.xlane.f32.xlu0 %v1185
      %v1187 = vpop.xlane.xlu0 %1186
      %v1188 = vrcp.pop %v1142
      %v1189 = vrcp.pop %v1145
      %v1190 = vrcp.pop %v1148
      %v1191 = vrcp.pop %v1151
      %v1192 = vrcp.pop %v1154
      %v1193 = vrcp.pop %v1157
      %v1194 = vrcp.pop %v1160
      %v1195 = vrcp.pop %v1163
      %v1196 = vrcp.pop %v1166
      %v1197 = vrcp.pop %v1169
      %v1198 = vrcp.pop %v1172
      %v1199 = vrcp.pop %v1175
      %v1200 = vrcp.pop %v1178
      %v1201 = vrcp.pop %v1181
      %v1202 = vrcp.pop %v1184
      %v1203 = vrcp.pop %v1187
      %v1204 = vmul.f32 %v1109, %v1188
      %v1205 = vmul.f32 %v1111, %v1189
      %v1206 = vmul.f32 %v1113, %v1190
      %v1207 = vmul.f32 %v1115, %v1191
      %v1208 = vmul.f32 %v1117, %v1192
      %v1209 = vmul.f32 %v1119, %v1193
      %v1210 = vmul.f32 %v1121, %v1194
      %v1211 = vmul.f32 %v1123, %v1195
      %v1212 = vmul.f32 %v1125, %v1196
      %v1213 = vmul.f32 %v1127, %v1197
      %v1214 = vmul.f32 %v1129, %v1198
      %v1215 = vmul.f32 %v1131, %v1199
      %v1216 = vmul.f32 %v1133, %v1200
      %v1217 = vmul.f32 %v1135, %v1201
      %v1218 = vmul.f32 %v1137, %v1202
      %v1219 = vmul.f32 %v1139, %v1203
      %v1221 = vsel %vm331, %v315, 0
      %v1224 = vsel %vm331, %v316, 0
      %1226 = vmatprep.subr.mxu0 0.0
      %1227 = vmatpush1.msra.mxu0 %v282
      %1228 = vmatprep.subr.mxu0 0.0
      %1229 = vmatpush1.msra.mxu0 %v283
      %1230 = vmatprep.subr.mxu0 0.0
      %1231 = vmatpush1.msra.mxu0 0.0
      %1232 = vmatprep.subr.mxu0 0.0
      %1233 = vmatpush1.msra.mxu0 0.0
      %1234 = vmatprep.subr.mxu0 0.0
      %1235 = vmatpush1.msra.mxu0 0.0
      %1236 = vmatprep.subr.mxu0 0.0
      %1237 = vmatpush1.msra.mxu0 0.0
      %1238 = vmatprep.subr.mxu0 0.0
      %1239 = vmatpush1.msra.mxu0 0.0
      %1240 = vmatprep.subr.mxu0 0.0
      %1241 = vmatpush1.msra.mxu0 0.0
      %1242 = vmatprep.subr.mxu0 0.0
      %1243 = vmatpush1.msra.mxu0 0.0
      %1244 = vmatprep.subr.mxu0 0.0
      %1245 = vmatpush1.msra.mxu0 0.0
      %1246 = vmatprep.subr.mxu0 0.0
      %1247 = vmatpush1.msra.mxu0 0.0
      %1248 = vmatprep.subr.mxu0 0.0
      %1249 = vmatpush1.msra.mxu0 0.0
      %1250 = vmatprep.subr.mxu0 0.0
      %1251 = vmatpush1.msra.mxu0 0.0
      %1252 = vmatprep.subr.mxu0 0.0
      %1253 = vmatpush1.msra.mxu0 0.0
      %1254 = vmatprep.subr.mxu0 0.0
      %1255 = vmatpush1.msra.mxu0 0.0
      %1256 = vmatprep.subr.mxu0 0.0
      %1257 = vmatpush1.msra.mxu0 0.0
      %1258 = vmatprep.subr.mxu0 0.0
      %1259 = vmatpush1.msra.mxu0 0.0
      %1260 = vmatprep.subr.mxu0 0.0
      %1261 = vmatpush1.msra.mxu0 0.0
      %1262 = vmatprep.subr.mxu0 0.0
      %1263 = vmatpush1.msra.mxu0 0.0
      %1264 = vmatprep.subr.mxu0 0.0
      %1265 = vmatpush1.msra.mxu0 0.0
      %1266 = vmatprep.subr.mxu0 0.0
      %1267 = vmatpush1.msra.mxu0 0.0
      %1268 = vmatprep.subr.mxu0 0.0
      %1269 = vmatpush1.msra.mxu0 0.0
      %1270 = vmatprep.subr.mxu0 0.0
      %1271 = vmatpush1.msra.mxu0 0.0
      %1272 = vmatprep.subr.mxu0 0.0
      %1273 = vmatpush1.msra.mxu0 0.0
      %1274 = vmatprep.subr.mxu0 0.0
      %1275 = vmatpush1.msra.mxu0 0.0
      %1276 = vmatprep.subr.mxu0 0.0
      %1277 = vmatpush1.msra.mxu0 0.0
      %1278 = vmatprep.subr.mxu0 0.0
      %1279 = vmatpush1.msra.mxu0 0.0
      %1280 = vmatprep.subr.mxu0 0.0
      %1281 = vmatpush1.msra.mxu0 0.0
      %1282 = vmatprep.subr.mxu0 0.0
      %1283 = vmatpush1.msra.mxu0 0.0
      %1284 = vmatprep.subr.mxu0 0.0
      %1285 = vmatpush1.msra.mxu0 0.0
      %1286 = vmatprep.subr.mxu0 0.0
      %1287 = vmatpush1.msra.mxu0 0.0
      %1288 = vmatprep.subr.mxu0 0.0
      %1289 = vmatpush1.msra.mxu0 0.0
      %1290 = vmatprep.mubr.f32.mxu0 0.0
      %1291 = vmatmul.mubr.f32.gmra.mrb[0].mxu0 %v1221
      %v1292 = vpop.f32.mrb[0].mxu0
      %v1293 = vadd.f32 0.0, %v1292
      %v1294 = vpop.f32.mrb[0].mxu0
      %1295 = vmatprep.mubr.f32.mxu0 0.0
      %1296 = vmatmul.mubr.f32.gmra.mrb[0].mxu0 %v1224
      %v1297 = vpop.f32.mrb[0].mxu0
      %v1298 = vadd.f32 0.0, %v1297
      %v1299 = vpop.f32.mrb[0].mxu0
      %1300 = vdwg.mxu0
      %v1302 = vsel %vm331, %v317, 0
      %v1305 = vsel %vm331, %v318, 0
      %1307 = vmatprep.subr.mxu0 0.0
      %1308 = vmatpush1.msra.mxu0 %v284
      %1309 = vmatprep.subr.mxu0 0.0
      %1310 = vmatpush1.msra.mxu0 %v285
      %1311 = vmatprep.subr.mxu0 0.0
      %1312 = vmatpush1.msra.mxu0 0.0
      %1313 = vmatprep.subr.mxu0 0.0
      %1314 = vmatpush1.msra.mxu0 0.0
      %1315 = vmatprep.subr.mxu0 0.0
      %1316 = vmatpush1.msra.mxu0 0.0
      %1317 = vmatprep.subr.mxu0 0.0
      %1318 = vmatpush1.msra.mxu0 0.0
      %1319 = vmatprep.subr.mxu0 0.0
      %1320 = vmatpush1.msra.mxu0 0.0
      %1321 = vmatprep.subr.mxu0 0.0
      %1322 = vmatpush1.msra.mxu0 0.0
      %1323 = vmatprep.subr.mxu0 0.0
      %1324 = vmatpush1.msra.mxu0 0.0
      %1325 = vmatprep.subr.mxu0 0.0
      %1326 = vmatpush1.msra.mxu0 0.0
      %1327 = vmatprep.subr.mxu0 0.0
      %1328 = vmatpush1.msra.mxu0 0.0
      %1329 = vmatprep.subr.mxu0 0.0
      %1330 = vmatpush1.msra.mxu0 0.0
      %1331 = vmatprep.subr.mxu0 0.0
      %1332 = vmatpush1.msra.mxu0 0.0
      %1333 = vmatprep.subr.mxu0 0.0
      %1334 = vmatpush1.msra.mxu0 0.0
      %1335 = vmatprep.subr.mxu0 0.0
      %1336 = vmatpush1.msra.mxu0 0.0
      %1337 = vmatprep.subr.mxu0 0.0
      %1338 = vmatpush1.msra.mxu0 0.0
      %1339 = vmatprep.subr.mxu0 0.0
      %1340 = vmatpush1.msra.mxu0 0.0
      %1341 = vmatprep.subr.mxu0 0.0
      %1342 = vmatpush1.msra.mxu0 0.0
      %1343 = vmatprep.subr.mxu0 0.0
      %1344 = vmatpush1.msra.mxu0 0.0
      %1345 = vmatprep.subr.mxu0 0.0
      %1346 = vmatpush1.msra.mxu0 0.0
      %1347 = vmatprep.subr.mxu0 0.0
      %1348 = vmatpush1.msra.mxu0 0.0
      %1349 = vmatprep.subr.mxu0 0.0
      %1350 = vmatpush1.msra.mxu0 0.0
      %1351 = vmatprep.subr.mxu0 0.0
      %1352 = vmatpush1.msra.mxu0 0.0
      %1353 = vmatprep.subr.mxu0 0.0
      %1354 = vmatpush1.msra.mxu0 0.0
      %1355 = vmatprep.subr.mxu0 0.0
      %1356 = vmatpush1.msra.mxu0 0.0
      %1357 = vmatprep.subr.mxu0 0.0
      %1358 = vmatpush1.msra.mxu0 0.0
      %1359 = vmatprep.subr.mxu0 0.0
      %1360 = vmatpush1.msra.mxu0 0.0
      %1361 = vmatprep.subr.mxu0 0.0
      %1362 = vmatpush1.msra.mxu0 0.0
      %1363 = vmatprep.subr.mxu0 0.0
      %1364 = vmatpush1.msra.mxu0 0.0
      %1365 = vmatprep.subr.mxu0 0.0
      %1366 = vmatpush1.msra.mxu0 0.0
      %1367 = vmatprep.subr.mxu0 0.0
      %1368 = vmatpush1.msra.mxu0 0.0
      %1369 = vmatprep.subr.mxu0 0.0
      %1370 = vmatpush1.msra.mxu0 0.0
      %1371 = vmatprep.mubr.f32.mxu0 0.0
      %1372 = vmatmul.mubr.f32.gmra.mrb[0].mxu0 %v1302
      %v1373 = vpop.f32.mrb[0].mxu0
      %v1374 = vadd.f32 0.0, %v1373
      %v1375 = vpop.f32.mrb[0].mxu0
      %1376 = vmatprep.mubr.f32.mxu0 0.0
      %1377 = vmatmul.mubr.f32.gmra.mrb[0].mxu0 %v1305
      %v1378 = vpop.f32.mrb[0].mxu0
      %v1379 = vadd.f32 0.0, %v1378
      %v1380 = vpop.f32.mrb[0].mxu0
      %1381 = vdwg.mxu0
      %v1383 = vsel %vm331, %v319, 0
      %v1386 = vsel %vm331, %v320, 0
      %1388 = vmatprep.subr.mxu0 0.0
      %1389 = vmatpush1.msra.mxu0 %v286
      %1390 = vmatprep.subr.mxu0 0.0
      %1391 = vmatpush1.msra.mxu0 %v287
      %1392 = vmatprep.subr.mxu0 0.0
      %1393 = vmatpush1.msra.mxu0 0.0
      %1394 = vmatprep.subr.mxu0 0.0
      %1395 = vmatpush1.msra.mxu0 0.0
      %1396 = vmatprep.subr.mxu0 0.0
      %1397 = vmatpush1.msra.mxu0 0.0
      %1398 = vmatprep.subr.mxu0 0.0
      %1399 = vmatpush1.msra.mxu0 0.0
      %1400 = vmatprep.subr.mxu0 0.0
      %1401 = vmatpush1.msra.mxu0 0.0
      %1402 = vmatprep.subr.mxu0 0.0
      %1403 = vmatpush1.msra.mxu0 0.0
      %1404 = vmatprep.subr.mxu0 0.0
      %1405 = vmatpush1.msra.mxu0 0.0
      %1406 = vmatprep.subr.mxu0 0.0
      %1407 = vmatpush1.msra.mxu0 0.0
      %1408 = vmatprep.subr.mxu0 0.0
      %1409 = vmatpush1.msra.mxu0 0.0
      %1410 = vmatprep.subr.mxu0 0.0
      %1411 = vmatpush1.msra.mxu0 0.0
      %1412 = vmatprep.subr.mxu0 0.0
      %1413 = vmatpush1.msra.mxu0 0.0
      %1414 = vmatprep.subr.mxu0 0.0
      %1415 = vmatpush1.msra.mxu0 0.0
      %1416 = vmatprep.subr.mxu0 0.0
      %1417 = vmatpush1.msra.mxu0 0.0
      %1418 = vmatprep.subr.mxu0 0.0
      %1419 = vmatpush1.msra.mxu0 0.0
      %1420 = vmatprep.subr.mxu0 0.0
      %1421 = vmatpush1.msra.mxu0 0.0
      %1422 = vmatprep.subr.mxu0 0.0
      %1423 = vmatpush1.msra.mxu0 0.0
      %1424 = vmatprep.subr.mxu0 0.0
      %1425 = vmatpush1.msra.mxu0 0.0
      %1426 = vmatprep.subr.mxu0 0.0
      %1427 = vmatpush1.msra.mxu0 0.0
      %1428 = vmatprep.subr.mxu0 0.0
      %1429 = vmatpush1.msra.mxu0 0.0
      %1430 = vmatprep.subr.mxu0 0.0
      %1431 = vmatpush1.msra.mxu0 0.0
      %1432 = vmatprep.subr.mxu0 0.0
      %1433 = vmatpush1.msra.mxu0 0.0
      %1434 = vmatprep.subr.mxu0 0.0
      %1435 = vmatpush1.msra.mxu0 0.0
      %1436 = vmatprep.subr.mxu0 0.0
      %1437 = vmatpush1.msra.mxu0 0.0
      %1438 = vmatprep.subr.mxu0 0.0
      %1439 = vmatpush1.msra.mxu0 0.0
      %1440 = vmatprep.subr.mxu0 0.0
      %1441 = vmatpush1.msra.mxu0 0.0
      %1442 = vmatprep.subr.mxu0 0.0
      %1443 = vmatpush1.msra.mxu0 0.0
      %1444 = vmatprep.subr.mxu0 0.0
      %1445 = vmatpush1.msra.mxu0 0.0
      %1446 = vmatprep.subr.mxu0 0.0
      %1447 = vmatpush1.msra.mxu0 0.0
      %1448 = vmatprep.subr.mxu0 0.0
      %1449 = vmatpush1.msra.mxu0 0.0
      %1450 = vmatprep.subr.mxu0 0.0
      %1451 = vmatpush1.msra.mxu0 0.0
      %1452 = vmatprep.mubr.f32.mxu0 0.0
      %1453 = vmatmul.mubr.f32.gmra.mrb[0].mxu0 %v1383
      %v1454 = vpop.f32.mrb[0].mxu0
      %v1455 = vadd.f32 0.0, %v1454
      %v1456 = vpop.f32.mrb[0].mxu0
      %1457 = vmatprep.mubr.f32.mxu0 0.0
      %1458 = vmatmul.mubr.f32.gmra.mrb[0].mxu0 %v1386
      %v1459 = vpop.f32.mrb[0].mxu0
      %v1460 = vadd.f32 0.0, %v1459
      %v1461 = vpop.f32.mrb[0].mxu0
      %1462 = vdwg.mxu0
      %v1464 = vsel %vm331, %v321, 0
      %v1467 = vsel %vm331, %v322, 0
      %1469 = vmatprep.subr.mxu0 0.0
      %1470 = vmatpush1.msra.mxu0 %v288
      %1471 = vmatprep.subr.mxu0 0.0
      %1472 = vmatpush1.msra.mxu0 %v289
      %1473 = vmatprep.subr.mxu0 0.0
      %1474 = vmatpush1.msra.mxu0 0.0
      %1475 = vmatprep.subr.mxu0 0.0
      %1476 = vmatpush1.msra.mxu0 0.0
      %1477 = vmatprep.subr.mxu0 0.0
      %1478 = vmatpush1.msra.mxu0 0.0
      %1479 = vmatprep.subr.mxu0 0.0
      %1480 = vmatpush1.msra.mxu0 0.0
      %1481 = vmatprep.subr.mxu0 0.0
      %1482 = vmatpush1.msra.mxu0 0.0
      %1483 = vmatprep.subr.mxu0 0.0
      %1484 = vmatpush1.msra.mxu0 0.0
      %1485 = vmatprep.subr.mxu0 0.0
      %1486 = vmatpush1.msra.mxu0 0.0
      %1487 = vmatprep.subr.mxu0 0.0
      %1488 = vmatpush1.msra.mxu0 0.0
      %1489 = vmatprep.subr.mxu0 0.0
      %1490 = vmatpush1.msra.mxu0 0.0
      %1491 = vmatprep.subr.mxu0 0.0
      %1492 = vmatpush1.msra.mxu0 0.0
      %1493 = vmatprep.subr.mxu0 0.0
      %1494 = vmatpush1.msra.mxu0 0.0
      %1495 = vmatprep.subr.mxu0 0.0
      %1496 = vmatpush1.msra.mxu0 0.0
      %1497 = vmatprep.subr.mxu0 0.0
      %1498 = vmatpush1.msra.mxu0 0.0
      %1499 = vmatprep.subr.mxu0 0.0
      %1500 = vmatpush1.msra.mxu0 0.0
      %1501 = vmatprep.subr.mxu0 0.0
      %1502 = vmatpush1.msra.mxu0 0.0
      %1503 = vmatprep.subr.mxu0 0.0
      %1504 = vmatpush1.msra.mxu0 0.0
      %1505 = vmatprep.subr.mxu0 0.0
      %1506 = vmatpush1.msra.mxu0 0.0
      %1507 = vmatprep.subr.mxu0 0.0
      %1508 = vmatpush1.msra.mxu0 0.0
      %1509 = vmatprep.subr.mxu0 0.0
      %1510 = vmatpush1.msra.mxu0 0.0
      %1511 = vmatprep.subr.mxu0 0.0
      %1512 = vmatpush1.msra.mxu0 0.0
      %1513 = vmatprep.subr.mxu0 0.0
      %1514 = vmatpush1.msra.mxu0 0.0
      %1515 = vmatprep.subr.mxu0 0.0
      %1516 = vmatpush1.msra.mxu0 0.0
      %1517 = vmatprep.subr.mxu0 0.0
      %1518 = vmatpush1.msra.mxu0 0.0
      %1519 = vmatprep.subr.mxu0 0.0
      %1520 = vmatpush1.msra.mxu0 0.0
      %1521 = vmatprep.subr.mxu0 0.0
      %1522 = vmatpush1.msra.mxu0 0.0
      %1523 = vmatprep.subr.mxu0 0.0
      %1524 = vmatpush1.msra.mxu0 0.0
      %1525 = vmatprep.subr.mxu0 0.0
      %1526 = vmatpush1.msra.mxu0 0.0
      %1527 = vmatprep.subr.mxu0 0.0
      %1528 = vmatpush1.msra.mxu0 0.0
      %1529 = vmatprep.subr.mxu0 0.0
      %1530 = vmatpush1.msra.mxu0 0.0
      %1531 = vmatprep.subr.mxu0 0.0
      %1532 = vmatpush1.msra.mxu0 0.0
      %1533 = vmatprep.mubr.f32.mxu0 0.0
      %1534 = vmatmul.mubr.f32.gmra.mrb[0].mxu0 %v1464
      %v1535 = vpop.f32.mrb[0].mxu0
      %v1536 = vadd.f32 0.0, %v1535
      %v1537 = vpop.f32.mrb[0].mxu0
      %1538 = vmatprep.mubr.f32.mxu0 0.0
      %1539 = vmatmul.mubr.f32.gmra.mrb[0].mxu0 %v1467
      %v1540 = vpop.f32.mrb[0].mxu0
      %v1541 = vadd.f32 0.0, %v1540
      %v1542 = vpop.f32.mrb[0].mxu0
      %1543 = vdwg.mxu0
      %v1545 = vsel %vm331, %v323, 0
      %v1548 = vsel %vm331, %v324, 0
      %1550 = vmatprep.subr.mxu0 0.0
      %1551 = vmatpush1.msra.mxu0 %v290
      %1552 = vmatprep.subr.mxu0 0.0
      %1553 = vmatpush1.msra.mxu0 %v291
      %1554 = vmatprep.subr.mxu0 0.0
      %1555 = vmatpush1.msra.mxu0 0.0
      %1556 = vmatprep.subr.mxu0 0.0
      %1557 = vmatpush1.msra.mxu0 0.0
      %1558 = vmatprep.subr.mxu0 0.0
      %1559 = vmatpush1.msra.mxu0 0.0
      %1560 = vmatprep.subr.mxu0 0.0
      %1561 = vmatpush1.msra.mxu0 0.0
      %1562 = vmatprep.subr.mxu0 0.0
      %1563 = vmatpush1.msra.mxu0 0.0
      %1564 = vmatprep.subr.mxu0 0.0
      %1565 = vmatpush1.msra.mxu0 0.0
      %1566 = vmatprep.subr.mxu0 0.0
      %1567 = vmatpush1.msra.mxu0 0.0
      %1568 = vmatprep.subr.mxu0 0.0
      %1569 = vmatpush1.msra.mxu0 0.0
      %1570 = vmatprep.subr.mxu0 0.0
      %1571 = vmatpush1.msra.mxu0 0.0
      %1572 = vmatprep.subr.mxu0 0.0
      %1573 = vmatpush1.msra.mxu0 0.0
      %1574 = vmatprep.subr.mxu0 0.0
      %1575 = vmatpush1.msra.mxu0 0.0
      %1576 = vmatprep.subr.mxu0 0.0
      %1577 = vmatpush1.msra.mxu0 0.0
      %1578 = vmatprep.subr.mxu0 0.0
      %1579 = vmatpush1.msra.mxu0 0.0
      %1580 = vmatprep.subr.mxu0 0.0
      %1581 = vmatpush1.msra.mxu0 0.0
      %1582 = vmatprep.subr.mxu0 0.0
      %1583 = vmatpush1.msra.mxu0 0.0
      %1584 = vmatprep.subr.mxu0 0.0
      %1585 = vmatpush1.msra.mxu0 0.0
      %1586 = vmatprep.subr.mxu0 0.0
      %1587 = vmatpush1.msra.mxu0 0.0
      %1588 = vmatprep.subr.mxu0 0.0
      %1589 = vmatpush1.msra.mxu0 0.0
      %1590 = vmatprep.subr.mxu0 0.0
      %1591 = vmatpush1.msra.mxu0 0.0
      %1592 = vmatprep.subr.mxu0 0.0
      %1593 = vmatpush1.msra.mxu0 0.0
      %1594 = vmatprep.subr.mxu0 0.0
      %1595 = vmatpush1.msra.mxu0 0.0
      %1596 = vmatprep.subr.mxu0 0.0
      %1597 = vmatpush1.msra.mxu0 0.0
      %1598 = vmatprep.subr.mxu0 0.0
      %1599 = vmatpush1.msra.mxu0 0.0
      %1600 = vmatprep.subr.mxu0 0.0
      %1601 = vmatpush1.msra.mxu0 0.0
      %1602 = vmatprep.subr.mxu0 0.0
      %1603 = vmatpush1.msra.mxu0 0.0
      %1604 = vmatprep.subr.mxu0 0.0
      %1605 = vmatpush1.msra.mxu0 0.0
      %1606 = vmatprep.subr.mxu0 0.0
      %1607 = vmatpush1.msra.mxu0 0.0
      %1608 = vmatprep.subr.mxu0 0.0
      %1609 = vmatpush1.msra.mxu0 0.0
      %1610 = vmatprep.subr.mxu0 0.0
      %1611 = vmatpush1.msra.mxu0 0.0
      %1612 = vmatprep.subr.mxu0 0.0
      %1613 = vmatpush1.msra.mxu0 0.0
      %1614 = vmatprep.mubr.f32.mxu0 0.0
      %1615 = vmatmul.mubr.f32.gmra.mrb[0].mxu0 %v1545
      %v1616 = vpop.f32.mrb[0].mxu0
      %v1617 = vadd.f32 0.0, %v1616
      %v1618 = vpop.f32.mrb[0].mxu0
      %1619 = vmatprep.mubr.f32.mxu0 0.0
      %1620 = vmatmul.mubr.f32.gmra.mrb[0].mxu0 %v1548
      %v1621 = vpop.f32.mrb[0].mxu0
      %v1622 = vadd.f32 0.0, %v1621
      %v1623 = vpop.f32.mrb[0].mxu0
      %1624 = vdwg.mxu0
      %v1626 = vsel %vm331, %v325, 0
      %v1629 = vsel %vm331, %v326, 0
      %1631 = vmatprep.subr.mxu0 0.0
      %1632 = vmatpush1.msra.mxu0 %v292
      %1633 = vmatprep.subr.mxu0 0.0
      %1634 = vmatpush1.msra.mxu0 %v293
      %1635 = vmatprep.subr.mxu0 0.0
      %1636 = vmatpush1.msra.mxu0 0.0
      %1637 = vmatprep.subr.mxu0 0.0
      %1638 = vmatpush1.msra.mxu0 0.0
      %1639 = vmatprep.subr.mxu0 0.0
      %1640 = vmatpush1.msra.mxu0 0.0
      %1641 = vmatprep.subr.mxu0 0.0
      %1642 = vmatpush1.msra.mxu0 0.0
      %1643 = vmatprep.subr.mxu0 0.0
      %1644 = vmatpush1.msra.mxu0 0.0
      %1645 = vmatprep.subr.mxu0 0.0
      %1646 = vmatpush1.msra.mxu0 0.0
      %1647 = vmatprep.subr.mxu0 0.0
      %1648 = vmatpush1.msra.mxu0 0.0
      %1649 = vmatprep.subr.mxu0 0.0
      %1650 = vmatpush1.msra.mxu0 0.0
      %1651 = vmatprep.subr.mxu0 0.0
      %1652 = vmatpush1.msra.mxu0 0.0
      %1653 = vmatprep.subr.mxu0 0.0
      %1654 = vmatpush1.msra.mxu0 0.0
      %1655 = vmatprep.subr.mxu0 0.0
      %1656 = vmatpush1.msra.mxu0 0.0
      %1657 = vmatprep.subr.mxu0 0.0
      %1658 = vmatpush1.msra.mxu0 0.0
      %1659 = vmatprep.subr.mxu0 0.0
      %1660 = vmatpush1.msra.mxu0 0.0
      %1661 = vmatprep.subr.mxu0 0.0
      %1662 = vmatpush1.msra.mxu0 0.0
      %1663 = vmatprep.subr.mxu0 0.0
      %1664 = vmatpush1.msra.mxu0 0.0
      %1665 = vmatprep.subr.mxu0 0.0
      %1666 = vmatpush1.msra.mxu0 0.0
      %1667 = vmatprep.subr.mxu0 0.0
      %1668 = vmatpush1.msra.mxu0 0.0
      %1669 = vmatprep.subr.mxu0 0.0
      %1670 = vmatpush1.msra.mxu0 0.0
      %1671 = vmatprep.subr.mxu0 0.0
      %1672 = vmatpush1.msra.mxu0 0.0
      %1673 = vmatprep.subr.mxu0 0.0
      %1674 = vmatpush1.msra.mxu0 0.0
      %1675 = vmatprep.subr.mxu0 0.0
      %1676 = vmatpush1.msra.mxu0 0.0
      %1677 = vmatprep.subr.mxu0 0.0
      %1678 = vmatpush1.msra.mxu0 0.0
      %1679 = vmatprep.subr.mxu0 0.0
      %1680 = vmatpush1.msra.mxu0 0.0
      %1681 = vmatprep.subr.mxu0 0.0
      %1682 = vmatpush1.msra.mxu0 0.0
      %1683 = vmatprep.subr.mxu0 0.0
      %1684 = vmatpush1.msra.mxu0 0.0
      %1685 = vmatprep.subr.mxu0 0.0
      %1686 = vmatpush1.msra.mxu0 0.0
      %1687 = vmatprep.subr.mxu0 0.0
      %1688 = vmatpush1.msra.mxu0 0.0
      %1689 = vmatprep.subr.mxu0 0.0
      %1690 = vmatpush1.msra.mxu0 0.0
      %1691 = vmatprep.subr.mxu0 0.0
      %1692 = vmatpush1.msra.mxu0 0.0
      %1693 = vmatprep.subr.mxu0 0.0
      %1694 = vmatpush1.msra.mxu0 0.0
      %1695 = vmatprep.mubr.f32.mxu0 0.0
      %1696 = vmatmul.mubr.f32.gmra.mrb[0].mxu0 %v1626
      %v1697 = vpop.f32.mrb[0].mxu0
      %v1698 = vadd.f32 0.0, %v1697
      %v1699 = vpop.f32.mrb[0].mxu0
      %1700 = vmatprep.mubr.f32.mxu0 0.0
      %1701 = vmatmul.mubr.f32.gmra.mrb[0].mxu0 %v1629
      %v1702 = vpop.f32.mrb[0].mxu0
      %v1703 = vadd.f32 0.0, %v1702
      %v1704 = vpop.f32.mrb[0].mxu0
      %1705 = vdwg.mxu0
      %v1707 = vsel %vm331, %v327, 0
      %v1710 = vsel %vm331, %v328, 0
      %1712 = vmatprep.subr.mxu0 0.0
      %1713 = vmatpush1.msra.mxu0 %v294
      %1714 = vmatprep.subr.mxu0 0.0
      %1715 = vmatpush1.msra.mxu0 %v295
      %1716 = vmatprep.subr.mxu0 0.0
      %1717 = vmatpush1.msra.mxu0 0.0
      %1718 = vmatprep.subr.mxu0 0.0
      %1719 = vmatpush1.msra.mxu0 0.0
      %1720 = vmatprep.subr.mxu0 0.0
      %1721 = vmatpush1.msra.mxu0 0.0
      %1722 = vmatprep.subr.mxu0 0.0
      %1723 = vmatpush1.msra.mxu0 0.0
      %1724 = vmatprep.subr.mxu0 0.0
      %1725 = vmatpush1.msra.mxu0 0.0
      %1726 = vmatprep.subr.mxu0 0.0
      %1727 = vmatpush1.msra.mxu0 0.0
      %1728 = vmatprep.subr.mxu0 0.0
      %1729 = vmatpush1.msra.mxu0 0.0
      %1730 = vmatprep.subr.mxu0 0.0
      %1731 = vmatpush1.msra.mxu0 0.0
      %1732 = vmatprep.subr.mxu0 0.0
      %1733 = vmatpush1.msra.mxu0 0.0
      %1734 = vmatprep.subr.mxu0 0.0
      %1735 = vmatpush1.msra.mxu0 0.0
      %1736 = vmatprep.subr.mxu0 0.0
      %1737 = vmatpush1.msra.mxu0 0.0
      %1738 = vmatprep.subr.mxu0 0.0
      %1739 = vmatpush1.msra.mxu0 0.0
      %1740 = vmatprep.subr.mxu0 0.0
      %1741 = vmatpush1.msra.mxu0 0.0
      %1742 = vmatprep.subr.mxu0 0.0
      %1743 = vmatpush1.msra.mxu0 0.0
      %1744 = vmatprep.subr.mxu0 0.0
      %1745 = vmatpush1.msra.mxu0 0.0
      %1746 = vmatprep.subr.mxu0 0.0
      %1747 = vmatpush1.msra.mxu0 0.0
      %1748 = vmatprep.subr.mxu0 0.0
      %1749 = vmatpush1.msra.mxu0 0.0
      %1750 = vmatprep.subr.mxu0 0.0
      %1751 = vmatpush1.msra.mxu0 0.0
      %1752 = vmatprep.subr.mxu0 0.0
      %1753 = vmatpush1.msra.mxu0 0.0
      %1754 = vmatprep.subr.mxu0 0.0
      %1755 = vmatpush1.msra.mxu0 0.0
      %1756 = vmatprep.subr.mxu0 0.0
      %1757 = vmatpush1.msra.mxu0 0.0
      %1758 = vmatprep.subr.mxu0 0.0
      %1759 = vmatpush1.msra.mxu0 0.0
      %1760 = vmatprep.subr.mxu0 0.0
      %1761 = vmatpush1.msra.mxu0 0.0
      %1762 = vmatprep.subr.mxu0 0.0
      %1763 = vmatpush1.msra.mxu0 0.0
      %1764 = vmatprep.subr.mxu0 0.0
      %1765 = vmatpush1.msra.mxu0 0.0
      %1766 = vmatprep.subr.mxu0 0.0
      %1767 = vmatpush1.msra.mxu0 0.0
      %1768 = vmatprep.subr.mxu0 0.0
      %1769 = vmatpush1.msra.mxu0 0.0
      %1770 = vmatprep.subr.mxu0 0.0
      %1771 = vmatpush1.msra.mxu0 0.0
      %1772 = vmatprep.subr.mxu0 0.0
      %1773 = vmatpush1.msra.mxu0 0.0
      %1774 = vmatprep.subr.mxu0 0.0
      %1775 = vmatpush1.msra.mxu0 0.0
      %1776 = vmatprep.mubr.f32.mxu0 0.0
      %1777 = vmatmul.mubr.f32.gmra.mrb[0].mxu0 %v1707
      %v1778 = vpop.f32.mrb[0].mxu0
      %v1779 = vadd.f32 0.0, %v1778
      %v1780 = vpop.f32.mrb[0].mxu0
      %1781 = vmatprep.mubr.f32.mxu0 0.0
      %1782 = vmatmul.mubr.f32.gmra.mrb[0].mxu0 %v1710
      %v1783 = vpop.f32.mrb[0].mxu0
      %v1784 = vadd.f32 0.0, %v1783
      %v1785 = vpop.f32.mrb[0].mxu0
      %1786 = vdwg.mxu0
      %v1788 = vsel %vm331, %v329, 0
      %v1791 = vsel %vm331, %v330, 0
      %1793 = vmatprep.subr.mxu0 0.0
      %1794 = vmatpush1.msra.mxu0 %v296
      %1795 = vmatprep.subr.mxu0 0.0
      %1796 = vmatpush1.msra.mxu0 %v297
      %1797 = vmatprep.subr.mxu0 0.0
      %1798 = vmatpush1.msra.mxu0 0.0
      %1799 = vmatprep.subr.mxu0 0.0
      %1800 = vmatpush1.msra.mxu0 0.0
      %1801 = vmatprep.subr.mxu0 0.0
      %1802 = vmatpush1.msra.mxu0 0.0
      %1803 = vmatprep.subr.mxu0 0.0
      %1804 = vmatpush1.msra.mxu0 0.0
      %1805 = vmatprep.subr.mxu0 0.0
      %1806 = vmatpush1.msra.mxu0 0.0
      %1807 = vmatprep.subr.mxu0 0.0
      %1808 = vmatpush1.msra.mxu0 0.0
      %1809 = vmatprep.subr.mxu0 0.0
      %1810 = vmatpush1.msra.mxu0 0.0
      %1811 = vmatprep.subr.mxu0 0.0
      %1812 = vmatpush1.msra.mxu0 0.0
      %1813 = vmatprep.subr.mxu0 0.0
      %1814 = vmatpush1.msra.mxu0 0.0
      %1815 = vmatprep.subr.mxu0 0.0
      %1816 = vmatpush1.msra.mxu0 0.0
      %1817 = vmatprep.subr.mxu0 0.0
      %1818 = vmatpush1.msra.mxu0 0.0
      %1819 = vmatprep.subr.mxu0 0.0
      %1820 = vmatpush1.msra.mxu0 0.0
      %1821 = vmatprep.subr.mxu0 0.0
      %1822 = vmatpush1.msra.mxu0 0.0
      %1823 = vmatprep.subr.mxu0 0.0
      %1824 = vmatpush1.msra.mxu0 0.0
      %1825 = vmatprep.subr.mxu0 0.0
      %1826 = vmatpush1.msra.mxu0 0.0
      %1827 = vmatprep.subr.mxu0 0.0
      %1828 = vmatpush1.msra.mxu0 0.0
      %1829 = vmatprep.subr.mxu0 0.0
      %1830 = vmatpush1.msra.mxu0 0.0
      %1831 = vmatprep.subr.mxu0 0.0
      %1832 = vmatpush1.msra.mxu0 0.0
      %1833 = vmatprep.subr.mxu0 0.0
      %1834 = vmatpush1.msra.mxu0 0.0
      %1835 = vmatprep.subr.mxu0 0.0
      %1836 = vmatpush1.msra.mxu0 0.0
      %1837 = vmatprep.subr.mxu0 0.0
      %1838 = vmatpush1.msra.mxu0 0.0
      %1839 = vmatprep.subr.mxu0 0.0
      %1840 = vmatpush1.msra.mxu0 0.0
      %1841 = vmatprep.subr.mxu0 0.0
      %1842 = vmatpush1.msra.mxu0 0.0
      %1843 = vmatprep.subr.mxu0 0.0
      %1844 = vmatpush1.msra.mxu0 0.0
      %1845 = vmatprep.subr.mxu0 0.0
      %1846 = vmatpush1.msra.mxu0 0.0
      %1847 = vmatprep.subr.mxu0 0.0
      %1848 = vmatpush1.msra.mxu0 0.0
      %1849 = vmatprep.subr.mxu0 0.0
      %1850 = vmatpush1.msra.mxu0 0.0
      %1851 = vmatprep.subr.mxu0 0.0
      %1852 = vmatpush1.msra.mxu0 0.0
      %1853 = vmatprep.subr.mxu0 0.0
      %1854 = vmatpush1.msra.mxu0 0.0
      %1855 = vmatprep.subr.mxu0 0.0
      %1856 = vmatpush1.msra.mxu0 0.0
      %1857 = vmatprep.mubr.f32.mxu0 0.0
      %1858 = vmatmul.mubr.f32.gmra.mrb[0].mxu0 %v1788
      %v1859 = vpop.f32.mrb[0].mxu0
      %v1860 = vadd.f32 0.0, %v1859
      %v1861 = vpop.f32.mrb[0].mxu0
      %1862 = vmatprep.mubr.f32.mxu0 0.0
      %1863 = vmatmul.mubr.f32.gmra.mrb[0].mxu0 %v1791
      %v1864 = vpop.f32.mrb[0].mxu0
      %v1865 = vadd.f32 0.0, %v1864
      %v1866 = vpop.f32.mrb[0].mxu0
      %1867 = vdwg.mxu0
      %v1868 = vmul.f32 %v1293, 0.35355338
      %v1869 = vmul.f32 %v1298, 0.35355338
      %v1870 = vmul.f32 %v1374, 0.35355338
      %v1871 = vmul.f32 %v1379, 0.35355338
      %v1872 = vmul.f32 %v1455, 0.35355338
      %v1873 = vmul.f32 %v1460, 0.35355338
      %v1874 = vmul.f32 %v1536, 0.35355338
      %v1875 = vmul.f32 %v1541, 0.35355338
      %v1876 = vmul.f32 %v1617, 0.35355338
      %v1877 = vmul.f32 %v1622, 0.35355338
      %v1878 = vmul.f32 %v1698, 0.35355338
      %v1879 = vmul.f32 %v1703, 0.35355338
      %v1880 = vmul.f32 %v1779, 0.35355338
      %v1881 = vmul.f32 %v1784, 0.35355338
      %v1882 = vmul.f32 %v1860, 0.35355338
      %v1883 = vmul.f32 %v1865, 0.35355338
      %v1884 = vsel %vm331, %v1868, -inf
      %v1885 = vsel %vm331, %v1869, -inf
      %v1886 = vmax.f32 %v1884, %v1885
      %v1887 = vrot.slane %v1886, 4
      %v1888 = vmax.f32 %v1886, %v1887
      %v1889 = vrot.slane %v1888, 2
      %v1890 = vmax.f32 %v1888, %v1889
      %v1891 = vrot.slane %v1890, 1
      %v1892 = vmax.f32 %v1890, %v1891
      %v1893 = vsel %vm331, %v1870, -inf
      %v1894 = vsel %vm331, %v1871, -inf
      %v1895 = vmax.f32 %v1893, %v1894
      %v1896 = vrot.slane %v1895, 4
      %v1897 = vmax.f32 %v1895, %v1896
      %v1898 = vrot.slane %v1897, 2
      %v1899 = vmax.f32 %v1897, %v1898
      %v1900 = vrot.slane %v1899, 1
      %v1901 = vmax.f32 %v1899, %v1900
      %v1902 = vsel %vm331, %v1872, -inf
      %v1903 = vsel %vm331, %v1873, -inf
      %v1904 = vmax.f32 %v1902, %v1903
      %v1905 = vrot.slane %v1904, 4
      %v1906 = vmax.f32 %v1904, %v1905
      %v1907 = vrot.slane %v1906, 2
      %v1908 = vmax.f32 %v1906, %v1907
      %v1909 = vrot.slane %v1908, 1
      %v1910 = vmax.f32 %v1908, %v1909
      %v1911 = vsel %vm331, %v1874, -inf
      %v1912 = vsel %vm331, %v1875, -inf
      %v1913 = vmax.f32 %v1911, %v1912
      %v1914 = vrot.slane %v1913, 4
      %v1915 = vmax.f32 %v1913, %v1914
      %v1916 = vrot.slane %v1915, 2
      %v1917 = vmax.f32 %v1915, %v1916
      %v1918 = vrot.slane %v1917, 1
      %v1919 = vmax.f32 %v1917, %v1918
      %v1920 = vsel %vm331, %v1876, -inf
      %v1921 = vsel %vm331, %v1877, -inf
      %v1922 = vmax.f32 %v1920, %v1921
      %v1923 = vrot.slane %v1922, 4
      %v1924 = vmax.f32 %v1922, %v1923
      %v1925 = vrot.slane %v1924, 2
      %v1926 = vmax.f32 %v1924, %v1925
      %v1927 = vrot.slane %v1926, 1
      %v1928 = vmax.f32 %v1926, %v1927
      %v1929 = vsel %vm331, %v1878, -inf
      %v1930 = vsel %vm331, %v1879, -inf
      %v1931 = vmax.f32 %v1929, %v1930
      %v1932 = vrot.slane %v1931, 4
      %v1933 = vmax.f32 %v1931, %v1932
      %v1934 = vrot.slane %v1933, 2
      %v1935 = vmax.f32 %v1933, %v1934
      %v1936 = vrot.slane %v1935, 1
      %v1937 = vmax.f32 %v1935, %v1936
      %v1938 = vsel %vm331, %v1880, -inf
      %v1939 = vsel %vm331, %v1881, -inf
      %v1940 = vmax.f32 %v1938, %v1939
      %v1941 = vrot.slane %v1940, 4
      %v1942 = vmax.f32 %v1940, %v1941
      %v1943 = vrot.slane %v1942, 2
      %v1944 = vmax.f32 %v1942, %v1943
      %v1945 = vrot.slane %v1944, 1
      %v1946 = vmax.f32 %v1944, %v1945
      %v1947 = vsel %vm331, %v1882, -inf
      %v1948 = vsel %vm331, %v1883, -inf
      %v1949 = vmax.f32 %v1947, %v1948
      %v1950 = vrot.slane %v1949, 4
      %v1951 = vmax.f32 %v1949, %v1950
      %v1952 = vrot.slane %v1951, 2
      %v1953 = vmax.f32 %v1951, %v1952
      %v1954 = vrot.slane %v1953, 1
      %v1955 = vmax.f32 %v1953, %v1954
      %v1956 = vsub.f32 %v1868, %v1892
      %v1957 = vsub.f32 %v1869, %v1892
      %v1958 = vsub.f32 %v1870, %v1901
      %v1959 = vsub.f32 %v1871, %v1901
      %v1960 = vsub.f32 %v1872, %v1910
      %v1961 = vsub.f32 %v1873, %v1910
      %v1962 = vsub.f32 %v1874, %v1919
      %v1963 = vsub.f32 %v1875, %v1919
      %v1964 = vsub.f32 %v1876, %v1928
      %v1965 = vsub.f32 %v1877, %v1928
      %v1966 = vsub.f32 %v1878, %v1937
      %v1967 = vsub.f32 %v1879, %v1937
      %v1968 = vsub.f32 %v1880, %v1946
      %v1969 = vsub.f32 %v1881, %v1946
      %v1970 = vsub.f32 %v1882, %v1955
      %v1971 = vsub.f32 %v1883, %v1955
      %v1972 = vmul.f32 %v1956, 1.442695
      %v1973 = vpow.pop %v1972
      %v1974 = vmul.f32 %v1957, 1.442695
      %v1975 = vpow.pop %v1974
      %v1976 = vmul.f32 %v1958, 1.442695
      %v1977 = vpow.pop %v1976
      %v1978 = vmul.f32 %v1959, 1.442695
      %v1979 = vpow.pop %v1978
      %v1980 = vmul.f32 %v1960, 1.442695
      %v1981 = vpow.pop %v1980
      %v1982 = vmul.f32 %v1961, 1.442695
      %v1983 = vpow.pop %v1982
      %v1984 = vmul.f32 %v1962, 1.442695
      %v1985 = vpow.pop %v1984
      %v1986 = vmul.f32 %v1963, 1.442695
      %v1987 = vpow.pop %v1986
      %v1988 = vmul.f32 %v1964, 1.442695
      %v1989 = vpow.pop %v1988
      %v1990 = vmul.f32 %v1965, 1.442695
      %v1991 = vpow.pop %v1990
      %v1992 = vmul.f32 %v1966, 1.442695
      %v1993 = vpow.pop %v1992
      %v1994 = vmul.f32 %v1967, 1.442695
      %v1995 = vpow.pop %v1994
      %v1996 = vmul.f32 %v1968, 1.442695
      %v1997 = vpow.pop %v1996
      %v1998 = vmul.f32 %v1969, 1.442695
      %v1999 = vpow.pop %v1998
      %v2000 = vmul.f32 %v1970, 1.442695
      %v2001 = vpow.pop %v2000
      %v2002 = vmul.f32 %v1971, 1.442695
      %v2003 = vpow.pop %v2002
      %v2004 = vsel %vm331, %v1973, 0.0
      %v2005 = vsel %vm331, %v1975, 0.0
      %v2006 = vadd.f32 %v2004, %v2005
      %v2007 = vrot.slane %v2006, 4
      %v2008 = vadd.f32 %v2006, %v2007
      %v2009 = vrot.slane %v2008, 2
      %v2010 = vadd.f32 %v2008, %v2009
      %v2011 = vrot.slane %v2010, 1
      %v2012 = vadd.f32 %v2010, %v2011
      %v2013 = vsel %vm331, %v1977, 0.0
      %v2014 = vsel %vm331, %v1979, 0.0
      %v2015 = vadd.f32 %v2013, %v2014
      %v2016 = vrot.slane %v2015, 4
      %v2017 = vadd.f32 %v2015, %v2016
      %v2018 = vrot.slane %v2017, 2
      %v2019 = vadd.f32 %v2017, %v2018
      %v2020 = vrot.slane %v2019, 1
      %v2021 = vadd.f32 %v2019, %v2020
      %v2022 = vsel %vm331, %v1981, 0.0
      %v2023 = vsel %vm331, %v1983, 0.0
      %v2024 = vadd.f32 %v2022, %v2023
      %v2025 = vrot.slane %v2024, 4
      %v2026 = vadd.f32 %v2024, %v2025
      %v2027 = vrot.slane %v2026, 2
      %v2028 = vadd.f32 %v2026, %v2027
      %v2029 = vrot.slane %v2028, 1
      %v2030 = vadd.f32 %v2028, %v2029
      %v2031 = vsel %vm331, %v1985, 0.0
      %v2032 = vsel %vm331, %v1987, 0.0
      %v2033 = vadd.f32 %v2031, %v2032
      %v2034 = vrot.slane %v2033, 4
      %v2035 = vadd.f32 %v2033, %v2034
      %v2036 = vrot.slane %v2035, 2
      %v2037 = vadd.f32 %v2035, %v2036
      %v2038 = vrot.slane %v2037, 1
      %v2039 = vadd.f32 %v2037, %v2038
      %v2040 = vsel %vm331, %v1989, 0.0
      %v2041 = vsel %vm331, %v1991, 0.0
      %v2042 = vadd.f32 %v2040, %v2041
      %v2043 = vrot.slane %v2042, 4
      %v2044 = vadd.f32 %v2042, %v2043
      %v2045 = vrot.slane %v2044, 2
      %v2046 = vadd.f32 %v2044, %v2045
      %v2047 = vrot.slane %v2046, 1
      %v2048 = vadd.f32 %v2046, %v2047
      %v2049 = vsel %vm331, %v1993, 0.0
      %v2050 = vsel %vm331, %v1995, 0.0
      %v2051 = vadd.f32 %v2049, %v2050
      %v2052 = vrot.slane %v2051, 4
      %v2053 = vadd.f32 %v2051, %v2052
      %v2054 = vrot.slane %v2053, 2
      %v2055 = vadd.f32 %v2053, %v2054
      %v2056 = vrot.slane %v2055, 1
      %v2057 = vadd.f32 %v2055, %v2056
      %v2058 = vsel %vm331, %v1997, 0.0
      %v2059 = vsel %vm331, %v1999, 0.0
      %v2060 = vadd.f32 %v2058, %v2059
      %v2061 = vrot.slane %v2060, 4
      %v2062 = vadd.f32 %v2060, %v2061
      %v2063 = vrot.slane %v2062, 2
      %v2064 = vadd.f32 %v2062, %v2063
      %v2065 = vrot.slane %v2064, 1
      %v2066 = vadd.f32 %v2064, %v2065
      %v2067 = vsel %vm331, %v2001, 0.0
      %v2068 = vsel %vm331, %v2003, 0.0
      %v2069 = vadd.f32 %v2067, %v2068
      %v2070 = vrot.slane %v2069, 4
      %v2071 = vadd.f32 %v2069, %v2070
      %v2072 = vrot.slane %v2071, 2
      %v2073 = vadd.f32 %v2071, %v2072
      %v2074 = vrot.slane %v2073, 1
      %v2075 = vadd.f32 %v2073, %v2074
      %v2076 = vrcp.pop %v2012
      %v2077 = vrcp.pop %v2021
      %v2078 = vrcp.pop %v2030
      %v2079 = vrcp.pop %v2039
      %v2080 = vrcp.pop %v2048
      %v2081 = vrcp.pop %v2057
      %v2082 = vrcp.pop %v2066
      %v2083 = vrcp.pop %v2075
      %v2084 = vmul.f32 %v1973, %v2076
      %v2085 = vmul.f32 %v1975, %v2076
      %v2086 = vmul.f32 %v1977, %v2077
      %v2087 = vmul.f32 %v1979, %v2077
      %v2088 = vmul.f32 %v1981, %v2078
      %v2089 = vmul.f32 %v1983, %v2078
      %v2090 = vmul.f32 %v1985, %v2079
      %v2091 = vmul.f32 %v1987, %v2079
      %v2092 = vmul.f32 %v1989, %v2080
      %v2093 = vmul.f32 %v1991, %v2080
      %v2094 = vmul.f32 %v1993, %v2081
      %v2095 = vmul.f32 %v1995, %v2081
      %v2096 = vmul.f32 %v1997, %v2082
      %v2097 = vmul.f32 %v1999, %v2082
      %v2098 = vmul.f32 %v2001, %v2083
      %v2099 = vmul.f32 %v2003, %v2083
      %v2101 = vsel %vm331, %v1204, 0
      %v2104 = vsel %vm331, %v1205, 0
      %2106 = vmatprep.subr.mxu0 0.0
      %2107 = vmatpush1.msra.mxu0 %v299
      %2108 = vmatprep.subr.mxu0 0.0
      %2109 = vmatpush1.msra.mxu0 %v300
      %2110 = vmatprep.subr.mxu0 0.0
      %2111 = vmatpush1.msra.mxu0 0.0
      %2112 = vmatprep.subr.mxu0 0.0
      %2113 = vmatpush1.msra.mxu0 0.0
      %2114 = vmatprep.subr.mxu0 0.0
      %2115 = vmatpush1.msra.mxu0 0.0
      %2116 = vmatprep.subr.mxu0 0.0
      %2117 = vmatpush1.msra.mxu0 0.0
      %2118 = vmatprep.subr.mxu0 0.0
      %2119 = vmatpush1.msra.mxu0 0.0
      %2120 = vmatprep.subr.mxu0 0.0
      %2121 = vmatpush1.msra.mxu0 0.0
      %2122 = vmatprep.subr.mxu0 0.0
      %2123 = vmatpush1.msra.mxu0 0.0
      %2124 = vmatprep.subr.mxu0 0.0
      %2125 = vmatpush1.msra.mxu0 0.0
      %2126 = vmatprep.subr.mxu0 0.0
      %2127 = vmatpush1.msra.mxu0 0.0
      %2128 = vmatprep.subr.mxu0 0.0
      %2129 = vmatpush1.msra.mxu0 0.0
      %2130 = vmatprep.subr.mxu0 0.0
      %2131 = vmatpush1.msra.mxu0 0.0
      %2132 = vmatprep.subr.mxu0 0.0
      %2133 = vmatpush1.msra.mxu0 0.0
      %2134 = vmatprep.subr.mxu0 0.0
      %2135 = vmatpush1.msra.mxu0 0.0
      %2136 = vmatprep.subr.mxu0 0.0
      %2137 = vmatpush1.msra.mxu0 0.0
      %2138 = vmatprep.subr.mxu0 0.0
      %2139 = vmatpush1.msra.mxu0 0.0
      %2140 = vmatprep.subr.mxu0 0.0
      %2141 = vmatpush1.msra.mxu0 0.0
      %2142 = vmatprep.subr.mxu0 0.0
      %2143 = vmatpush1.msra.mxu0 0.0
      %2144 = vmatprep.subr.mxu0 0.0
      %2145 = vmatpush1.msra.mxu0 0.0
      %2146 = vmatprep.subr.mxu0 0.0
      %2147 = vmatpush1.msra.mxu0 0.0
      %2148 = vmatprep.subr.mxu0 0.0
      %2149 = vmatpush1.msra.mxu0 0.0
      %2150 = vmatprep.subr.mxu0 0.0
      %2151 = vmatpush1.msra.mxu0 0.0
      %2152 = vmatprep.subr.mxu0 0.0
      %2153 = vmatpush1.msra.mxu0 0.0
      %2154 = vmatprep.subr.mxu0 0.0
      %2155 = vmatpush1.msra.mxu0 0.0
      %2156 = vmatprep.subr.mxu0 0.0
      %2157 = vmatpush1.msra.mxu0 0.0
      %2158 = vmatprep.subr.mxu0 0.0
      %2159 = vmatpush1.msra.mxu0 0.0
      %2160 = vmatprep.subr.mxu0 0.0
      %2161 = vmatpush1.msra.mxu0 0.0
      %2162 = vmatprep.subr.mxu0 0.0
      %2163 = vmatpush1.msra.mxu0 0.0
      %2164 = vmatprep.subr.mxu0 0.0
      %2165 = vmatpush1.msra.mxu0 0.0
      %2166 = vmatprep.subr.mxu0 0.0
      %2167 = vmatpush1.msra.mxu0 0.0
      %2168 = vmatprep.subr.mxu0 0.0
      %2169 = vmatpush1.msra.mxu0 0.0
      %2170 = vmatprep.mubr.f32.mxu0 0.0
      %2171 = vmatmul.mubr.f32.gmra.mrb[0].mxu0 %v2101
      %v2172 = vpop.f32.mrb[0].mxu0
      %v2173 = vadd.f32 0.0, %v2172
      %v2174 = vpop.f32.mrb[0].mxu0
      %2175 = vmatprep.mubr.f32.mxu0 0.0
      %2176 = vmatmul.mubr.f32.gmra.mrb[0].mxu0 %v2104
      %v2177 = vpop.f32.mrb[0].mxu0
      %v2178 = vadd.f32 0.0, %v2177
      %v2179 = vpop.f32.mrb[0].mxu0
      %2180 = vdwg.mxu0
      %v2182 = vsel %vm331, %v1206, 0
      %v2185 = vsel %vm331, %v1207, 0
      %2187 = vmatprep.subr.mxu0 0.0
      %2188 = vmatpush1.msra.mxu0 %v301
      %2189 = vmatprep.subr.mxu0 0.0
      %2190 = vmatpush1.msra.mxu0 %v302
      %2191 = vmatprep.subr.mxu0 0.0
      %2192 = vmatpush1.msra.mxu0 0.0
      %2193 = vmatprep.subr.mxu0 0.0
      %2194 = vmatpush1.msra.mxu0 0.0
      %2195 = vmatprep.subr.mxu0 0.0
      %2196 = vmatpush1.msra.mxu0 0.0
      %2197 = vmatprep.subr.mxu0 0.0
      %2198 = vmatpush1.msra.mxu0 0.0
      %2199 = vmatprep.subr.mxu0 0.0
      %2200 = vmatpush1.msra.mxu0 0.0
      %2201 = vmatprep.subr.mxu0 0.0
      %2202 = vmatpush1.msra.mxu0 0.0
      %2203 = vmatprep.subr.mxu0 0.0
      %2204 = vmatpush1.msra.mxu0 0.0
      %2205 = vmatprep.subr.mxu0 0.0
      %2206 = vmatpush1.msra.mxu0 0.0
      %2207 = vmatprep.subr.mxu0 0.0
      %2208 = vmatpush1.msra.mxu0 0.0
      %2209 = vmatprep.subr.mxu0 0.0
      %2210 = vmatpush1.msra.mxu0 0.0
      %2211 = vmatprep.subr.mxu0 0.0
      %2212 = vmatpush1.msra.mxu0 0.0
      %2213 = vmatprep.subr.mxu0 0.0
      %2214 = vmatpush1.msra.mxu0 0.0
      %2215 = vmatprep.subr.mxu0 0.0
      %2216 = vmatpush1.msra.mxu0 0.0
      %2217 = vmatprep.subr.mxu0 0.0
      %2218 = vmatpush1.msra.mxu0 0.0
      %2219 = vmatprep.subr.mxu0 0.0
      %2220 = vmatpush1.msra.mxu0 0.0
      %2221 = vmatprep.subr.mxu0 0.0
      %2222 = vmatpush1.msra.mxu0 0.0
      %2223 = vmatprep.subr.mxu0 0.0
      %2224 = vmatpush1.msra.mxu0 0.0
      %2225 = vmatprep.subr.mxu0 0.0
      %2226 = vmatpush1.msra.mxu0 0.0
      %2227 = vmatprep.subr.mxu0 0.0
      %2228 = vmatpush1.msra.mxu0 0.0
      %2229 = vmatprep.subr.mxu0 0.0
      %2230 = vmatpush1.msra.mxu0 0.0
      %2231 = vmatprep.subr.mxu0 0.0
      %2232 = vmatpush1.msra.mxu0 0.0
      %2233 = vmatprep.subr.mxu0 0.0
      %2234 = vmatpush1.msra.mxu0 0.0
      %2235 = vmatprep.subr.mxu0 0.0
      %2236 = vmatpush1.msra.mxu0 0.0
      %2237 = vmatprep.subr.mxu0 0.0
      %2238 = vmatpush1.msra.mxu0 0.0
      %2239 = vmatprep.subr.mxu0 0.0
      %2240 = vmatpush1.msra.mxu0 0.0
      %2241 = vmatprep.subr.mxu0 0.0
      %2242 = vmatpush1.msra.mxu0 0.0
      %2243 = vmatprep.subr.mxu0 0.0
      %2244 = vmatpush1.msra.mxu0 0.0
      %2245 = vmatprep.subr.mxu0 0.0
      %2246 = vmatpush1.msra.mxu0 0.0
      %2247 = vmatprep.subr.mxu0 0.0
      %2248 = vmatpush1.msra.mxu0 0.0
      %2249 = vmatprep.subr.mxu0 0.0
      %2250 = vmatpush1.msra.mxu0 0.0
      %2251 = vmatprep.mubr.f32.mxu0 0.0
      %2252 = vmatmul.mubr.f32.gmra.mrb[0].mxu0 %v2182
      %v2253 = vpop.f32.mrb[0].mxu0
      %v2254 = vadd.f32 0.0, %v2253
      %v2255 = vpop.f32.mrb[0].mxu0
      %2256 = vmatprep.mubr.f32.mxu0 0.0
      %2257 = vmatmul.mubr.f32.gmra.mrb[0].mxu0 %v2185
      %v2258 = vpop.f32.mrb[0].mxu0
      %v2259 = vadd.f32 0.0, %v2258
      %v2260 = vpop.f32.mrb[0].mxu0
      %2261 = vdwg.mxu0
      %v2263 = vsel %vm331, %v1208, 0
      %v2266 = vsel %vm331, %v1209, 0
      %2268 = vmatprep.subr.mxu0 0.0
      %2269 = vmatpush1.msra.mxu0 %v303
      %2270 = vmatprep.subr.mxu0 0.0
      %2271 = vmatpush1.msra.mxu0 %v304
      %2272 = vmatprep.subr.mxu0 0.0
      %2273 = vmatpush1.msra.mxu0 0.0
      %2274 = vmatprep.subr.mxu0 0.0
      %2275 = vmatpush1.msra.mxu0 0.0
      %2276 = vmatprep.subr.mxu0 0.0
      %2277 = vmatpush1.msra.mxu0 0.0
      %2278 = vmatprep.subr.mxu0 0.0
      %2279 = vmatpush1.msra.mxu0 0.0
      %2280 = vmatprep.subr.mxu0 0.0
      %2281 = vmatpush1.msra.mxu0 0.0
      %2282 = vmatprep.subr.mxu0 0.0
      %2283 = vmatpush1.msra.mxu0 0.0
      %2284 = vmatprep.subr.mxu0 0.0
      %2285 = vmatpush1.msra.mxu0 0.0
      %2286 = vmatprep.subr.mxu0 0.0
      %2287 = vmatpush1.msra.mxu0 0.0
      %2288 = vmatprep.subr.mxu0 0.0
      %2289 = vmatpush1.msra.mxu0 0.0
      %2290 = vmatprep.subr.mxu0 0.0
      %2291 = vmatpush1.msra.mxu0 0.0
      %2292 = vmatprep.subr.mxu0 0.0
      %2293 = vmatpush1.msra.mxu0 0.0
      %2294 = vmatprep.subr.mxu0 0.0
      %2295 = vmatpush1.msra.mxu0 0.0
      %2296 = vmatprep.subr.mxu0 0.0
      %2297 = vmatpush1.msra.mxu0 0.0
      %2298 = vmatprep.subr.mxu0 0.0
      %2299 = vmatpush1.msra.mxu0 0.0
      %2300 = vmatprep.subr.mxu0 0.0
      %2301 = vmatpush1.msra.mxu0 0.0
      %2302 = vmatprep.subr.mxu0 0.0
      %2303 = vmatpush1.msra.mxu0 0.0
      %2304 = vmatprep.subr.mxu0 0.0
      %2305 = vmatpush1.msra.mxu0 0.0
      %2306 = vmatprep.subr.mxu0 0.0
      %2307 = vmatpush1.msra.mxu0 0.0
      %2308 = vmatprep.subr.mxu0 0.0
      %2309 = vmatpush1.msra.mxu0 0.0
      %2310 = vmatprep.subr.mxu0 0.0
      %2311 = vmatpush1.msra.mxu0 0.0
      %2312 = vmatprep.subr.mxu0 0.0
      %2313 = vmatpush1.msra.mxu0 0.0
      %2314 = vmatprep.subr.mxu0 0.0
      %2315 = vmatpush1.msra.mxu0 0.0
      %2316 = vmatprep.subr.mxu0 0.0
      %2317 = vmatpush1.msra.mxu0 0.0
      %2318 = vmatprep.subr.mxu0 0.0
      %2319 = vmatpush1.msra.mxu0 0.0
      %2320 = vmatprep.subr.mxu0 0.0
      %2321 = vmatpush1.msra.mxu0 0.0
      %2322 = vmatprep.subr.mxu0 0.0
      %2323 = vmatpush1.msra.mxu0 0.0
      %2324 = vmatprep.subr.mxu0 0.0
      %2325 = vmatpush1.msra.mxu0 0.0
      %2326 = vmatprep.subr.mxu0 0.0
      %2327 = vmatpush1.msra.mxu0 0.0
      %2328 = vmatprep.subr.mxu0 0.0
      %2329 = vmatpush1.msra.mxu0 0.0
      %2330 = vmatprep.subr.mxu0 0.0
      %2331 = vmatpush1.msra.mxu0 0.0
      %2332 = vmatprep.mubr.f32.mxu0 0.0
      %2333 = vmatmul.mubr.f32.gmra.mrb[0].mxu0 %v2263
      %v2334 = vpop.f32.mrb[0].mxu0
      %v2335 = vadd.f32 0.0, %v2334
      %v2336 = vpop.f32.mrb[0].mxu0
      %2337 = vmatprep.mubr.f32.mxu0 0.0
      %2338 = vmatmul.mubr.f32.gmra.mrb[0].mxu0 %v2266
      %v2339 = vpop.f32.mrb[0].mxu0
      %v2340 = vadd.f32 0.0, %v2339
      %v2341 = vpop.f32.mrb[0].mxu0
      %2342 = vdwg.mxu0
      %v2344 = vsel %vm331, %v1210, 0
      %v2347 = vsel %vm331, %v1211, 0
      %2349 = vmatprep.subr.mxu0 0.0
      %2350 = vmatpush1.msra.mxu0 %v305
      %2351 = vmatprep.subr.mxu0 0.0
      %2352 = vmatpush1.msra.mxu0 %v306
      %2353 = vmatprep.subr.mxu0 0.0
      %2354 = vmatpush1.msra.mxu0 0.0
      %2355 = vmatprep.subr.mxu0 0.0
      %2356 = vmatpush1.msra.mxu0 0.0
      %2357 = vmatprep.subr.mxu0 0.0
      %2358 = vmatpush1.msra.mxu0 0.0
      %2359 = vmatprep.subr.mxu0 0.0
      %2360 = vmatpush1.msra.mxu0 0.0
      %2361 = vmatprep.subr.mxu0 0.0
      %2362 = vmatpush1.msra.mxu0 0.0
      %2363 = vmatprep.subr.mxu0 0.0
      %2364 = vmatpush1.msra.mxu0 0.0
      %2365 = vmatprep.subr.mxu0 0.0
      %2366 = vmatpush1.msra.mxu0 0.0
      %2367 = vmatprep.subr.mxu0 0.0
      %2368 = vmatpush1.msra.mxu0 0.0
      %2369 = vmatprep.subr.mxu0 0.0
      %2370 = vmatpush1.msra.mxu0 0.0
      %2371 = vmatprep.subr.mxu0 0.0
      %2372 = vmatpush1.msra.mxu0 0.0
      %2373 = vmatprep.subr.mxu0 0.0
      %2374 = vmatpush1.msra.mxu0 0.0
      %2375 = vmatprep.subr.mxu0 0.0
      %2376 = vmatpush1.msra.mxu0 0.0
      %2377 = vmatprep.subr.mxu0 0.0
      %2378 = vmatpush1.msra.mxu0 0.0
      %2379 = vmatprep.subr.mxu0 0.0
      %2380 = vmatpush1.msra.mxu0 0.0
      %2381 = vmatprep.subr.mxu0 0.0
      %2382 = vmatpush1.msra.mxu0 0.0
      %2383 = vmatprep.subr.mxu0 0.0
      %2384 = vmatpush1.msra.mxu0 0.0
      %2385 = vmatprep.subr.mxu0 0.0
      %2386 = vmatpush1.msra.mxu0 0.0
      %2387 = vmatprep.subr.mxu0 0.0
      %2388 = vmatpush1.msra.mxu0 0.0
      %2389 = vmatprep.subr.mxu0 0.0
      %2390 = vmatpush1.msra.mxu0 0.0
      %2391 = vmatprep.subr.mxu0 0.0
      %2392 = vmatpush1.msra.mxu0 0.0
      %2393 = vmatprep.subr.mxu0 0.0
      %2394 = vmatpush1.msra.mxu0 0.0
      %2395 = vmatprep.subr.mxu0 0.0
      %2396 = vmatpush1.msra.mxu0 0.0
      %2397 = vmatprep.subr.mxu0 0.0
      %2398 = vmatpush1.msra.mxu0 0.0
      %2399 = vmatprep.subr.mxu0 0.0
      %2400 = vmatpush1.msra.mxu0 0.0
      %2401 = vmatprep.subr.mxu0 0.0
      %2402 = vmatpush1.msra.mxu0 0.0
      %2403 = vmatprep.subr.mxu0 0.0
      %2404 = vmatpush1.msra.mxu0 0.0
      %2405 = vmatprep.subr.mxu0 0.0
      %2406 = vmatpush1.msra.mxu0 0.0
      %2407 = vmatprep.subr.mxu0 0.0
      %2408 = vmatpush1.msra.mxu0 0.0
      %2409 = vmatprep.subr.mxu0 0.0
      %2410 = vmatpush1.msra.mxu0 0.0
      %2411 = vmatprep.subr.mxu0 0.0
      %2412 = vmatpush1.msra.mxu0 0.0
      %2413 = vmatprep.mubr.f32.mxu0 0.0
      %2414 = vmatmul.mubr.f32.gmra.mrb[0].mxu0 %v2344
      %v2415 = vpop.f32.mrb[0].mxu0
      %v2416 = vadd.f32 0.0, %v2415
      %v2417 = vpop.f32.mrb[0].mxu0
      %2418 = vmatprep.mubr.f32.mxu0 0.0
      %2419 = vmatmul.mubr.f32.gmra.mrb[0].mxu0 %v2347
      %v2420 = vpop.f32.mrb[0].mxu0
      %v2421 = vadd.f32 0.0, %v2420
      %v2422 = vpop.f32.mrb[0].mxu0
      %2423 = vdwg.mxu0
      %v2425 = vsel %vm331, %v1212, 0
      %v2428 = vsel %vm331, %v1213, 0
      %2430 = vmatprep.subr.mxu0 0.0
      %2431 = vmatpush1.msra.mxu0 %v307
      %2432 = vmatprep.subr.mxu0 0.0
      %2433 = vmatpush1.msra.mxu0 %v308
      %2434 = vmatprep.subr.mxu0 0.0
      %2435 = vmatpush1.msra.mxu0 0.0
      %2436 = vmatprep.subr.mxu0 0.0
      %2437 = vmatpush1.msra.mxu0 0.0
      %2438 = vmatprep.subr.mxu0 0.0
      %2439 = vmatpush1.msra.mxu0 0.0
      %2440 = vmatprep.subr.mxu0 0.0
      %2441 = vmatpush1.msra.mxu0 0.0
      %2442 = vmatprep.subr.mxu0 0.0
      %2443 = vmatpush1.msra.mxu0 0.0
      %2444 = vmatprep.subr.mxu0 0.0
      %2445 = vmatpush1.msra.mxu0 0.0
      %2446 = vmatprep.subr.mxu0 0.0
      %2447 = vmatpush1.msra.mxu0 0.0
      %2448 = vmatprep.subr.mxu0 0.0
      %2449 = vmatpush1.msra.mxu0 0.0
      %2450 = vmatprep.subr.mxu0 0.0
      %2451 = vmatpush1.msra.mxu0 0.0
      %2452 = vmatprep.subr.mxu0 0.0
      %2453 = vmatpush1.msra.mxu0 0.0
      %2454 = vmatprep.subr.mxu0 0.0
      %2455 = vmatpush1.msra.mxu0 0.0
      %2456 = vmatprep.subr.mxu0 0.0
      %2457 = vmatpush1.msra.mxu0 0.0
      %2458 = vmatprep.subr.mxu0 0.0
      %2459 = vmatpush1.msra.mxu0 0.0
      %2460 = vmatprep.subr.mxu0 0.0
      %2461 = vmatpush1.msra.mxu0 0.0
      %2462 = vmatprep.subr.mxu0 0.0
      %2463 = vmatpush1.msra.mxu0 0.0
      %2464 = vmatprep.subr.mxu0 0.0
      %2465 = vmatpush1.msra.mxu0 0.0
      %2466 = vmatprep.subr.mxu0 0.0
      %2467 = vmatpush1.msra.mxu0 0.0
      %2468 = vmatprep.subr.mxu0 0.0
      %2469 = vmatpush1.msra.mxu0 0.0
      %2470 = vmatprep.subr.mxu0 0.0
      %2471 = vmatpush1.msra.mxu0 0.0
      %2472 = vmatprep.subr.mxu0 0.0
      %2473 = vmatpush1.msra.mxu0 0.0
      %2474 = vmatprep.subr.mxu0 0.0
      %2475 = vmatpush1.msra.mxu0 0.0
      %2476 = vmatprep.subr.mxu0 0.0
      %2477 = vmatpush1.msra.mxu0 0.0
      %2478 = vmatprep.subr.mxu0 0.0
      %2479 = vmatpush1.msra.mxu0 0.0
      %2480 = vmatprep.subr.mxu0 0.0
      %2481 = vmatpush1.msra.mxu0 0.0
      %2482 = vmatprep.subr.mxu0 0.0
      %2483 = vmatpush1.msra.mxu0 0.0
      %2484 = vmatprep.subr.mxu0 0.0
      %2485 = vmatpush1.msra.mxu0 0.0
      %2486 = vmatprep.subr.mxu0 0.0
      %2487 = vmatpush1.msra.mxu0 0.0
      %2488 = vmatprep.subr.mxu0 0.0
      %2489 = vmatpush1.msra.mxu0 0.0
      %2490 = vmatprep.subr.mxu0 0.0
      %2491 = vmatpush1.msra.mxu0 0.0
      %2492 = vmatprep.subr.mxu0 0.0
      %2493 = vmatpush1.msra.mxu0 0.0
      %2494 = vmatprep.mubr.f32.mxu0 0.0
      %2495 = vmatmul.mubr.f32.gmra.mrb[0].mxu0 %v2425
      %v2496 = vpop.f32.mrb[0].mxu0
      %v2497 = vadd.f32 0.0, %v2496
      %v2498 = vpop.f32.mrb[0].mxu0
      %2499 = vmatprep.mubr.f32.mxu0 0.0
      %2500 = vmatmul.mubr.f32.gmra.mrb[0].mxu0 %v2428
      %v2501 = vpop.f32.mrb[0].mxu0
      %v2502 = vadd.f32 0.0, %v2501
      %v2503 = vpop.f32.mrb[0].mxu0
      %2504 = vdwg.mxu0
      %v2506 = vsel %vm331, %v1214, 0
      %v2509 = vsel %vm331, %v1215, 0
      %2511 = vmatprep.subr.mxu0 0.0
      %2512 = vmatpush1.msra.mxu0 %v309
      %2513 = vmatprep.subr.mxu0 0.0
      %2514 = vmatpush1.msra.mxu0 %v310
      %2515 = vmatprep.subr.mxu0 0.0
      %2516 = vmatpush1.msra.mxu0 0.0
      %2517 = vmatprep.subr.mxu0 0.0
      %2518 = vmatpush1.msra.mxu0 0.0
      %2519 = vmatprep.subr.mxu0 0.0
      %2520 = vmatpush1.msra.mxu0 0.0
      %2521 = vmatprep.subr.mxu0 0.0
      %2522 = vmatpush1.msra.mxu0 0.0
      %2523 = vmatprep.subr.mxu0 0.0
      %2524 = vmatpush1.msra.mxu0 0.0
      %2525 = vmatprep.subr.mxu0 0.0
      %2526 = vmatpush1.msra.mxu0 0.0
      %2527 = vmatprep.subr.mxu0 0.0
      %2528 = vmatpush1.msra.mxu0 0.0
      %2529 = vmatprep.subr.mxu0 0.0
      %2530 = vmatpush1.msra.mxu0 0.0
      %2531 = vmatprep.subr.mxu0 0.0
      %2532 = vmatpush1.msra.mxu0 0.0
      %2533 = vmatprep.subr.mxu0 0.0
      %2534 = vmatpush1.msra.mxu0 0.0
      %2535 = vmatprep.subr.mxu0 0.0
      %2536 = vmatpush1.msra.mxu0 0.0
      %2537 = vmatprep.subr.mxu0 0.0
      %2538 = vmatpush1.msra.mxu0 0.0
      %2539 = vmatprep.subr.mxu0 0.0
      %2540 = vmatpush1.msra.mxu0 0.0
      %2541 = vmatprep.subr.mxu0 0.0
      %2542 = vmatpush1.msra.mxu0 0.0
      %2543 = vmatprep.subr.mxu0 0.0
      %2544 = vmatpush1.msra.mxu0 0.0
      %2545 = vmatprep.subr.mxu0 0.0
      %2546 = vmatpush1.msra.mxu0 0.0
      %2547 = vmatprep.subr.mxu0 0.0
      %2548 = vmatpush1.msra.mxu0 0.0
      %2549 = vmatprep.subr.mxu0 0.0
      %2550 = vmatpush1.msra.mxu0 0.0
      %2551 = vmatprep.subr.mxu0 0.0
      %2552 = vmatpush1.msra.mxu0 0.0
      %2553 = vmatprep.subr.mxu0 0.0
      %2554 = vmatpush1.msra.mxu0 0.0
      %2555 = vmatprep.subr.mxu0 0.0
      %2556 = vmatpush1.msra.mxu0 0.0
      %2557 = vmatprep.subr.mxu0 0.0
      %2558 = vmatpush1.msra.mxu0 0.0
      %2559 = vmatprep.subr.mxu0 0.0
      %2560 = vmatpush1.msra.mxu0 0.0
      %2561 = vmatprep.subr.mxu0 0.0
      %2562 = vmatpush1.msra.mxu0 0.0
      %2563 = vmatprep.subr.mxu0 0.0
      %2564 = vmatpush1.msra.mxu0 0.0
      %2565 = vmatprep.subr.mxu0 0.0
      %2566 = vmatpush1.msra.mxu0 0.0
      %2567 = vmatprep.subr.mxu0 0.0
      %2568 = vmatpush1.msra.mxu0 0.0
      %2569 = vmatprep.subr.mxu0 0.0
      %2570 = vmatpush1.msra.mxu0 0.0
      %2571 = vmatprep.subr.mxu0 0.0
      %2572 = vmatpush1.msra.mxu0 0.0
      %2573 = vmatprep.subr.mxu0 0.0
      %2574 = vmatpush1.msra.mxu0 0.0
      %2575 = vmatprep.mubr.f32.mxu0 0.0
      %2576 = vmatmul.mubr.f32.gmra.mrb[0].mxu0 %v2506
      %v2577 = vpop.f32.mrb[0].mxu0
      %v2578 = vadd.f32 0.0, %v2577
      %v2579 = vpop.f32.mrb[0].mxu0
      %2580 = vmatprep.mubr.f32.mxu0 0.0
      %2581 = vmatmul.mubr.f32.gmra.mrb[0].mxu0 %v2509
      %v2582 = vpop.f32.mrb[0].mxu0
      %v2583 = vadd.f32 0.0, %v2582
      %v2584 = vpop.f32.mrb[0].mxu0
      %2585 = vdwg.mxu0
      %v2587 = vsel %vm331, %v1216, 0
      %v2590 = vsel %vm331, %v1217, 0
      %2592 = vmatprep.subr.mxu0 0.0
      %2593 = vmatpush1.msra.mxu0 %v311
      %2594 = vmatprep.subr.mxu0 0.0
      %2595 = vmatpush1.msra.mxu0 %v312
      %2596 = vmatprep.subr.mxu0 0.0
      %2597 = vmatpush1.msra.mxu0 0.0
      %2598 = vmatprep.subr.mxu0 0.0
      %2599 = vmatpush1.msra.mxu0 0.0
      %2600 = vmatprep.subr.mxu0 0.0
      %2601 = vmatpush1.msra.mxu0 0.0
      %2602 = vmatprep.subr.mxu0 0.0
      %2603 = vmatpush1.msra.mxu0 0.0
      %2604 = vmatprep.subr.mxu0 0.0
      %2605 = vmatpush1.msra.mxu0 0.0
      %2606 = vmatprep.subr.mxu0 0.0
      %2607 = vmatpush1.msra.mxu0 0.0
      %2608 = vmatprep.subr.mxu0 0.0
      %2609 = vmatpush1.msra.mxu0 0.0
      %2610 = vmatprep.subr.mxu0 0.0
      %2611 = vmatpush1.msra.mxu0 0.0
      %2612 = vmatprep.subr.mxu0 0.0
      %2613 = vmatpush1.msra.mxu0 0.0
      %2614 = vmatprep.subr.mxu0 0.0
      %2615 = vmatpush1.msra.mxu0 0.0
      %2616 = vmatprep.subr.mxu0 0.0
      %2617 = vmatpush1.msra.mxu0 0.0
      %2618 = vmatprep.subr.mxu0 0.0
      %2619 = vmatpush1.msra.mxu0 0.0
      %2620 = vmatprep.subr.mxu0 0.0
      %2621 = vmatpush1.msra.mxu0 0.0
      %2622 = vmatprep.subr.mxu0 0.0
      %2623 = vmatpush1.msra.mxu0 0.0
      %2624 = vmatprep.subr.mxu0 0.0
      %2625 = vmatpush1.msra.mxu0 0.0
      %2626 = vmatprep.subr.mxu0 0.0
      %2627 = vmatpush1.msra.mxu0 0.0
      %2628 = vmatprep.subr.mxu0 0.0
      %2629 = vmatpush1.msra.mxu0 0.0
      %2630 = vmatprep.subr.mxu0 0.0
      %2631 = vmatpush1.msra.mxu0 0.0
      %2632 = vmatprep.subr.mxu0 0.0
      %2633 = vmatpush1.msra.mxu0 0.0
      %2634 = vmatprep.subr.mxu0 0.0
      %2635 = vmatpush1.msra.mxu0 0.0
      %2636 = vmatprep.subr.mxu0 0.0
      %2637 = vmatpush1.msra.mxu0 0.0
      %2638 = vmatprep.subr.mxu0 0.0
      %2639 = vmatpush1.msra.mxu0 0.0
      %2640 = vmatprep.subr.mxu0 0.0
      %2641 = vmatpush1.msra.mxu0 0.0
      %2642 = vmatprep.subr.mxu0 0.0
      %2643 = vmatpush1.msra.mxu0 0.0
      %2644 = vmatprep.subr.mxu0 0.0
      %2645 = vmatpush1.msra.mxu0 0.0
      %2646 = vmatprep.subr.mxu0 0.0
      %2647 = vmatpush1.msra.mxu0 0.0
      %2648 = vmatprep.subr.mxu0 0.0
      %2649 = vmatpush1.msra.mxu0 0.0
      %2650 = vmatprep.subr.mxu0 0.0
      %2651 = vmatpush1.msra.mxu0 0.0
      %2652 = vmatprep.subr.mxu0 0.0
      %2653 = vmatpush1.msra.mxu0 0.0
      %2654 = vmatprep.subr.mxu0 0.0
      %2655 = vmatpush1.msra.mxu0 0.0
      %2656 = vmatprep.mubr.f32.mxu0 0.0
      %2657 = vmatmul.mubr.f32.gmra.mrb[0].mxu0 %v2587
      %v2658 = vpop.f32.mrb[0].mxu0
      %v2659 = vadd.f32 0.0, %v2658
      %v2660 = vpop.f32.mrb[0].mxu0
      %2661 = vmatprep.mubr.f32.mxu0 0.0
      %2662 = vmatmul.mubr.f32.gmra.mrb[0].mxu0 %v2590
      %v2663 = vpop.f32.mrb[0].mxu0
      %v2664 = vadd.f32 0.0, %v2663
      %v2665 = vpop.f32.mrb[0].mxu0
      %2666 = vdwg.mxu0
      %v2668 = vsel %vm331, %v1218, 0
      %v2671 = vsel %vm331, %v1219, 0
      %2673 = vmatprep.subr.mxu0 0.0
      %2674 = vmatpush1.msra.mxu0 %v313
      %2675 = vmatprep.subr.mxu0 0.0
      %2676 = vmatpush1.msra.mxu0 %v314
      %2677 = vmatprep.subr.mxu0 0.0
      %2678 = vmatpush1.msra.mxu0 0.0
      %2679 = vmatprep.subr.mxu0 0.0
      %2680 = vmatpush1.msra.mxu0 0.0
      %2681 = vmatprep.subr.mxu0 0.0
      %2682 = vmatpush1.msra.mxu0 0.0
      %2683 = vmatprep.subr.mxu0 0.0
      %2684 = vmatpush1.msra.mxu0 0.0
      %2685 = vmatprep.subr.mxu0 0.0
      %2686 = vmatpush1.msra.mxu0 0.0
      %2687 = vmatprep.subr.mxu0 0.0
      %2688 = vmatpush1.msra.mxu0 0.0
      %2689 = vmatprep.subr.mxu0 0.0
      %2690 = vmatpush1.msra.mxu0 0.0
      %2691 = vmatprep.subr.mxu0 0.0
      %2692 = vmatpush1.msra.mxu0 0.0
      %2693 = vmatprep.subr.mxu0 0.0
      %2694 = vmatpush1.msra.mxu0 0.0
      %2695 = vmatprep.subr.mxu0 0.0
      %2696 = vmatpush1.msra.mxu0 0.0
      %2697 = vmatprep.subr.mxu0 0.0
      %2698 = vmatpush1.msra.mxu0 0.0
      %2699 = vmatprep.subr.mxu0 0.0
      %2700 = vmatpush1.msra.mxu0 0.0
      %2701 = vmatprep.subr.mxu0 0.0
      %2702 = vmatpush1.msra.mxu0 0.0
      %2703 = vmatprep.subr.mxu0 0.0
      %2704 = vmatpush1.msra.mxu0 0.0
      %2705 = vmatprep.subr.mxu0 0.0
      %2706 = vmatpush1.msra.mxu0 0.0
      %2707 = vmatprep.subr.mxu0 0.0
      %2708 = vmatpush1.msra.mxu0 0.0
      %2709 = vmatprep.subr.mxu0 0.0
      %2710 = vmatpush1.msra.mxu0 0.0
      %2711 = vmatprep.subr.mxu0 0.0
      %2712 = vmatpush1.msra.mxu0 0.0
      %2713 = vmatprep.subr.mxu0 0.0
      %2714 = vmatpush1.msra.mxu0 0.0
      %2715 = vmatprep.subr.mxu0 0.0
      %2716 = vmatpush1.msra.mxu0 0.0
      %2717 = vmatprep.subr.mxu0 0.0
      %2718 = vmatpush1.msra.mxu0 0.0
      %2719 = vmatprep.subr.mxu0 0.0
      %2720 = vmatpush1.msra.mxu0 0.0
      %2721 = vmatprep.subr.mxu0 0.0
      %2722 = vmatpush1.msra.mxu0 0.0
      %2723 = vmatprep.subr.mxu0 0.0
      %2724 = vmatpush1.msra.mxu0 0.0
      %2725 = vmatprep.subr.mxu0 0.0
      %2726 = vmatpush1.msra.mxu0 0.0
      %2727 = vmatprep.subr.mxu0 0.0
      %2728 = vmatpush1.msra.mxu0 0.0
      %2729 = vmatprep.subr.mxu0 0.0
      %2730 = vmatpush1.msra.mxu0 0.0
      %2731 = vmatprep.subr.mxu0 0.0
      %2732 = vmatpush1.msra.mxu0 0.0
      %2733 = vmatprep.subr.mxu0 0.0
      %2734 = vmatpush1.msra.mxu0 0.0
      %2735 = vmatprep.subr.mxu0 0.0
      %2736 = vmatpush1.msra.mxu0 0.0
      %2737 = vmatprep.mubr.f32.mxu0 0.0
      %2738 = vmatmul.mubr.f32.gmra.mrb[0].mxu0 %v2668
      %v2739 = vpop.f32.mrb[0].mxu0
      %v2740 = vadd.f32 0.0, %v2739
      %v2741 = vpop.f32.mrb[0].mxu0
      %2742 = vmatprep.mubr.f32.mxu0 0.0
      %2743 = vmatmul.mubr.f32.gmra.mrb[0].mxu0 %v2671
      %v2744 = vpop.f32.mrb[0].mxu0
      %v2745 = vadd.f32 0.0, %v2744
      %v2746 = vpop.f32.mrb[0].mxu0
      %2747 = vdwg.mxu0
      %v2748 = vld [vmem:[%s259] sm:$0xff]
      %v2749 = vld [vmem:[%s259 + $0x8] sm:$0xff]
      %v2750 = vld [vmem:[%s259 + $0x10] sm:$0xff]
      %v2751 = vld [vmem:[%s259 + $0x18] sm:$0xff]
      %v2752 = vld [vmem:[%s259 + $0x20] sm:$0xff]
      %v2753 = vld [vmem:[%s259 + $0x28] sm:$0xff]
      %v2754 = vld [vmem:[%s259 + $0x30] sm:$0xff]
      %v2755 = vld [vmem:[%s259 + $0x38] sm:$0xff]
      %v2756 = vld [vmem:[%s259 + $0x40] sm:$0xff]
      %v2757 = vld [vmem:[%s259 + $0x48] sm:$0xff]
      %v2758 = vld [vmem:[%s259 + $0x50] sm:$0xff]
      %v2759 = vld [vmem:[%s259 + $0x58] sm:$0xff]
      %v2760 = vld [vmem:[%s259 + $0x60] sm:$0xff]
      %v2761 = vld [vmem:[%s259 + $0x68] sm:$0xff]
      %v2762 = vld [vmem:[%s259 + $0x70] sm:$0xff]
      %v2763 = vld [vmem:[%s259 + $0x78] sm:$0xff]
      %v2765 = vsel %vm331, %v2173, 0
      %v2768 = vsel %vm331, %v2178, 0
      %2770 = vmatprep.subr.mxu0 0.0
      %2771 = vmatpush1.msra.mxu0 %v2084
      %2772 = vmatprep.subr.mxu0 0.0
      %2773 = vmatpush1.msra.mxu0 %v2085
      %2774 = vmatprep.subr.mxu0 0.0
      %2775 = vmatpush1.msra.mxu0 0.0
      %2776 = vmatprep.subr.mxu0 0.0
      %2777 = vmatpush1.msra.mxu0 0.0
      %2778 = vmatprep.subr.mxu0 0.0
      %2779 = vmatpush1.msra.mxu0 0.0
      %2780 = vmatprep.subr.mxu0 0.0
      %2781 = vmatpush1.msra.mxu0 0.0
      %2782 = vmatprep.subr.mxu0 0.0
      %2783 = vmatpush1.msra.mxu0 0.0
      %2784 = vmatprep.subr.mxu0 0.0
      %2785 = vmatpush1.msra.mxu0 0.0
      %2786 = vmatprep.subr.mxu0 0.0
      %2787 = vmatpush1.msra.mxu0 0.0
      %2788 = vmatprep.subr.mxu0 0.0
      %2789 = vmatpush1.msra.mxu0 0.0
      %2790 = vmatprep.subr.mxu0 0.0
      %2791 = vmatpush1.msra.mxu0 0.0
      %2792 = vmatprep.subr.mxu0 0.0
      %2793 = vmatpush1.msra.mxu0 0.0
      %2794 = vmatprep.subr.mxu0 0.0
      %2795 = vmatpush1.msra.mxu0 0.0
      %2796 = vmatprep.subr.mxu0 0.0
      %2797 = vmatpush1.msra.mxu0 0.0
      %2798 = vmatprep.subr.mxu0 0.0
      %2799 = vmatpush1.msra.mxu0 0.0
      %2800 = vmatprep.subr.mxu0 0.0
      %2801 = vmatpush1.msra.mxu0 0.0
      %2802 = vmatprep.subr.mxu0 0.0
      %2803 = vmatpush1.msra.mxu0 0.0
      %2804 = vmatprep.subr.mxu0 0.0
      %2805 = vmatpush1.msra.mxu0 0.0
      %2806 = vmatprep.subr.mxu0 0.0
      %2807 = vmatpush1.msra.mxu0 0.0
      %2808 = vmatprep.subr.mxu0 0.0
      %2809 = vmatpush1.msra.mxu0 0.0
      %2810 = vmatprep.subr.mxu0 0.0
      %2811 = vmatpush1.msra.mxu0 0.0
      %2812 = vmatprep.subr.mxu0 0.0
      %2813 = vmatpush1.msra.mxu0 0.0
      %2814 = vmatprep.subr.mxu0 0.0
      %2815 = vmatpush1.msra.mxu0 0.0
      %2816 = vmatprep.subr.mxu0 0.0
      %2817 = vmatpush1.msra.mxu0 0.0
      %2818 = vmatprep.subr.mxu0 0.0
      %2819 = vmatpush1.msra.mxu0 0.0
      %2820 = vmatprep.subr.mxu0 0.0
      %2821 = vmatpush1.msra.mxu0 0.0
      %2822 = vmatprep.subr.mxu0 0.0
      %2823 = vmatpush1.msra.mxu0 0.0
      %2824 = vmatprep.subr.mxu0 0.0
      %2825 = vmatpush1.msra.mxu0 0.0
      %2826 = vmatprep.subr.mxu0 0.0
      %2827 = vmatpush1.msra.mxu0 0.0
      %2828 = vmatprep.subr.mxu0 0.0
      %2829 = vmatpush1.msra.mxu0 0.0
      %2830 = vmatprep.subr.mxu0 0.0
      %2831 = vmatpush1.msra.mxu0 0.0
      %2832 = vmatprep.subr.mxu0 0.0
      %2833 = vmatpush1.msra.mxu0 0.0
      %2834 = vmatprep.mubr.f32.mxu0 0.0
      %2835 = vmatmul.mubr.f32.gmra.mrb[0].mxu0 %v2765
      %v2836 = vpop.f32.mrb[0].mxu0
      %v2837 = vadd.f32 %v2748, %v2836
      %v2838 = vpop.f32.mrb[0].mxu0
      %2839 = vmatprep.mubr.f32.mxu0 0.0
      %2840 = vmatmul.mubr.f32.gmra.mrb[0].mxu0 %v2768
      %v2841 = vpop.f32.mrb[0].mxu0
      %v2842 = vadd.f32 %v2749, %v2841
      %v2843 = vpop.f32.mrb[0].mxu0
      %2844 = vdwg.mxu0
      %v2846 = vsel %vm331, %v2254, 0
      %v2849 = vsel %vm331, %v2259, 0
      %2851 = vmatprep.subr.mxu0 0.0
      %2852 = vmatpush1.msra.mxu0 %v2086
      %2853 = vmatprep.subr.mxu0 0.0
      %2854 = vmatpush1.msra.mxu0 %v2087
      %2855 = vmatprep.subr.mxu0 0.0
      %2856 = vmatpush1.msra.mxu0 0.0
      %2857 = vmatprep.subr.mxu0 0.0
      %2858 = vmatpush1.msra.mxu0 0.0
      %2859 = vmatprep.subr.mxu0 0.0
      %2860 = vmatpush1.msra.mxu0 0.0
      %2861 = vmatprep.subr.mxu0 0.0
      %2862 = vmatpush1.msra.mxu0 0.0
      %2863 = vmatprep.subr.mxu0 0.0
      %2864 = vmatpush1.msra.mxu0 0.0
      %2865 = vmatprep.subr.mxu0 0.0
      %2866 = vmatpush1.msra.mxu0 0.0
      %2867 = vmatprep.subr.mxu0 0.0
      %2868 = vmatpush1.msra.mxu0 0.0
      %2869 = vmatprep.subr.mxu0 0.0
      %2870 = vmatpush1.msra.mxu0 0.0
      %2871 = vmatprep.subr.mxu0 0.0
      %2872 = vmatpush1.msra.mxu0 0.0
      %2873 = vmatprep.subr.mxu0 0.0
      %2874 = vmatpush1.msra.mxu0 0.0
      %2875 = vmatprep.subr.mxu0 0.0
      %2876 = vmatpush1.msra.mxu0 0.0
      %2877 = vmatprep.subr.mxu0 0.0
      %2878 = vmatpush1.msra.mxu0 0.0
      %2879 = vmatprep.subr.mxu0 0.0
      %2880 = vmatpush1.msra.mxu0 0.0
      %2881 = vmatprep.subr.mxu0 0.0
      %2882 = vmatpush1.msra.mxu0 0.0
      %2883 = vmatprep.subr.mxu0 0.0
      %2884 = vmatpush1.msra.mxu0 0.0
      %2885 = vmatprep.subr.mxu0 0.0
      %2886 = vmatpush1.msra.mxu0 0.0
      %2887 = vmatprep.subr.mxu0 0.0
      %2888 = vmatpush1.msra.mxu0 0.0
      %2889 = vmatprep.subr.mxu0 0.0
      %2890 = vmatpush1.msra.mxu0 0.0
      %2891 = vmatprep.subr.mxu0 0.0
      %2892 = vmatpush1.msra.mxu0 0.0
      %2893 = vmatprep.subr.mxu0 0.0
      %2894 = vmatpush1.msra.mxu0 0.0
      %2895 = vmatprep.subr.mxu0 0.0
      %2896 = vmatpush1.msra.mxu0 0.0
      %2897 = vmatprep.subr.mxu0 0.0
      %2898 = vmatpush1.msra.mxu0 0.0
      %2899 = vmatprep.subr.mxu0 0.0
      %2900 = vmatpush1.msra.mxu0 0.0
      %2901 = vmatprep.subr.mxu0 0.0
      %2902 = vmatpush1.msra.mxu0 0.0
      %2903 = vmatprep.subr.mxu0 0.0
      %2904 = vmatpush1.msra.mxu0 0.0
      %2905 = vmatprep.subr.mxu0 0.0
      %2906 = vmatpush1.msra.mxu0 0.0
      %2907 = vmatprep.subr.mxu0 0.0
      %2908 = vmatpush1.msra.mxu0 0.0
      %2909 = vmatprep.subr.mxu0 0.0
      %2910 = vmatpush1.msra.mxu0 0.0
      %2911 = vmatprep.subr.mxu0 0.0
      %2912 = vmatpush1.msra.mxu0 0.0
      %2913 = vmatprep.subr.mxu0 0.0
      %2914 = vmatpush1.msra.mxu0 0.0
      %2915 = vmatprep.mubr.f32.mxu0 0.0
      %2916 = vmatmul.mubr.f32.gmra.mrb[0].mxu0 %v2846
      %v2917 = vpop.f32.mrb[0].mxu0
      %v2918 = vadd.f32 %v2750, %v2917
      %v2919 = vpop.f32.mrb[0].mxu0
      %2920 = vmatprep.mubr.f32.mxu0 0.0
      %2921 = vmatmul.mubr.f32.gmra.mrb[0].mxu0 %v2849
      %v2922 = vpop.f32.mrb[0].mxu0
      %v2923 = vadd.f32 %v2751, %v2922
      %v2924 = vpop.f32.mrb[0].mxu0
      %2925 = vdwg.mxu0
      %v2927 = vsel %vm331, %v2335, 0
      %v2930 = vsel %vm331, %v2340, 0
      %2932 = vmatprep.subr.mxu0 0.0
      %2933 = vmatpush1.msra.mxu0 %v2088
      %2934 = vmatprep.subr.mxu0 0.0
      %2935 = vmatpush1.msra.mxu0 %v2089
      %2936 = vmatprep.subr.mxu0 0.0
      %2937 = vmatpush1.msra.mxu0 0.0
      %2938 = vmatprep.subr.mxu0 0.0
      %2939 = vmatpush1.msra.mxu0 0.0
      %2940 = vmatprep.subr.mxu0 0.0
      %2941 = vmatpush1.msra.mxu0 0.0
      %2942 = vmatprep.subr.mxu0 0.0
      %2943 = vmatpush1.msra.mxu0 0.0
      %2944 = vmatprep.subr.mxu0 0.0
      %2945 = vmatpush1.msra.mxu0 0.0
      %2946 = vmatprep.subr.mxu0 0.0
      %2947 = vmatpush1.msra.mxu0 0.0
      %2948 = vmatprep.subr.mxu0 0.0
      %2949 = vmatpush1.msra.mxu0 0.0
      %2950 = vmatprep.subr.mxu0 0.0
      %2951 = vmatpush1.msra.mxu0 0.0
      %2952 = vmatprep.subr.mxu0 0.0
      %2953 = vmatpush1.msra.mxu0 0.0
      %2954 = vmatprep.subr.mxu0 0.0
      %2955 = vmatpush1.msra.mxu0 0.0
      %2956 = vmatprep.subr.mxu0 0.0
      %2957 = vmatpush1.msra.mxu0 0.0
      %2958 = vmatprep.subr.mxu0 0.0
      %2959 = vmatpush1.msra.mxu0 0.0
      %2960 = vmatprep.subr.mxu0 0.0
      %2961 = vmatpush1.msra.mxu0 0.0
      %2962 = vmatprep.subr.mxu0 0.0
      %2963 = vmatpush1.msra.mxu0 0.0
      %2964 = vmatprep.subr.mxu0 0.0
      %2965 = vmatpush1.msra.mxu0 0.0
      %2966 = vmatprep.subr.mxu0 0.0
      %2967 = vmatpush1.msra.mxu0 0.0
      %2968 = vmatprep.subr.mxu0 0.0
      %2969 = vmatpush1.msra.mxu0 0.0
      %2970 = vmatprep.subr.mxu0 0.0
      %2971 = vmatpush1.msra.mxu0 0.0
      %2972 = vmatprep.subr.mxu0 0.0
      %2973 = vmatpush1.msra.mxu0 0.0
      %2974 = vmatprep.subr.mxu0 0.0
      %2975 = vmatpush1.msra.mxu0 0.0
      %2976 = vmatprep.subr.mxu0 0.0
      %2977 = vmatpush1.msra.mxu0 0.0
      %2978 = vmatprep.subr.mxu0 0.0
      %2979 = vmatpush1.msra.mxu0 0.0
      %2980 = vmatprep.subr.mxu0 0.0
      %2981 = vmatpush1.msra.mxu0 0.0
      %2982 = vmatprep.subr.mxu0 0.0
      %2983 = vmatpush1.msra.mxu0 0.0
      %2984 = vmatprep.subr.mxu0 0.0
      %2985 = vmatpush1.msra.mxu0 0.0
      %2986 = vmatprep.subr.mxu0 0.0
      %2987 = vmatpush1.msra.mxu0 0.0
      %2988 = vmatprep.subr.mxu0 0.0
      %2989 = vmatpush1.msra.mxu0 0.0
      %2990 = vmatprep.subr.mxu0 0.0
      %2991 = vmatpush1.msra.mxu0 0.0
      %2992 = vmatprep.subr.mxu0 0.0
      %2993 = vmatpush1.msra.mxu0 0.0
      %2994 = vmatprep.subr.mxu0 0.0
      %2995 = vmatpush1.msra.mxu0 0.0
      %2996 = vmatprep.mubr.f32.mxu0 0.0
      %2997 = vmatmul.mubr.f32.gmra.mrb[0].mxu0 %v2927
      %v2998 = vpop.f32.mrb[0].mxu0
      %v2999 = vadd.f32 %v2752, %v2998
      %v3000 = vpop.f32.mrb[0].mxu0
      %3001 = vmatprep.mubr.f32.mxu0 0.0
      %3002 = vmatmul.mubr.f32.gmra.mrb[0].mxu0 %v2930
      %v3003 = vpop.f32.mrb[0].mxu0
      %v3004 = vadd.f32 %v2753, %v3003
      %v3005 = vpop.f32.mrb[0].mxu0
      %3006 = vdwg.mxu0
      %v3008 = vsel %vm331, %v2416, 0
      %v3011 = vsel %vm331, %v2421, 0
      %3013 = vmatprep.subr.mxu0 0.0
      %3014 = vmatpush1.msra.mxu0 %v2090
      %3015 = vmatprep.subr.mxu0 0.0
      %3016 = vmatpush1.msra.mxu0 %v2091
      %3017 = vmatprep.subr.mxu0 0.0
      %3018 = vmatpush1.msra.mxu0 0.0
      %3019 = vmatprep.subr.mxu0 0.0
      %3020 = vmatpush1.msra.mxu0 0.0
      %3021 = vmatprep.subr.mxu0 0.0
      %3022 = vmatpush1.msra.mxu0 0.0
      %3023 = vmatprep.subr.mxu0 0.0
      %3024 = vmatpush1.msra.mxu0 0.0
      %3025 = vmatprep.subr.mxu0 0.0
      %3026 = vmatpush1.msra.mxu0 0.0
      %3027 = vmatprep.subr.mxu0 0.0
      %3028 = vmatpush1.msra.mxu0 0.0
      %3029 = vmatprep.subr.mxu0 0.0
      %3030 = vmatpush1.msra.mxu0 0.0
      %3031 = vmatprep.subr.mxu0 0.0
      %3032 = vmatpush1.msra.mxu0 0.0
      %3033 = vmatprep.subr.mxu0 0.0
      %3034 = vmatpush1.msra.mxu0 0.0
      %3035 = vmatprep.subr.mxu0 0.0
      %3036 = vmatpush1.msra.mxu0 0.0
      %3037 = vmatprep.subr.mxu0 0.0
      %3038 = vmatpush1.msra.mxu0 0.0
      %3039 = vmatprep.subr.mxu0 0.0
      %3040 = vmatpush1.msra.mxu0 0.0
      %3041 = vmatprep.subr.mxu0 0.0
      %3042 = vmatpush1.msra.mxu0 0.0
      %3043 = vmatprep.subr.mxu0 0.0
      %3044 = vmatpush1.msra.mxu0 0.0
      %3045 = vmatprep.subr.mxu0 0.0
      %3046 = vmatpush1.msra.mxu0 0.0
      %3047 = vmatprep.subr.mxu0 0.0
      %3048 = vmatpush1.msra.mxu0 0.0
      %3049 = vmatprep.subr.mxu0 0.0
      %3050 = vmatpush1.msra.mxu0 0.0
      %3051 = vmatprep.subr.mxu0 0.0
      %3052 = vmatpush1.msra.mxu0 0.0
      %3053 = vmatprep.subr.mxu0 0.0
      %3054 = vmatpush1.msra.mxu0 0.0
      %3055 = vmatprep.subr.mxu0 0.0
      %3056 = vmatpush1.msra.mxu0 0.0
      %3057 = vmatprep.subr.mxu0 0.0
      %3058 = vmatpush1.msra.mxu0 0.0
      %3059 = vmatprep.subr.mxu0 0.0
      %3060 = vmatpush1.msra.mxu0 0.0
      %3061 = vmatprep.subr.mxu0 0.0
      %3062 = vmatpush1.msra.mxu0 0.0
      %3063 = vmatprep.subr.mxu0 0.0
      %3064 = vmatpush1.msra.mxu0 0.0
      %3065 = vmatprep.subr.mxu0 0.0
      %3066 = vmatpush1.msra.mxu0 0.0
      %3067 = vmatprep.subr.mxu0 0.0
      %3068 = vmatpush1.msra.mxu0 0.0
      %3069 = vmatprep.subr.mxu0 0.0
      %3070 = vmatpush1.msra.mxu0 0.0
      %3071 = vmatprep.subr.mxu0 0.0
      %3072 = vmatpush1.msra.mxu0 0.0
      %3073 = vmatprep.subr.mxu0 0.0
      %3074 = vmatpush1.msra.mxu0 0.0
      %3075 = vmatprep.subr.mxu0 0.0
      %3076 = vmatpush1.msra.mxu0 0.0
      %3077 = vmatprep.mubr.f32.mxu0 0.0
      %3078 = vmatmul.mubr.f32.gmra.mrb[0].mxu0 %v3008
      %v3079 = vpop.f32.mrb[0].mxu0
      %v3080 = vadd.f32 %v2754, %v3079
      %v3081 = vpop.f32.mrb[0].mxu0
      %3082 = vmatprep.mubr.f32.mxu0 0.0
      %3083 = vmatmul.mubr.f32.gmra.mrb[0].mxu0 %v3011
      %v3084 = vpop.f32.mrb[0].mxu0
      %v3085 = vadd.f32 %v2755, %v3084
      %v3086 = vpop.f32.mrb[0].mxu0
      %3087 = vdwg.mxu0
      %v3089 = vsel %vm331, %v2497, 0
      %v3092 = vsel %vm331, %v2502, 0
      %3094 = vmatprep.subr.mxu0 0.0
      %3095 = vmatpush1.msra.mxu0 %v2092
      %3096 = vmatprep.subr.mxu0 0.0
      %3097 = vmatpush1.msra.mxu0 %v2093
      %3098 = vmatprep.subr.mxu0 0.0
      %3099 = vmatpush1.msra.mxu0 0.0
      %3100 = vmatprep.subr.mxu0 0.0
      %3101 = vmatpush1.msra.mxu0 0.0
      %3102 = vmatprep.subr.mxu0 0.0
      %3103 = vmatpush1.msra.mxu0 0.0
      %3104 = vmatprep.subr.mxu0 0.0
      %3105 = vmatpush1.msra.mxu0 0.0
      %3106 = vmatprep.subr.mxu0 0.0
      %3107 = vmatpush1.msra.mxu0 0.0
      %3108 = vmatprep.subr.mxu0 0.0
      %3109 = vmatpush1.msra.mxu0 0.0
      %3110 = vmatprep.subr.mxu0 0.0
      %3111 = vmatpush1.msra.mxu0 0.0
      %3112 = vmatprep.subr.mxu0 0.0
      %3113 = vmatpush1.msra.mxu0 0.0
      %3114 = vmatprep.subr.mxu0 0.0
      %3115 = vmatpush1.msra.mxu0 0.0
      %3116 = vmatprep.subr.mxu0 0.0
      %3117 = vmatpush1.msra.mxu0 0.0
      %3118 = vmatprep.subr.mxu0 0.0
      %3119 = vmatpush1.msra.mxu0 0.0
      %3120 = vmatprep.subr.mxu0 0.0
      %3121 = vmatpush1.msra.mxu0 0.0
      %3122 = vmatprep.subr.mxu0 0.0
      %3123 = vmatpush1.msra.mxu0 0.0
      %3124 = vmatprep.subr.mxu0 0.0
      %3125 = vmatpush1.msra.mxu0 0.0
      %3126 = vmatprep.subr.mxu0 0.0
      %3127 = vmatpush1.msra.mxu0 0.0
      %3128 = vmatprep.subr.mxu0 0.0
      %3129 = vmatpush1.msra.mxu0 0.0
      %3130 = vmatprep.subr.mxu0 0.0
      %3131 = vmatpush1.msra.mxu0 0.0
      %3132 = vmatprep.subr.mxu0 0.0
      %3133 = vmatpush1.msra.mxu0 0.0
      %3134 = vmatprep.subr.mxu0 0.0
      %3135 = vmatpush1.msra.mxu0 0.0
      %3136 = vmatprep.subr.mxu0 0.0
      %3137 = vmatpush1.msra.mxu0 0.0
      %3138 = vmatprep.subr.mxu0 0.0
      %3139 = vmatpush1.msra.mxu0 0.0
      %3140 = vmatprep.subr.mxu0 0.0
      %3141 = vmatpush1.msra.mxu0 0.0
      %3142 = vmatprep.subr.mxu0 0.0
      %3143 = vmatpush1.msra.mxu0 0.0
      %3144 = vmatprep.subr.mxu0 0.0
      %3145 = vmatpush1.msra.mxu0 0.0
      %3146 = vmatprep.subr.mxu0 0.0
      %3147 = vmatpush1.msra.mxu0 0.0
      %3148 = vmatprep.subr.mxu0 0.0
      %3149 = vmatpush1.msra.mxu0 0.0
      %3150 = vmatprep.subr.mxu0 0.0
      %3151 = vmatpush1.msra.mxu0 0.0
      %3152 = vmatprep.subr.mxu0 0.0
      %3153 = vmatpush1.msra.mxu0 0.0
      %3154 = vmatprep.subr.mxu0 0.0
      %3155 = vmatpush1.msra.mxu0 0.0
      %3156 = vmatprep.subr.mxu0 0.0
      %3157 = vmatpush1.msra.mxu0 0.0
      %3158 = vmatprep.mubr.f32.mxu0 0.0
      %3159 = vmatmul.mubr.f32.gmra.mrb[0].mxu0 %v3089
      %v3160 = vpop.f32.mrb[0].mxu0
      %v3161 = vadd.f32 %v2756, %v3160
      %v3162 = vpop.f32.mrb[0].mxu0
      %3163 = vmatprep.mubr.f32.mxu0 0.0
      %3164 = vmatmul.mubr.f32.gmra.mrb[0].mxu0 %v3092
      %v3165 = vpop.f32.mrb[0].mxu0
      %v3166 = vadd.f32 %v2757, %v3165
      %v3167 = vpop.f32.mrb[0].mxu0
      %3168 = vdwg.mxu0
      %v3170 = vsel %vm331, %v2578, 0
      %v3173 = vsel %vm331, %v2583, 0
      %3175 = vmatprep.subr.mxu0 0.0
      %3176 = vmatpush1.msra.mxu0 %v2094
      %3177 = vmatprep.subr.mxu0 0.0
      %3178 = vmatpush1.msra.mxu0 %v2095
      %3179 = vmatprep.subr.mxu0 0.0
      %3180 = vmatpush1.msra.mxu0 0.0
      %3181 = vmatprep.subr.mxu0 0.0
      %3182 = vmatpush1.msra.mxu0 0.0
      %3183 = vmatprep.subr.mxu0 0.0
      %3184 = vmatpush1.msra.mxu0 0.0
      %3185 = vmatprep.subr.mxu0 0.0
      %3186 = vmatpush1.msra.mxu0 0.0
      %3187 = vmatprep.subr.mxu0 0.0
      %3188 = vmatpush1.msra.mxu0 0.0
      %3189 = vmatprep.subr.mxu0 0.0
      %3190 = vmatpush1.msra.mxu0 0.0
      %3191 = vmatprep.subr.mxu0 0.0
      %3192 = vmatpush1.msra.mxu0 0.0
      %3193 = vmatprep.subr.mxu0 0.0
      %3194 = vmatpush1.msra.mxu0 0.0
      %3195 = vmatprep.subr.mxu0 0.0
      %3196 = vmatpush1.msra.mxu0 0.0
      %3197 = vmatprep.subr.mxu0 0.0
      %3198 = vmatpush1.msra.mxu0 0.0
      %3199 = vmatprep.subr.mxu0 0.0
      %3200 = vmatpush1.msra.mxu0 0.0
      %3201 = vmatprep.subr.mxu0 0.0
      %3202 = vmatpush1.msra.mxu0 0.0
      %3203 = vmatprep.subr.mxu0 0.0
      %3204 = vmatpush1.msra.mxu0 0.0
      %3205 = vmatprep.subr.mxu0 0.0
      %3206 = vmatpush1.msra.mxu0 0.0
      %3207 = vmatprep.subr.mxu0 0.0
      %3208 = vmatpush1.msra.mxu0 0.0
      %3209 = vmatprep.subr.mxu0 0.0
      %3210 = vmatpush1.msra.mxu0 0.0
      %3211 = vmatprep.subr.mxu0 0.0
      %3212 = vmatpush1.msra.mxu0 0.0
      %3213 = vmatprep.subr.mxu0 0.0
      %3214 = vmatpush1.msra.mxu0 0.0
      %3215 = vmatprep.subr.mxu0 0.0
      %3216 = vmatpush1.msra.mxu0 0.0
      %3217 = vmatprep.subr.mxu0 0.0
      %3218 = vmatpush1.msra.mxu0 0.0
      %3219 = vmatprep.subr.mxu0 0.0
      %3220 = vmatpush1.msra.mxu0 0.0
      %3221 = vmatprep.subr.mxu0 0.0
      %3222 = vmatpush1.msra.mxu0 0.0
      %3223 = vmatprep.subr.mxu0 0.0
      %3224 = vmatpush1.msra.mxu0 0.0
      %3225 = vmatprep.subr.mxu0 0.0
      %3226 = vmatpush1.msra.mxu0 0.0
      %3227 = vmatprep.subr.mxu0 0.0
      %3228 = vmatpush1.msra.mxu0 0.0
      %3229 = vmatprep.subr.mxu0 0.0
      %3230 = vmatpush1.msra.mxu0 0.0
      %3231 = vmatprep.subr.mxu0 0.0
      %3232 = vmatpush1.msra.mxu0 0.0
      %3233 = vmatprep.subr.mxu0 0.0
      %3234 = vmatpush1.msra.mxu0 0.0
      %3235 = vmatprep.subr.mxu0 0.0
      %3236 = vmatpush1.msra.mxu0 0.0
      %3237 = vmatprep.subr.mxu0 0.0
      %3238 = vmatpush1.msra.mxu0 0.0
      %3239 = vmatprep.mubr.f32.mxu0 0.0
      %3240 = vmatmul.mubr.f32.gmra.mrb[0].mxu0 %v3170
      %v3241 = vpop.f32.mrb[0].mxu0
      %v3242 = vadd.f32 %v2758, %v3241
      %v3243 = vpop.f32.mrb[0].mxu0
      %3244 = vmatprep.mubr.f32.mxu0 0.0
      %3245 = vmatmul.mubr.f32.gmra.mrb[0].mxu0 %v3173
      %v3246 = vpop.f32.mrb[0].mxu0
      %v3247 = vadd.f32 %v2759, %v3246
      %v3248 = vpop.f32.mrb[0].mxu0
      %3249 = vdwg.mxu0
      %v3251 = vsel %vm331, %v2659, 0
      %v3254 = vsel %vm331, %v2664, 0
      %3256 = vmatprep.subr.mxu0 0.0
      %3257 = vmatpush1.msra.mxu0 %v2096
      %3258 = vmatprep.subr.mxu0 0.0
      %3259 = vmatpush1.msra.mxu0 %v2097
      %3260 = vmatprep.subr.mxu0 0.0
      %3261 = vmatpush1.msra.mxu0 0.0
      %3262 = vmatprep.subr.mxu0 0.0
      %3263 = vmatpush1.msra.mxu0 0.0
      %3264 = vmatprep.subr.mxu0 0.0
      %3265 = vmatpush1.msra.mxu0 0.0
      %3266 = vmatprep.subr.mxu0 0.0
      %3267 = vmatpush1.msra.mxu0 0.0
      %3268 = vmatprep.subr.mxu0 0.0
      %3269 = vmatpush1.msra.mxu0 0.0
      %3270 = vmatprep.subr.mxu0 0.0
      %3271 = vmatpush1.msra.mxu0 0.0
      %3272 = vmatprep.subr.mxu0 0.0
      %3273 = vmatpush1.msra.mxu0 0.0
      %3274 = vmatprep.subr.mxu0 0.0
      %3275 = vmatpush1.msra.mxu0 0.0
      %3276 = vmatprep.subr.mxu0 0.0
      %3277 = vmatpush1.msra.mxu0 0.0
      %3278 = vmatprep.subr.mxu0 0.0
      %3279 = vmatpush1.msra.mxu0 0.0
      %3280 = vmatprep.subr.mxu0 0.0
      %3281 = vmatpush1.msra.mxu0 0.0
      %3282 = vmatprep.subr.mxu0 0.0
      %3283 = vmatpush1.msra.mxu0 0.0
      %3284 = vmatprep.subr.mxu0 0.0
      %3285 = vmatpush1.msra.mxu0 0.0
      %3286 = vmatprep.subr.mxu0 0.0
      %3287 = vmatpush1.msra.mxu0 0.0
      %3288 = vmatprep.subr.mxu0 0.0
      %3289 = vmatpush1.msra.mxu0 0.0
      %3290 = vmatprep.subr.mxu0 0.0
      %3291 = vmatpush1.msra.mxu0 0.0
      %3292 = vmatprep.subr.mxu0 0.0
      %3293 = vmatpush1.msra.mxu0 0.0
      %3294 = vmatprep.subr.mxu0 0.0
      %3295 = vmatpush1.msra.mxu0 0.0
      %3296 = vmatprep.subr.mxu0 0.0
      %3297 = vmatpush1.msra.mxu0 0.0
      %3298 = vmatprep.subr.mxu0 0.0
      %3299 = vmatpush1.msra.mxu0 0.0
      %3300 = vmatprep.subr.mxu0 0.0
      %3301 = vmatpush1.msra.mxu0 0.0
      %3302 = vmatprep.subr.mxu0 0.0
      %3303 = vmatpush1.msra.mxu0 0.0
      %3304 = vmatprep.subr.mxu0 0.0
      %3305 = vmatpush1.msra.mxu0 0.0
      %3306 = vmatprep.subr.mxu0 0.0
      %3307 = vmatpush1.msra.mxu0 0.0
      %3308 = vmatprep.subr.mxu0 0.0
      %3309 = vmatpush1.msra.mxu0 0.0
      %3310 = vmatprep.subr.mxu0 0.0
      %3311 = vmatpush1.msra.mxu0 0.0
      %3312 = vmatprep.subr.mxu0 0.0
      %3313 = vmatpush1.msra.mxu0 0.0
      %3314 = vmatprep.subr.mxu0 0.0
      %3315 = vmatpush1.msra.mxu0 0.0
      %3316 = vmatprep.subr.mxu0 0.0
      %3317 = vmatpush1.msra.mxu0 0.0
      %3318 = vmatprep.subr.mxu0 0.0
      %3319 = vmatpush1.msra.mxu0 0.0
      %3320 = vmatprep.mubr.f32.mxu0 0.0
      %3321 = vmatmul.mubr.f32.gmra.mrb[0].mxu0 %v3251
      %v3322 = vpop.f32.mrb[0].mxu0
      %v3323 = vadd.f32 %v2760, %v3322
      %v3324 = vpop.f32.mrb[0].mxu0
      %3325 = vmatprep.mubr.f32.mxu0 0.0
      %3326 = vmatmul.mubr.f32.gmra.mrb[0].mxu0 %v3254
      %v3327 = vpop.f32.mrb[0].mxu0
      %v3328 = vadd.f32 %v2761, %v3327
      %v3329 = vpop.f32.mrb[0].mxu0
      %3330 = vdwg.mxu0
      %v3332 = vsel %vm331, %v2740, 0
      %v3335 = vsel %vm331, %v2745, 0
      %3337 = vmatprep.subr.mxu0 0.0
      %3338 = vmatpush1.msra.mxu0 %v2098
      %3339 = vmatprep.subr.mxu0 0.0
      %3340 = vmatpush1.msra.mxu0 %v2099
      %3341 = vmatprep.subr.mxu0 0.0
      %3342 = vmatpush1.msra.mxu0 0.0
      %3343 = vmatprep.subr.mxu0 0.0
      %3344 = vmatpush1.msra.mxu0 0.0
      %3345 = vmatprep.subr.mxu0 0.0
      %3346 = vmatpush1.msra.mxu0 0.0
      %3347 = vmatprep.subr.mxu0 0.0
      %3348 = vmatpush1.msra.mxu0 0.0
      %3349 = vmatprep.subr.mxu0 0.0
      %3350 = vmatpush1.msra.mxu0 0.0
      %3351 = vmatprep.subr.mxu0 0.0
      %3352 = vmatpush1.msra.mxu0 0.0
      %3353 = vmatprep.subr.mxu0 0.0
      %3354 = vmatpush1.msra.mxu0 0.0
      %3355 = vmatprep.subr.mxu0 0.0
      %3356 = vmatpush1.msra.mxu0 0.0
      %3357 = vmatprep.subr.mxu0 0.0
      %3358 = vmatpush1.msra.mxu0 0.0
      %3359 = vmatprep.subr.mxu0 0.0
      %3360 = vmatpush1.msra.mxu0 0.0
      %3361 = vmatprep.subr.mxu0 0.0
      %3362 = vmatpush1.msra.mxu0 0.0
      %3363 = vmatprep.subr.mxu0 0.0
      %3364 = vmatpush1.msra.mxu0 0.0
      %3365 = vmatprep.subr.mxu0 0.0
      %3366 = vmatpush1.msra.mxu0 0.0
      %3367 = vmatprep.subr.mxu0 0.0
      %3368 = vmatpush1.msra.mxu0 0.0
      %3369 = vmatprep.subr.mxu0 0.0
      %3370 = vmatpush1.msra.mxu0 0.0
      %3371 = vmatprep.subr.mxu0 0.0
      %3372 = vmatpush1.msra.mxu0 0.0
      %3373 = vmatprep.subr.mxu0 0.0
      %3374 = vmatpush1.msra.mxu0 0.0
      %3375 = vmatprep.subr.mxu0 0.0
      %3376 = vmatpush1.msra.mxu0 0.0
      %3377 = vmatprep.subr.mxu0 0.0
      %3378 = vmatpush1.msra.mxu0 0.0
      %3379 = vmatprep.subr.mxu0 0.0
      %3380 = vmatpush1.msra.mxu0 0.0
      %3381 = vmatprep.subr.mxu0 0.0
      %3382 = vmatpush1.msra.mxu0 0.0
      %3383 = vmatprep.subr.mxu0 0.0
      %3384 = vmatpush1.msra.mxu0 0.0
      %3385 = vmatprep.subr.mxu0 0.0
      %3386 = vmatpush1.msra.mxu0 0.0
      %3387 = vmatprep.subr.mxu0 0.0
      %3388 = vmatpush1.msra.mxu0 0.0
      %3389 = vmatprep.subr.mxu0 0.0
      %3390 = vmatpush1.msra.mxu0 0.0
      %3391 = vmatprep.subr.mxu0 0.0
      %3392 = vmatpush1.msra.mxu0 0.0
      %3393 = vmatprep.subr.mxu0 0.0
      %3394 = vmatpush1.msra.mxu0 0.0
      %3395 = vmatprep.subr.mxu0 0.0
      %3396 = vmatpush1.msra.mxu0 0.0
      %3397 = vmatprep.subr.mxu0 0.0
      %3398 = vmatpush1.msra.mxu0 0.0
      %3399 = vmatprep.subr.mxu0 0.0
      %3400 = vmatpush1.msra.mxu0 0.0
      %3401 = vmatprep.mubr.f32.mxu0 0.0
      %3402 = vmatmul.mubr.f32.gmra.mrb[0].mxu0 %v3332
      %v3403 = vpop.f32.mrb[0].mxu0
      %v3404 = vadd.f32 %v2762, %v3403
      %v3405 = vpop.f32.mrb[0].mxu0
      %3406 = vmatprep.mubr.f32.mxu0 0.0
      %3407 = vmatmul.mubr.f32.gmra.mrb[0].mxu0 %v3335
      %v3408 = vpop.f32.mrb[0].mxu0
      %v3409 = vadd.f32 %v2763, %v3408
      %v3410 = vpop.f32.mrb[0].mxu0
      %3411 = vdwg.mxu0
      %v3412 = vsel %vm331, %v2837, 0.0
      %v3413 = vsel %vm331, %v2842, 0.0
      %v3414 = vadd.f32 %v3412, %v3413
      %v3415 = vsel %vm331, %v2918, 0.0
      %v3416 = vadd.f32 %v3414, %v3415
      %v3417 = vsel %vm331, %v2923, 0.0
      %v3418 = vadd.f32 %v3416, %v3417
      %v3419 = vsel %vm331, %v2999, 0.0
      %v3420 = vadd.f32 %v3418, %v3419
      %v3421 = vsel %vm331, %v3004, 0.0
      %v3422 = vadd.f32 %v3420, %v3421
      %v3423 = vsel %vm331, %v3080, 0.0
      %v3424 = vadd.f32 %v3422, %v3423
      %v3425 = vsel %vm331, %v3085, 0.0
      %v3426 = vadd.f32 %v3424, %v3425
      %v3427 = vsel %vm331, %v3161, 0.0
      %v3428 = vadd.f32 %v3426, %v3427
      %v3429 = vsel %vm331, %v3166, 0.0
      %v3430 = vadd.f32 %v3428, %v3429
      %v3431 = vsel %vm331, %v3242, 0.0
      %v3432 = vadd.f32 %v3430, %v3431
      %v3433 = vsel %vm331, %v3247, 0.0
      %v3434 = vadd.f32 %v3432, %v3433
      %v3435 = vsel %vm331, %v3323, 0.0
      %v3436 = vadd.f32 %v3434, %v3435
      %v3437 = vsel %vm331, %v3328, 0.0
      %v3438 = vadd.f32 %v3436, %v3437
      %v3439 = vsel %vm331, %v3404, 0.0
      %v3440 = vadd.f32 %v3438, %v3439
      %v3441 = vsel %vm331, %v3409, 0.0
      %v3442 = vadd.f32 %v3440, %v3441
      %3443 = vadd.xlane.f32.xlu0 %v3442
      %v3444 = vpop.xlane.xlu0 %3443
      %v3445 = vrot.slane %v3444, 4
      %v3446 = vadd.f32 %v3444, %v3445
      %v3447 = vrot.slane %v3446, 2
      %v3448 = vadd.f32 %v3446, %v3447
      %v3449 = vrot.slane %v3448, 1
      %v3450 = vadd.f32 %v3448, %v3449
      %s3451 = vtos %v3450
      %v3452 = vstv %s3451
      %v3453 = vrcp.pop 2048.0
      %v3454 = vmul.f32 %v3452, %v3453
      %v3455 = vsub.f32 %v2837, %v3454
      %v3456 = vsub.f32 %v2842, %v3454
      %v3457 = vsub.f32 %v2918, %v3454
      %v3458 = vsub.f32 %v2923, %v3454
      %v3459 = vsub.f32 %v2999, %v3454
      %v3460 = vsub.f32 %v3004, %v3454
      %v3461 = vsub.f32 %v3080, %v3454
      %v3462 = vsub.f32 %v3085, %v3454
      %v3463 = vsub.f32 %v3161, %v3454
      %v3464 = vsub.f32 %v3166, %v3454
      %v3465 = vsub.f32 %v3242, %v3454
      %v3466 = vsub.f32 %v3247, %v3454
      %v3467 = vsub.f32 %v3323, %v3454
      %v3468 = vsub.f32 %v3328, %v3454
      %v3469 = vsub.f32 %v3404, %v3454
      %v3470 = vsub.f32 %v3409, %v3454
      %v3471 = vmul.f32 %v3455, %v3455
      %v3472 = vmul.f32 %v3456, %v3456
      %v3473 = vmul.f32 %v3457, %v3457
      %v3474 = vmul.f32 %v3458, %v3458
      %v3475 = vmul.f32 %v3459, %v3459
      %v3476 = vmul.f32 %v3460, %v3460
      %v3477 = vmul.f32 %v3461, %v3461
      %v3478 = vmul.f32 %v3462, %v3462
      %v3479 = vmul.f32 %v3463, %v3463
      %v3480 = vmul.f32 %v3464, %v3464
      %v3481 = vmul.f32 %v3465, %v3465
      %v3482 = vmul.f32 %v3466, %v3466
      %v3483 = vmul.f32 %v3467, %v3467
      %v3484 = vmul.f32 %v3468, %v3468
      %v3485 = vmul.f32 %v3469, %v3469
      %v3486 = vmul.f32 %v3470, %v3470
      %v3487 = vsel %vm331, %v3471, 0.0
      %v3488 = vsel %vm331, %v3472, 0.0
      %v3489 = vadd.f32 %v3487, %v3488
      %v3490 = vsel %vm331, %v3473, 0.0
      %v3491 = vadd.f32 %v3489, %v3490
      %v3492 = vsel %vm331, %v3474, 0.0
      %v3493 = vadd.f32 %v3491, %v3492
      %v3494 = vsel %vm331, %v3475, 0.0
      %v3495 = vadd.f32 %v3493, %v3494
      %v3496 = vsel %vm331, %v3476, 0.0
      %v3497 = vadd.f32 %v3495, %v3496
      %v3498 = vsel %vm331, %v3477, 0.0
      %v3499 = vadd.f32 %v3497, %v3498
      %v3500 = vsel %vm331, %v3478, 0.0
      %v3501 = vadd.f32 %v3499, %v3500
      %v3502 = vsel %vm331, %v3479, 0.0
      %v3503 = vadd.f32 %v3501, %v3502
      %v3504 = vsel %vm331, %v3480, 0.0
      %v3505 = vadd.f32 %v3503, %v3504
      %v3506 = vsel %vm331, %v3481, 0.0
      %v3507 = vadd.f32 %v3505, %v3506
      %v3508 = vsel %vm331, %v3482, 0.0
      %v3509 = vadd.f32 %v3507, %v3508
      %v3510 = vsel %vm331, %v3483, 0.0
      %v3511 = vadd.f32 %v3509, %v3510
      %v3512 = vsel %vm331, %v3484, 0.0
      %v3513 = vadd.f32 %v3511, %v3512
      %v3514 = vsel %vm331, %v3485, 0.0
      %v3515 = vadd.f32 %v3513, %v3514
      %v3516 = vsel %vm331, %v3486, 0.0
      %v3517 = vadd.f32 %v3515, %v3516
      %3518 = vadd.xlane.f32.xlu0 %v3517
      %v3519 = vpop.xlane.xlu0 %3518
      %v3520 = vrot.slane %v3519, 4
      %v3521 = vadd.f32 %v3519, %v3520
      %v3522 = vrot.slane %v3521, 2
      %v3523 = vadd.f32 %v3521, %v3522
      %v3524 = vrot.slane %v3523, 1
      %v3525 = vadd.f32 %v3523, %v3524
      %s3526 = vtos %v3525
      %v3527 = vstv %s3526
      %v3528 = vmul.f32 %v3527, %v3453
      %v3529 = vadd.f32 %v3528, 1e-05
      %v3530 = vrsqrt.pop %v3529
      %v3531 = vmul.f32 %v3455, %v3530
      %v3532 = vmul.f32 %v3456, %v3530
      %v3533 = vmul.f32 %v3457, %v3530
      %v3534 = vmul.f32 %v3458, %v3530
      %v3535 = vmul.f32 %v3459, %v3530
      %v3536 = vmul.f32 %v3460, %v3530
      %v3537 = vmul.f32 %v3461, %v3530
      %v3538 = vmul.f32 %v3462, %v3530
      %v3539 = vmul.f32 %v3463, %v3530
      %v3540 = vmul.f32 %v3464, %v3530
      %v3541 = vmul.f32 %v3465, %v3530
      %v3542 = vmul.f32 %v3466, %v3530
      %v3543 = vmul.f32 %v3467, %v3530
      %v3544 = vmul.f32 %v3468, %v3530
      %v3545 = vmul.f32 %v3469, %v3530
      %v3546 = vmul.f32 %v3470, %v3530
      %v3547 = vld [vmem:[%s3] sm:$0xff]
      %v3548 = vld [vmem:[%s3 + $0x8] sm:$0xff]
      %v3549 = vld [vmem:[%s3 + $0x10] sm:$0xff]
      %v3550 = vld [vmem:[%s3 + $0x18] sm:$0xff]
      %v3551 = vld [vmem:[%s3 + $0x20] sm:$0xff]
      %v3552 = vld [vmem:[%s3 + $0x28] sm:$0xff]
      %v3553 = vld [vmem:[%s3 + $0x30] sm:$0xff]
      %v3554 = vld [vmem:[%s3 + $0x38] sm:$0xff]
      %v3555 = vld [vmem:[%s3 + $0x40] sm:$0xff]
      %v3556 = vld [vmem:[%s3 + $0x48] sm:$0xff]
      %v3557 = vld [vmem:[%s3 + $0x50] sm:$0xff]
      %v3558 = vld [vmem:[%s3 + $0x58] sm:$0xff]
      %v3559 = vld [vmem:[%s3 + $0x60] sm:$0xff]
      %v3560 = vld [vmem:[%s3 + $0x68] sm:$0xff]
      %v3561 = vld [vmem:[%s3 + $0x70] sm:$0xff]
      %v3562 = vld [vmem:[%s3 + $0x78] sm:$0xff]
      %v3563 = vmul.f32 %v3531, %v3547
      %v3564 = vmul.f32 %v3532, %v3548
      %v3565 = vmul.f32 %v3533, %v3549
      %v3566 = vmul.f32 %v3534, %v3550
      %v3567 = vmul.f32 %v3535, %v3551
      %v3568 = vmul.f32 %v3536, %v3552
      %v3569 = vmul.f32 %v3537, %v3553
      %v3570 = vmul.f32 %v3538, %v3554
      %v3571 = vmul.f32 %v3539, %v3555
      %v3572 = vmul.f32 %v3540, %v3556
      %v3573 = vmul.f32 %v3541, %v3557
      %v3574 = vmul.f32 %v3542, %v3558
      %v3575 = vmul.f32 %v3543, %v3559
      %v3576 = vmul.f32 %v3544, %v3560
      %v3577 = vmul.f32 %v3545, %v3561
      %v3578 = vmul.f32 %v3546, %v3562
      %v3579 = vld [vmem:[%s4] sm:$0xff]
      %v3580 = vld [vmem:[%s4 + $0x8] sm:$0xff]
      %v3581 = vld [vmem:[%s4 + $0x10] sm:$0xff]
      %v3582 = vld [vmem:[%s4 + $0x18] sm:$0xff]
      %v3583 = vld [vmem:[%s4 + $0x20] sm:$0xff]
      %v3584 = vld [vmem:[%s4 + $0x28] sm:$0xff]
      %v3585 = vld [vmem:[%s4 + $0x30] sm:$0xff]
      %v3586 = vld [vmem:[%s4 + $0x38] sm:$0xff]
      %v3587 = vld [vmem:[%s4 + $0x40] sm:$0xff]
      %v3588 = vld [vmem:[%s4 + $0x48] sm:$0xff]
      %v3589 = vld [vmem:[%s4 + $0x50] sm:$0xff]
      %v3590 = vld [vmem:[%s4 + $0x58] sm:$0xff]
      %v3591 = vld [vmem:[%s4 + $0x60] sm:$0xff]
      %v3592 = vld [vmem:[%s4 + $0x68] sm:$0xff]
      %v3593 = vld [vmem:[%s4 + $0x70] sm:$0xff]
      %v3594 = vld [vmem:[%s4 + $0x78] sm:$0xff]
      %v3595 = vadd.f32 %v3563, %v3579
      %v3596 = vadd.f32 %v3564, %v3580
      %v3597 = vadd.f32 %v3565, %v3581
      %v3598 = vadd.f32 %v3566, %v3582
      %v3599 = vadd.f32 %v3567, %v3583
      %v3600 = vadd.f32 %v3568, %v3584
      %v3601 = vadd.f32 %v3569, %v3585
      %v3602 = vadd.f32 %v3570, %v3586
      %v3603 = vadd.f32 %v3571, %v3587
      %v3604 = vadd.f32 %v3572, %v3588
      %v3605 = vadd.f32 %v3573, %v3589
      %v3606 = vadd.f32 %v3574, %v3590
      %v3607 = vadd.f32 %v3575, %v3591
      %v3608 = vadd.f32 %v3576, %v3592
      %v3609 = vadd.f32 %v3577, %v3593
      %v3610 = vadd.f32 %v3578, %v3594
      %3611 = vst.msk [vmem:[%s264] sm:$0xff] %vm331, %v3595
      %3612 = vst.msk [vmem:[%s264 + $0x8] sm:$0xff] %vm331, %v3596
      %3613 = vst.msk [vmem:[%s264 + $0x10] sm:$0xff] %vm331, %v3597
      %3614 = vst.msk [vmem:[%s264 + $0x18] sm:$0xff] %vm331, %v3598
      %3615 = vst.msk [vmem:[%s264 + $0x20] sm:$0xff] %vm331, %v3599
      %3616 = vst.msk [vmem:[%s264 + $0x28] sm:$0xff] %vm331, %v3600
      %3617 = vst.msk [vmem:[%s264 + $0x30] sm:$0xff] %vm331, %v3601
      %3618 = vst.msk [vmem:[%s264 + $0x38] sm:$0xff] %vm331, %v3602
      %3619 = vst.msk [vmem:[%s264 + $0x40] sm:$0xff] %vm331, %v3603
      %3620 = vst.msk [vmem:[%s264 + $0x48] sm:$0xff] %vm331, %v3604
      %3621 = vst.msk [vmem:[%s264 + $0x50] sm:$0xff] %vm331, %v3605
      %3622 = vst.msk [vmem:[%s264 + $0x58] sm:$0xff] %vm331, %v3606
      %3623 = vst.msk [vmem:[%s264 + $0x60] sm:$0xff] %vm331, %v3607
      %3624 = vst.msk [vmem:[%s264 + $0x68] sm:$0xff] %vm331, %v3608
      %3625 = vst.msk [vmem:[%s264 + $0x70] sm:$0xff] %vm331, %v3609
      %3626 = vst.msk [vmem:[%s264 + $0x78] sm:$0xff] %vm331, %v3610
      %p3627 = scmp.lt.s32.totalorder %s16, 1
      %s3628 = scalar_select %p3627, %s16, 1
      %s3629 = smul.addr %s3628, 16
      %s3630 = smul.addr %s3629, 8
      %s3631 = scalar_lea.vmem %s5, %s3630
      // Predicated region
      $region41: #{decoder_forward.6} parent=39 // pred_check
        %p3632 = pneg %p154
      $region42: #{decoder_forward.6} parent=39 // pred_check_branch
        %3634 = sbr.rel (%p3632) target = $region44
      $region43: #{decoder_forward.6} parent=39 // pred_region
        _
      $region44: #{decoder_forward.6} parent=39 // pred_fallthru
        _
    $region40: #{decoder_forward.6} parent=5 // pred_fallthru
      _
    %p3635 = scmp.le.s32.totalorder 2, %s11
    // Predicated region
    $region45: #{decoder_forward.6} parent=5 // pred_check
      %p3636 = pneg %p3635
    $region46: #{decoder_forward.6} parent=5 // pred_check_branch
      %3638 = sbr.rel (%p3636) target = $region48
    $region47: #{decoder_forward.6} parent=5 // pred_region
      %s3639 = ssub.s32 %s11, 2
      // Predicated region
      $region49: #{decoder_forward.6} parent=47 // pred_check
        %p3640 = pneg %p160
      $region50: #{decoder_forward.6} parent=47 // pred_check_branch
        %3642 = sbr.rel (%p3640) target = $region52
      $region51: #{decoder_forward.6} parent=47 // pred_region
        %p3643 = scmp.lt.s32.totalorder %s17, 1
        %s3644 = scalar_select %p3643, %s17, 1
        %s3645 = smul.addr %s3644, 16
        %s3646 = smul.addr %s3645, 8
        %s3647 = scalar_lea.vmem %s5, %s3646
      $region52: #{decoder_forward.6} parent=47 // pred_fallthru
        _
    $region48: #{decoder_forward.6} parent=5 // pred_fallthru
      _
  $region6: #{decoder_forward.6} parent=0 // loop_footer
    %s15 = sadd.s32 1, %s11
  $region7: #{decoder_forward.6} parent=0 // loop_footer_branch
    %10 = sbr.rel target = $region3
  $region8: #{decoder_forward.6} parent=0 // loop_exit
    _

// kernel: decoder_forward.9
$region0: #{decoder_forward.9}
  #allocation0 [shape = 'u32[]', space=smem, size = 0x4, offset = 0x4, fixed_abs, tag = 'smem constant byte address 0x4 - core index']
  #allocation1 [shape = 'u32[144,128]{1,0:T(1,128)}', space=vmem, size = 0x12000, scoped, tag = 'internal scratch']
  %s0 = inlined_call_operand.vmem [shape: bf16[2,73,256], index: 0, kind: input, shape index: {}]
  %s1 = inlined_call_operand.vmem [shape: f32[2,8,256], index: 1, kind: input, shape index: {}]
  %s2 = inlined_call_operand.vmem [shape: bf16[8,73], index: 2, kind: input, shape index: {}]
  %s3 = inlined_call_operand.vmem [shape: f32[8,256], index: 3, kind: input, shape index: {}]
  %s4 = inlined_call_operand.vmem [shape: f32[8,256], index: 4, kind: input, shape index: {}]
  %s5 = inlined_call_operand.vmem [shape: f32[2,8,256], index: 5, kind: output, shape index: {}]
  %s6 = sld [smem:[#allocation0]]
  $region53: #{decoder_forward.9} parent=0
    _
  %s8 = ssub.s32 1, %s6
  %s9 = scalar_select 0, %s8, %s6
  loop: start=0, step=1, limit=4
  $region2: #{decoder_forward.9} parent=0 // loop_pre_header
    _
  $region3: #{decoder_forward.9} parent=0 // loop_header
    %s11 = sphi 0, %s15
    %p12 = scmp.ge.s32.totalorder %s11, 4
    %s21 = sphi 0, %s23
    %s24 = sphi 0, %s21
    %s25 = sphi 0, %s24
    %s41 = sphi 0, %s25
    %s47 = sphi 0, %s49
    %s50 = sphi 0, %s47
    %s51 = sphi 0, %s50
    %s67 = sphi 0, %s51
    %s71 = sphi 0, %s71
    %s73 = sphi 0, %s71
    %s74 = sphi 0, %s73
    %s88 = sphi 0, %s74
    %s92 = sphi 0, %s92
    %s94 = sphi 0, %s92
    %s95 = sphi 0, %s94
    %s109 = sphi 0, %s95
    %s113 = sphi 0, %s113
    %s115 = sphi 0, %s113
    %s116 = sphi 0, %s115
    %s130 = sphi 0, %s116
    %s136 = sphi 0, %s138
    %s139 = sphi 0, %s136
    %s140 = sphi 0, %s139
    %s156 = sphi 0, %s140
  $region4: #{decoder_forward.9} parent=0 // loop_header_branch
    %14 = sbr.rel (%p12) target = $region8
  $region5: #{decoder_forward.9} parent=0 // loop_body
    %s16 = ssub.s32 %s11, 1
    %s17 = ssub.s32 %s11, 2
    %s18 = sadd.s32 %s11, 1
    %s19 = ssub.s32 %s11, %s18
    %p20 = scmp.eq.s32.totalorder %s19, 0
    %s22 = sadd.s32 %s21, 1
    %s23 = scalar_select %p20, %s21, %s22
    %p26 = pneg %p20
    %p27 = scmp.eq.s32.totalorder %s11, 1
    %p28 = por %p26, %p27
    %p29 = scmp.ne.s32.totalorder %s21, %s24
    %p30 = scmp.eq.s32.totalorder %s11, 0
    %p31 = por %p29, %p30
    %p32 = scmp.ne.s32.totalorder %s21, %s24
    %p33 = scmp.eq.s32.totalorder %s16, 1
    %p34 = por %p32, %p33
    %p35 = scmp.ne.s32.totalorder %s24, %s25
    %p36 = scmp.eq.s32.totalorder %s16, 0
    %p37 = por %p35, %p36
    %p38 = scmp.ne.s32.totalorder %s24, %s25
    %p39 = scmp.eq.s32.totalorder %s17, 1
    %p40 = por %p38, %p39
    %p42 = scmp.ne.s32.totalorder %s25, %s41
    %p43 = scmp.eq.s32.totalorder %s17, 0
    %p44 = por %p42, %p43
    %s45 = ssub.s32 %s11, %s18
    %p46 = scmp.eq.s32.totalorder %s45, 0
    %s48 = sadd.s32 %s47, 1
    %s49 = scalar_select %p46, %s47, %s48
    %p52 = pneg %p46
    %p53 = scmp.eq.s32.totalorder %s11, 1
    %p54 = por %p52, %p53
    %p55 = scmp.ne.s32.totalorder %s47, %s50
    %p56 = scmp.eq.s32.totalorder %s11, 0
    %p57 = por %p55, %p56
    %p58 = scmp.ne.s32.totalorder %s47, %s50
    %p59 = scmp.eq.s32.totalorder %s16, 1
    %p60 = por %p58, %p59
    %p61 = scmp.ne.s32.totalorder %s50, %s51
    %p62 = scmp.eq.s32.totalorder %s16, 0
    %p63 = por %p61, %p62
    %p64 = scmp.ne.s32.totalorder %s50, %s51
    %p65 = scmp.eq.s32.totalorder %s17, 1
    %p66 = por %p64, %p65
    %p68 = scmp.ne.s32.totalorder %s51, %s67
    %p69 = scmp.eq.s32.totalorder %s17, 0
    %p70 = por %p68, %p69
    %s72 = sadd.s32 %s71, 1
    %p75 = scmp.eq.s32.totalorder %s11, 1
    %p76 = scmp.ne.s32.totalorder %s71, %s73
    %p77 = scmp.eq.s32.totalorder %s11, 0
    %p78 = por %p76, %p77
    %p79 = scmp.ne.s32.totalorder %s71, %s73
    %p80 = scmp.eq.s32.totalorder %s16, 1
    %p81 = por %p79, %p80
    %p82 = scmp.ne.s32.totalorder %s73, %s74
    %p83 = scmp.eq.s32.totalorder %s16, 0
    %p84 = por %p82, %p83
    %p85 = scmp.ne.s32.totalorder %s73, %s74
    %p86 = scmp.eq.s32.totalorder %s17, 1
    %p87 = por %p85, %p86
    %p89 = scmp.ne.s32.totalorder %s74, %s88
    %p90 = scmp.eq.s32.totalorder %s17, 0
    %p91 = por %p89, %p90
    %s93 = sadd.s32 %s92, 1
    %p96 = scmp.eq.s32.totalorder %s11, 1
    %p97 = scmp.ne.s32.totalorder %s92, %s94
    %p98 = scmp.eq.s32.totalorder %s11, 0
    %p99 = por %p97, %p98
    %p100 = scmp.ne.s32.totalorder %s92, %s94
    %p101 = scmp.eq.s32.totalorder %s16, 1
    %p102 = por %p100, %p101
    %p103 = scmp.ne.s32.totalorder %s94, %s95
    %p104 = scmp.eq.s32.totalorder %s16, 0
    %p105 = por %p103, %p104
    %p106 = scmp.ne.s32.totalorder %s94, %s95
    %p107 = scmp.eq.s32.totalorder %s17, 1
    %p108 = por %p106, %p107
    %p110 = scmp.ne.s32.totalorder %s95, %s109
    %p111 = scmp.eq.s32.totalorder %s17, 0
    %p112 = por %p110, %p111
    %s114 = sadd.s32 %s113, 1
    %p117 = scmp.eq.s32.totalorder %s11, 1
    %p118 = scmp.ne.s32.totalorder %s113, %s115
    %p119 = scmp.eq.s32.totalorder %s11, 0
    %p120 = por %p118, %p119
    %p121 = scmp.ne.s32.totalorder %s113, %s115
    %p122 = scmp.eq.s32.totalorder %s16, 1
    %p123 = por %p121, %p122
    %p124 = scmp.ne.s32.totalorder %s115, %s116
    %p125 = scmp.eq.s32.totalorder %s16, 0
    %p126 = por %p124, %p125
    %p127 = scmp.ne.s32.totalorder %s115, %s116
    %p128 = scmp.eq.s32.totalorder %s17, 1
    %p129 = por %p127, %p128
    %p131 = scmp.ne.s32.totalorder %s116, %s130
    %p132 = scmp.eq.s32.totalorder %s17, 0
    %p133 = por %p131, %p132
    %s134 = ssub.s32 %s11, %s18
    %p135 = scmp.eq.s32.totalorder %s134, 0
    %s137 = sadd.s32 %s136, 1
    %s138 = scalar_select %p135, %s136, %s137
    %p141 = pneg %p135
    %p142 = scmp.eq.s32.totalorder %s11, 1
    %p143 = por %p141, %p142
    %p144 = scmp.ne.s32.totalorder %s136, %s139
    %p145 = scmp.eq.s32.totalorder %s11, 0
    %p146 = por %p144, %p145
    %p147 = scmp.ne.s32.totalorder %s136, %s139
    %p148 = scmp.eq.s32.totalorder %s16, 1
    %p149 = por %p147, %p148
    %p150 = scmp.ne.s32.totalorder %s139, %s140
    %p151 = scmp.eq.s32.totalorder %s16, 0
    %p152 = por %p150, %p151
    %p153 = scmp.ne.s32.totalorder %s139, %s140
    %p154 = scmp.eq.s32.totalorder %s17, 1
    %p155 = por %p153, %p154
    %p157 = scmp.ne.s32.totalorder %s140, %s156
    %p158 = scmp.eq.s32.totalorder %s17, 0
    %p159 = por %p157, %p158
    %p160 = scmp.le.s32.totalorder 1, %s11
    %p161 = scmp.lt.s32.totalorder %s11, 3
    %p162 = pnand %p160, %p161
    %p163 = pneg %p162
    // Predicated region
    $region9: #{decoder_forward.9} parent=5 // pred_check
      _
    $region10: #{decoder_forward.9} parent=5 // pred_check_branch
      %165 = sbr.rel (%p162) target = $region12
    $region11: #{decoder_forward.9} parent=5 // pred_region
      %s166 = ssub.s32 %s11, 1
      // Predicated region
      $region13: #{decoder_forward.9} parent=11 // pred_check
        %p167 = pneg %p84
      $region14: #{decoder_forward.9} parent=11 // pred_check_branch
        %169 = sbr.rel (%p167) target = $region16
      $region15: #{decoder_forward.9} parent=11 // pred_region
        _
      $region16: #{decoder_forward.9} parent=11 // pred_fallthru
        _
      // Predicated region
      $region17: #{decoder_forward.9} parent=11 // pred_check
        %p170 = pneg %p105
      $region18: #{decoder_forward.9} parent=11 // pred_check_branch
        %172 = sbr.rel (%p170) target = $region20
      $region19: #{decoder_forward.9} parent=11 // pred_region
        _
      $region20: #{decoder_forward.9} parent=11 // pred_fallthru
        _
      // Predicated region
      $region21: #{decoder_forward.9} parent=11 // pred_check
        %p173 = pneg %p126
      $region22: #{decoder_forward.9} parent=11 // pred_check_branch
        %175 = sbr.rel (%p173) target = $region24
      $region23: #{decoder_forward.9} parent=11 // pred_region
        _
      $region24: #{decoder_forward.9} parent=11 // pred_fallthru
        _
    $region12: #{decoder_forward.9} parent=5 // pred_fallthru
      _
    %p176 = scmp.lt.s32.totalorder %s11, 2
    // Predicated region
    $region25: #{decoder_forward.9} parent=5 // pred_check
      %p177 = pneg %p176
    $region26: #{decoder_forward.9} parent=5 // pred_check_branch
      %179 = sbr.rel (%p177) target = $region28
    $region27: #{decoder_forward.9} parent=5 // pred_region
      // Predicated region
      $region29: #{decoder_forward.9} parent=27 // pred_check
        %p180 = pneg %p31
      $region30: #{decoder_forward.9} parent=27 // pred_check_branch
        %182 = sbr.rel (%p180) target = $region32
      $region31: #{decoder_forward.9} parent=27 // pred_region
        %p183 = scmp.lt.s32.totalorder %s11, 1
        %s184 = scalar_select %p183, %s11, 1
        %s185 = smul.addr %s184, 20
        %s186 = smul.addr %s185, 4
        %s187 = scalar_lea.vmem %s0, %s186
      $region32: #{decoder_forward.9} parent=27 // pred_fallthru
        _
      // Predicated region
      $region33: #{decoder_forward.9} parent=27 // pred_check
        %p188 = pneg %p57
      $region34: #{decoder_forward.9} parent=27 // pred_check_branch
        %190 = sbr.rel (%p188) target = $region36
      $region35: #{decoder_forward.9} parent=27 // pred_region
        %p191 = scmp.lt.s32.totalorder %s11, 1
        %s192 = scalar_select %p191, %s11, 1
        %s193 = smul.addr %s192, 2
        %s194 = smul.addr %s193, 8
        %s195 = scalar_lea.vmem %s1, %s194
      $region36: #{decoder_forward.9} parent=27 // pred_fallthru
        _
    $region28: #{decoder_forward.9} parent=5 // pred_fallthru
      _
    %p196 = scmp.le.s32.totalorder 1, %s11
    %p197 = scmp.lt.s32.totalorder %s11, 3
    %p198 = pnand %p196, %p197
    %p199 = pneg %p198
    // Predicated region
    $region37: #{decoder_forward.9} parent=5 // pred_check
      _
    $region38: #{decoder_forward.9} parent=5 // pred_check_branch
      %201 = sbr.rel (%p198) target = $region40
    $region39: #{decoder_forward.9} parent=5 // pred_region
      %s202 = ssub.s32 %s11, 1
      %p203 = scmp.lt.s32.totalorder %s16, 1
      %s204 = scalar_select %p203, %s16, 1
      %s205 = smul.addr %s204, 20
      %s206 = smul.addr %s205, 4
      %s207 = scalar_lea.vmem %s0, %s206
      %p208 = pneg %p37
      %p209 = pneg %p34
      %p210 = scmp.lt.s32.totalorder %s16, 1
      %s211 = scalar_select %p210, %s16, 1
      %s212 = smul.addr %s211, 2
      %s213 = smul.addr %s212, 8
      %s214 = scalar_lea.vmem %s1, %s213
      %p215 = pneg %p63
      %p216 = pneg %p60
      %p217 = pneg %p84
      %p218 = pneg %p81
      %p219 = pneg %p105
      %p220 = pneg %p102
      %p221 = pneg %p126
      %p222 = pneg %p123
      %p223 = pneg %p152
      %p224 = pneg %p149
      %p225 = scmp.lt.s32.totalorder %s16, 1
      %s226 = scalar_select %p225, %s16, 1
      %s227 = smul.addr %s226, 2
      %s228 = smul.addr %s227, 8
      %s229 = scalar_lea.vmem %s5, %s228
      %p230 = scmp.lt.s32.totalorder %s16, 1
      %s231 = scalar_select %p230, %s16, 1
      %s232 = smul.addr %s231, 20
      %s233 = smul.addr %s232, 4
      %s234 = scalar_lea.vmem %s0, %s233
      %p235 = scmp.lt.s32.totalorder %s16, 1
      %s236 = scalar_select %p235, %s16, 1
      %s237 = smul.addr %s236, 2
      %s238 = smul.addr %s237, 8
      %s239 = scalar_lea.vmem %s1, %s238
      %p240 = scmp.lt.s32.totalorder %s16, 1
      %s241 = scalar_select %p240, %s16, 1
      %s242 = smul.addr %s241, 2
      %s243 = smul.addr %s242, 8
      %s244 = scalar_lea.vmem %s5, %s243
      %v246 = vld [vmem:[%s2] sm:$0xf]
      %v247 = vld [vmem:[%s234] sm:$0xff]
      %v248 = vld [vmem:[%s234 + $0x8] sm:$0xff]
      %v249 = vld [vmem:[%s234 + $0x10] sm:$0xff]
      %v250 = vld [vmem:[%s234 + $0x18] sm:$0xff]
      %v251 = vld [vmem:[%s234 + $0x20] sm:$0xff]
      %v252 = vld [vmem:[%s234 + $0x28] sm:$0xff]
      %v253 = vld [vmem:[%s234 + $0x30] sm:$0xff]
      %v254 = vld [vmem:[%s234 + $0x38] sm:$0xff]
      %v255 = vld [vmem:[%s234 + $0x40] sm:$0xff]
      %v256 = vld [vmem:[%s234 + $0x48] sm:$0x11]
      %v267 = vunpack.c.l.b16 %v247
      %v268 = vunpack.c.h.b16 %v247
      %v269 = vunpack.c.l.b16 %v248
      %v270 = vunpack.c.h.b16 %v248
      %v271 = vunpack.c.l.b16 %v249
      %v272 = vunpack.c.h.b16 %v249
      %v273 = vunpack.c.l.b16 %v250
      %v274 = vunpack.c.h.b16 %v250
      %v275 = vunpack.c.l.b16 %v251
      %v276 = vunpack.c.h.b16 %v251
      %v277 = vunpack.c.l.b16 %v252
      %v278 = vunpack.c.h.b16 %v252
      %v279 = vunpack.c.l.b16 %v253
      %v280 = vunpack.c.h.b16 %v253
      %v281 = vunpack.c.l.b16 %v254
      %v282 = vunpack.c.h.b16 %v254
      %v283 = vunpack.c.l.b16 %v255
      %v284 = vunpack.c.h.b16 %v255
      %v285 = vunpack.c.l.b16 %v256
      %v286 = vunpack.c.h.b16 %v256
      %v287 = vpack.c.b16 %v269, %v267
      %v288 = vpack.c.b16 %v270, %v268
      %v289 = vpack.c.b16 %v273, %v271
      %v290 = vpack.c.b16 %v274, %v272
      %v291 = vpack.c.b16 %v277, %v275
      %v292 = vpack.c.b16 %v278, %v276
      %v293 = vpack.c.b16 %v281, %v279
      %v294 = vpack.c.b16 %v282, %v280
      %v295 = vpack.c.b16 %v285, %v283
      %v296 = vpack.c.b16 %v286, %v284
      %vm305 = vcmask 596992
      %v307 = vsel %vm305, %v246, 0
      %vm309 = vcmask 1043456
      %vm310 = vcmask 1044480
      %v311 = vsel %vm309, 4294967295, 65535
      %v312 = vsel %vm310, %v311, 0
      %v314 = vand.u32 %v295, %v312
      %v317 = vand.u32 %v296, %v312
      %319 = vmatprep.subr.bf16.mxu0 %v288
      %320 = vmatpush1.bf16.msra.mxu0 %v287
      %321 = vmatprep.subr.bf16.mxu0 %v290
      %322 = vmatpush1.bf16.msra.mxu0 %v289
      %323 = vmatprep.subr.bf16.mxu0 %v292
      %324 = vmatpush1.bf16.msra.mxu0 %v291
      %325 = vmatprep.subr.bf16.mxu0 %v294
      %326 = vmatpush1.bf16.msra.mxu0 %v293
      %327 = vmatprep.subr.bf16.mxu0 %v317
      %328 = vmatpush1.bf16.msra.mxu0 %v314
      %329 = vmatprep.subr.bf16.mxu0 0
      %330 = vmatpush1.bf16.msra.mxu0 0
      %331 = vmatprep.subr.bf16.mxu0 0
      %332 = vmatpush1.bf16.msra.mxu0 0
      %333 = vmatprep.subr.bf16.mxu0 0
      %334 = vmatpush1.bf16.msra.mxu0 0
      %335 = vmatprep.subr.bf16.mxu0 0
      %336 = vmatpush1.bf16.msra.mxu0 0
      %337 = vmatprep.subr.bf16.mxu0 0
      %338 = vmatpush1.bf16.msra.mxu0 0
      %339 = vmatprep.subr.bf16.mxu0 0
      %340 = vmatpush1.bf16.msra.mxu0 0
      %341 = vmatprep.subr.bf16.mxu0 0
      %342 = vmatpush1.bf16.msra.mxu0 0
      %343 = vmatprep.subr.bf16.mxu0 0
      %344 = vmatpush1.bf16.msra.mxu0 0
      %345 = vmatprep.subr.bf16.mxu0 0
      %346 = vmatpush1.bf16.msra.mxu0 0
      %347 = vmatprep.subr.bf16.mxu0 0
      %348 = vmatpush1.bf16.msra.mxu0 0
      %349 = vmatprep.subr.bf16.mxu0 0
      %350 = vmatpush1.bf16.msra.mxu0 0
      %351 = vmatprep.mubr.bf16.mxu0 0
      %352 = vmatmul.mubr.bf16.gmra.mrb[0].mxu0 %v307
      %v353 = vpop.f32.mrb[0].mxu0
      %v354 = vadd.f32 0.0, %v353
      %v355 = vpop.f32.mrb[0].mxu0
      %v356 = vadd.f32 0.0, %v355
      %v357 = vpop.f32.mrb[0].mxu0
      %v358 = vpop.f32.mrb[0].mxu0
      %359 = vdwg.mxu0
      %v360 = vmax.f32 %v354, 0.0
      %v361 = vmax.f32 %v356, 0.0
      %v362 = vld [vmem:[%s239] sm:$0xff]
      %v363 = vld [vmem:[%s239 + $0x8] sm:$0xff]
      %v364 = vadd.f32 %v360, %v362
      %v365 = vadd.f32 %v361, %v363
      %v366 = vadd.f32 %v364, %v365
      %367 = vadd.xlane.f32.xlu0 %v366
      %v368 = vpop.xlane.xlu0 %367
      %v369 = vrot.slane %v368, 4
      %v370 = vadd.f32 %v368, %v369
      %v371 = vrot.slane %v370, 2
      %v372 = vadd.f32 %v370, %v371
      %v373 = vrot.slane %v372, 1
      %v374 = vadd.f32 %v372, %v373
      %s375 = vtos %v374
      %v376 = vstv %s375
      %v377 = vrcp.pop 2048.0
      %v378 = vmul.f32 %v376, %v377
      %v379 = vsub.f32 %v364, %v378
      %v380 = vsub.f32 %v365, %v378
      %v381 = vmul.f32 %v379, %v379
      %v382 = vmul.f32 %v380, %v380
      %v383 = vadd.f32 %v381, %v382
      %384 = vadd.xlane.f32.xlu0 %v383
      %v385 = vpop.xlane.xlu0 %384
      %v386 = vrot.slane %v385, 4
      %v387 = vadd.f32 %v385, %v386
      %v388 = vrot.slane %v387, 2
      %v389 = vadd.f32 %v387, %v388
      %v390 = vrot.slane %v389, 1
      %v391 = vadd.f32 %v389, %v390
      %s392 = vtos %v391
      %v393 = vstv %s392
      %v394 = vmul.f32 %v393, %v377
      %v395 = vadd.f32 %v394, 1e-05
      %v396 = vrsqrt.pop %v395
      %v397 = vmul.f32 %v379, %v396
      %v398 = vmul.f32 %v380, %v396
      %v399 = vld [vmem:[%s3] sm:$0xff]
      %v400 = vld [vmem:[%s3 + $0x8] sm:$0xff]
      %v401 = vmul.f32 %v397, %v399
      %v402 = vmul.f32 %v398, %v400
      %v403 = vld [vmem:[%s4] sm:$0xff]
      %v404 = vld [vmem:[%s4 + $0x8] sm:$0xff]
      %v405 = vadd.f32 %v401, %v403
      %v406 = vadd.f32 %v402, %v404
      %407 = vst [vmem:[%s244] sm:$0xff] %v405
      %408 = vst [vmem:[%s244 + $0x8] sm:$0xff] %v406
      %p409 = scmp.lt.s32.totalorder %s16, 1
      %s410 = scalar_select %p409, %s16, 1
      %s411 = smul.addr %s410, 2
      %s412 = smul.addr %s411, 8
      %s413 = scalar_lea.vmem %s5, %s412
      // Predicated region
      $region41: #{decoder_forward.9} parent=39 // pred_check
        %p414 = pneg %p149
      $region42: #{decoder_forward.9} parent=39 // pred_check_branch
        %416 = sbr.rel (%p414) target = $region44
      $region43: #{decoder_forward.9} parent=39 // pred_region
        _
      $region44: #{decoder_forward.9} parent=39 // pred_fallthru
        _
    $region40: #{decoder_forward.9} parent=5 // pred_fallthru
      _
    %p417 = scmp.le.s32.totalorder 2, %s11
    // Predicated region
    $region45: #{decoder_forward.9} parent=5 // pred_check
      %p418 = pneg %p417
    $region46: #{decoder_forward.9} parent=5 // pred_check_branch
      %420 = sbr.rel (%p418) target = $region48
    $region47: #{decoder_forward.9} parent=5 // pred_region
      %s421 = ssub.s32 %s11, 2
      // Predicated region
      $region49: #{decoder_forward.9} parent=47 // pred_check
        %p422 = pneg %p155
      $region50: #{decoder_forward.9} parent=47 // pred_check_branch
        %424 = sbr.rel (%p422) target = $region52
      $region51: #{decoder_forward.9} parent=47 // pred_region
        %p425 = scmp.lt.s32.totalorder %s17, 1
        %s426 = scalar_select %p425, %s17, 1
        %s427 = smul.addr %s426, 2
        %s428 = smul.addr %s427, 8
        %s429 = scalar_lea.vmem %s5, %s428
      $region52: #{decoder_forward.9} parent=47 // pred_fallthru
        _
    $region48: #{decoder_forward.9} parent=5 // pred_fallthru
      _
  $region6: #{decoder_forward.9} parent=0 // loop_footer
    %s15 = sadd.s32 1, %s11
  $region7: #{decoder_forward.9} parent=0 // loop_footer_branch
    %10 = sbr.rel target = $region3
  $region8: #{decoder_forward.9} parent=0 // loop_exit
    _

</llo_original>
